<compile_context>
chip_gen: v6e
topology: v6e:2x2x1
jax: 0.10.0
libtpu: 0.0.40
codegen_flags: <defaults>
</compile_context>

<pallas_src>
from functools import partial

import jax
import jax.numpy as jnp
from jax.experimental import pallas as pl
from jax.experimental.pallas import tpu as pltpu


# Architecture constants from the module.
C1, K1 = 6, 5          # conv1: 1 -> 6, 5x5
C2, K2 = 16, 3         # conv2: 6 -> 16, 3x3
H1 = 64                # fc1 out_features
H2 = 32                # fc2 out_features


# ----------------------------------------------------------------------------
# Fully fused per-image kernel.  Activation layout: rows = H, lanes = C*W
# (channel blocks side by side on the lane axis), which keeps every store /
# matmul lane-dense and makes pooling and the fc1 contraction plain 2D matmuls.
# ----------------------------------------------------------------------------
def _net_kernel(x_ref, w1cat_ref, b1row_ref, ph1_ref, pw1_ref,
                w2cat_ref, b2row_ref, ph2_ref, pw2_ref,
                w1r_ref, b1fc_ref, w2fc_ref, b2fc_ref, w3fc_ref, b3fc_ref,
                o_ref, patch1_ref, patch2_ref, *,
                Ho1, Wo1, Hp1, Wp1, Ho2, Wo2, Hp2, Wp2):
    f32 = jnp.float32

    # ---- conv1 (1->6, 5x5, valid) as an im2col matmul on the MXU ----------
    # patch1[i, t*Wo1 + j] = x[kh_t + i, kw_t + j]
    t = 0
    for kh in range(K1):
        for kw in range(K1):
            patch1_ref[:, t * Wo1:(t + 1) * Wo1] = \
                x_ref[0, 0, kh:kh + Ho1, kw:kw + Wo1]
            t += 1
    a1 = jnp.dot(patch1_ref[...], w1cat_ref[...], preferred_element_type=f32)
    a1 = jnp.maximum(a1 + b1row_ref[...], 0.0)            # (Ho1, C1*Wo1)

    # ---- AvgPool2d(2,2): rows via PH1, cols via block-diag PW1 (both const)
    p1 = jnp.dot(jnp.dot(ph1_ref[...], a1, preferred_element_type=f32),
                 pw1_ref[...], preferred_element_type=f32)  # (Hp1, C1*Wp1)

    # ---- conv2 (6->16, 3x3, valid) as an im2col matmul ---------------------
    t = 0
    for ci in range(C1):
        for kh in range(K2):
            for kw in range(K2):
                patch2_ref[:, t * Wo2:(t + 1) * Wo2] = \
                    p1[kh:kh + Ho2, ci * Wp1 + kw:ci * Wp1 + kw + Wo2]
                t += 1
    a2 = jnp.dot(patch2_ref[...], w2cat_ref[...], preferred_element_type=f32)
    a2 = jnp.maximum(a2 + b2row_ref[...], 0.0)            # (Ho2, C2*Wo2)

    p2 = jnp.dot(jnp.dot(ph2_ref[...], a2, preferred_element_type=f32),
                 pw2_ref[...], preferred_element_type=f32)  # (Hp2, C2*Wp2)

    # ---- fc1 (+ReLU): flatten folded into per-row regrouped weight blocks --
    z1 = b1fc_ref[...]                                     # (1, 64)
    for p in range(Hp2):
        z1 = z1 + jnp.dot(p2[p:p + 1, :], w1r_ref[p],
                          preferred_element_type=f32)
    h1 = jnp.maximum(z1, 0.0)

    # ---- fc2 -> ReLU -> fc3 -> sigmoid -------------------------------------
    h2 = jnp.maximum(jnp.dot(h1, w2fc_ref[...], preferred_element_type=f32)
                     + b2fc_ref[...], 0.0)
    z3 = jnp.dot(h2, w3fc_ref[...], preferred_element_type=f32) + b3fc_ref[...]
    o_ref[0] = 1.0 / (1.0 + jnp.exp(-z3))


# ----------------------------------------------------------------------------
# Host-side constant construction (hoisted out of the kernel).
# ----------------------------------------------------------------------------
def _pool_rows(hp, ho):
    # (hp, ho): 0.5 where input row h belongs to pooled row p.
    return jnp.where(jnp.arange(ho)[None, :] // 2 == jnp.arange(hp)[:, None],
                     0.5, 0.0).astype(jnp.float32)


def _pool_cols_blockdiag(c, wo, wp):
    # (c*wo, c*wp): per-channel block-diagonal column pooling matrix.
    base = jnp.where(jnp.arange(wo)[:, None] // 2 == jnp.arange(wp)[None, :],
                     0.5, 0.0).astype(jnp.float32)
    return jnp.kron(jnp.eye(c, dtype=jnp.float32), base)


def net_forward(x, params):
    """x: (N, 1, H, W) f32; params in PyTorch-like layout (see init_params)."""
    N, Cin, H, W = x.shape
    assert Cin == 1
    f32 = jnp.float32

    Ho1, Wo1 = H - K1 + 1, W - K1 + 1
    Hp1, Wp1 = Ho1 // 2, Wo1 // 2
    Ho2, Wo2 = Hp1 - K2 + 1, Wp1 - K2 + 1
    Hp2, Wp2 = Ho2 // 2, Wo2 // 2
    n_classes = params["w_fc3"].shape[1]

    # conv weights expanded to im2col matrices:
    #   w_cat[t*Wo + j, co*Wo + j'] = delta_{j,j'} * w[co, tap t]
    t1 = params["w_conv1"].reshape(C1, K1 * K1).T                 # (25, 6)
    w1cat = jnp.kron(t1, jnp.eye(Wo1, dtype=f32))                 # (25*Wo1, C1*Wo1)
    b1row = jnp.repeat(params["b_conv1"], Wo1)[None, :]           # (1, C1*Wo1)

    t2 = params["w_conv2"].reshape(C2, C1 * K2 * K2).T            # (54, 16)
    w2cat = jnp.kron(t2, jnp.eye(Wo2, dtype=f32))                 # (54*Wo2, C2*Wo2)
    b2row = jnp.repeat(params["b_conv2"], Wo2)[None, :]           # (1, C2*Wo2)

    # Hoisted pooling constants.
    ph1 = _pool_rows(Hp1, Ho1)
    pw1 = _pool_cols_blockdiag(C1, Wo1, Wp1)
    ph2 = _pool_rows(Hp2, Ho2)
    pw2 = _pool_cols_blockdiag(C2, Wo2, Wp2)

    # fc1 weight regrouped so row block h matches the kernel's (Hp2, C2*Wp2)
    # pooled layout; this folds PyTorch's NCHW flatten into the matmul.
    w1r = jnp.transpose(params["w_fc1"].reshape(C2, Hp2, Wp2, H1),
                        (1, 0, 2, 3)).reshape(Hp2, C2 * Wp2, H1)  # (Hp2, 96, 64)
    b1fc = params["b_fc1"][None, :]
    w2fc, b2fc = params["w_fc2"], params["b_fc2"][None, :]
    w3fc, b3fc = params["w_fc3"], params["b_fc3"][None, :]

    kernel = partial(_net_kernel, Ho1=Ho1, Wo1=Wo1, Hp1=Hp1, Wp1=Wp1,
                     Ho2=Ho2, Wo2=Wo2, Hp2=Hp2, Wp2=Wp2)

    def full(a):  # whole-array block, same block for every grid step
        nd = a.ndim
        return pl.BlockSpec(a.shape, lambda n, _nd=nd: (0,) * _nd)

    consts = (w1cat, b1row, ph1, pw1, w2cat, b2row, ph2, pw2,
              w1r, b1fc, w2fc, b2fc, w3fc, b3fc)

    out = pl.pallas_call(
        kernel,
        grid=(N,),
        in_specs=[pl.BlockSpec((1, 1, H, W), lambda n: (n, 0, 0, 0))] +
                 [full(a) for a in consts],
        out_specs=pl.BlockSpec((1, 1, n_classes), lambda n: (n, 0, 0)),
        out_shape=jax.ShapeDtypeStruct((N, 1, n_classes), f32),
        scratch_shapes=[
            pltpu.VMEM((Ho1, K1 * K1 * Wo1), f32),          # conv1 im2col patches
            pltpu.VMEM((Ho2, C1 * K2 * K2 * Wo2), f32),     # conv2 im2col patches
        ],
        compiler_params=pltpu.CompilerParams(
            dimension_semantics=("parallel",)),
    )(x, *consts)
    return out[:, 0, :]


# ----------------------------------------------------------------------------
# Pure-JAX reference (for a numerical self-check) and parameter init.
# ----------------------------------------------------------------------------
def _avg_pool_ref(h):
    n, c, hh, ww = h.shape
    return h.reshape(n, c, hh // 2, 2, ww // 2, 2).mean(axis=(3, 5))


def net_forward_ref(x, params):
    dn = ("NCHW", "OIHW", "NCHW")
    h = jax.lax.conv_general_dilated(x, params["w_conv1"], (1, 1), "VALID",
                                     dimension_numbers=dn)
    h = _avg_pool_ref(jnp.maximum(h + params["b_conv1"][None, :, None, None], 0.0))
    h = jax.lax.conv_general_dilated(h, params["w_conv2"], (1, 1), "VALID",
                                     dimension_numbers=dn)
    h = _avg_pool_ref(jnp.maximum(h + params["b_conv2"][None, :, None, None], 0.0))
    h = h.reshape(h.shape[0], -1)
    h = jnp.maximum(h @ params["w_fc1"] + params["b_fc1"], 0.0)
    h = jnp.maximum(h @ params["w_fc2"] + params["b_fc2"], 0.0)
    z = h @ params["w_fc3"] + params["b_fc3"]
    return jax.nn.sigmoid(z)


def init_params(key, n_classes, fc1_in):
    def uinit(k, shape, fan_in):
        bound = 1.0 / float(fan_in) ** 0.5
        return jax.random.uniform(k, shape, jnp.float32, -bound, bound)

    ks = jax.random.split(key, 10)
    return {
        "w_conv1": uinit(ks[0], (C1, 1, K1, K1), 1 * K1 * K1),
        "b_conv1": uinit(ks[1], (C1,), 1 * K1 * K1),
        "w_conv2": uinit(ks[2], (C2, C1, K2, K2), C1 * K2 * K2),
        "b_conv2": uinit(ks[3], (C2,), C1 * K2 * K2),
        "w_fc1":   uinit(ks[4], (fc1_in, H1), fc1_in),
        "b_fc1":   uinit(ks[5], (H1,), fc1_in),
        "w_fc2":   uinit(ks[6], (H1, H2), H1),
        "b_fc2":   uinit(ks[7], (H2,), H1),
        "w_fc3":   uinit(ks[8], (H2, n_classes), H2),
        "b_fc3":   uinit(ks[9], (n_classes,), H2),
    }


if __name__ == "__main__":
    key = jax.random.PRNGKey(0)
    kx, kp = jax.random.split(key)

    # Small input consistent with the module: N=2, 1 channel, 32x32 image.
    N, H, W = 2, 32, 32
    n_classes = 10  # len(vocab)
    x = jax.random.normal(kx, (N, 1, H, W), jnp.float32)

    # fc1 in_features implied by this input: 16 * 6 * 6 = 576.
    fc1_in = C2 * (((H - K1 + 1) // 2 - K2 + 1) // 2) * (((W - K1 + 1) // 2 - K2 + 1) // 2)
    params = init_params(kp, n_classes, fc1_in)

    out = jax.jit(net_forward)(x, params)
    out = jax.block_until_ready(out)
    assert out.shape == (N, n_classes)
    assert bool(jnp.all((out >= 0.0) & (out <= 1.0)))

    with jax.default_matmul_precision("highest"):
        ref = net_forward_ref(x, params)
    assert bool(jnp.allclose(out, ref, atol=1e-3, rtol=1e-3)), \
        f"max abs diff {float(jnp.max(jnp.abs(out - ref)))}"

    print("KERNEL_OK")
</pallas_src>

<mosaic_0001>
module attributes {stable_mosaic.version = 11 : i64} {
  func.func @_net_kernel(%arg0: i32, %arg1: memref<1x1x32x32xf32, #tpu.memory_space<vmem>>, %arg2: memref<700x168xf32, #tpu.memory_space<vmem>>, %arg3: memref<1x168xf32, #tpu.memory_space<vmem>>, %arg4: memref<14x28xf32, #tpu.memory_space<vmem>>, %arg5: memref<168x84xf32, #tpu.memory_space<vmem>>, %arg6: memref<648x192xf32, #tpu.memory_space<vmem>>, %arg7: memref<1x192xf32, #tpu.memory_space<vmem>>, %arg8: memref<6x12xf32, #tpu.memory_space<vmem>>, %arg9: memref<192x96xf32, #tpu.memory_space<vmem>>, %arg10: memref<6x96x64xf32, #tpu.memory_space<vmem>>, %arg11: memref<1x64xf32, #tpu.memory_space<vmem>>, %arg12: memref<64x32xf32, #tpu.memory_space<vmem>>, %arg13: memref<1x32xf32, #tpu.memory_space<vmem>>, %arg14: memref<32x10xf32, #tpu.memory_space<vmem>>, %arg15: memref<1x10xf32, #tpu.memory_space<vmem>>, %arg16: memref<1x1x10xf32, #tpu.memory_space<vmem>>, %arg17: memref<28x700xf32, #tpu.memory_space<vmem>>, %arg18: memref<12x648xf32, #tpu.memory_space<vmem>>) attributes {dimension_semantics = [#tpu.dimension_semantics<parallel>], iteration_bounds = array<i64: 2>, scalar_prefetch = 0 : i64, scratch_operands = 2 : i64, tpu.core_type = #tpu.core_type<tc>, window_params = [{transform_indices = @transform_0, window_bounds = array<i64: 1, 1, 32, 32>}, {pipeline_mode = #tpu.pipeline_mode<synchronous>, transform_indices = @transform_1, window_bounds = array<i64: 700, 168>}, {pipeline_mode = #tpu.pipeline_mode<synchronous>, transform_indices = @transform_2, window_bounds = array<i64: 1, 168>}, {pipeline_mode = #tpu.pipeline_mode<synchronous>, transform_indices = @transform_3, window_bounds = array<i64: 14, 28>}, {pipeline_mode = #tpu.pipeline_mode<synchronous>, transform_indices = @transform_4, window_bounds = array<i64: 168, 84>}, {pipeline_mode = #tpu.pipeline_mode<synchronous>, transform_indices = @transform_5, window_bounds = array<i64: 648, 192>}, {pipeline_mode = #tpu.pipeline_mode<synchronous>, transform_indices = @transform_6, window_bounds = array<i64: 1, 192>}, {pipeline_mode = #tpu.pipeline_mode<synchronous>, transform_indices = @transform_7, window_bounds = array<i64: 6, 12>}, {pipeline_mode = #tpu.pipeline_mode<synchronous>, transform_indices = @transform_8, window_bounds = array<i64: 192, 96>}, {pipeline_mode = #tpu.pipeline_mode<synchronous>, transform_indices = @transform_9, window_bounds = array<i64: 6, 96, 64>}, {pipeline_mode = #tpu.pipeline_mode<synchronous>, transform_indices = @transform_10, window_bounds = array<i64: 1, 64>}, {pipeline_mode = #tpu.pipeline_mode<synchronous>, transform_indices = @transform_11, window_bounds = array<i64: 64, 32>}, {pipeline_mode = #tpu.pipeline_mode<synchronous>, transform_indices = @transform_12, window_bounds = array<i64: 1, 32>}, {pipeline_mode = #tpu.pipeline_mode<synchronous>, transform_indices = @transform_13, window_bounds = array<i64: 32, 10>}, {pipeline_mode = #tpu.pipeline_mode<synchronous>, transform_indices = @transform_14, window_bounds = array<i64: 1, 10>}, {transform_indices = @transform_15, window_bounds = array<i64: 1, 1, 10>}]} {
    %c0 = arith.constant 0 : index
    %c0_0 = arith.constant 0 : index
    %c0_1 = arith.constant 0 : index
    %c0_2 = arith.constant 0 : index
    %0 = vector.load %arg1[%c0, %c0_0, %c0_1, %c0_2] : memref<1x1x32x32xf32, #tpu.memory_space<vmem>>, vector<1x1x28x28xf32>
    %1 = vector.shape_cast %0 : vector<1x1x28x28xf32> to vector<28x28xf32>
    %c0_3 = arith.constant 0 : index
    %c0_4 = arith.constant 0 : index
    %2 = vector.load %arg17[%c0_3, %c0_4] : memref<28x700xf32, #tpu.memory_space<vmem>>, vector<28x28xf32>
    tpu.vector_store %arg17[%c0_3, %c0_4], %1 {strides = array<i32>} : memref<28x700xf32, #tpu.memory_space<vmem>>, vector<28x28xf32>,
    %c0_5 = arith.constant 0 : index
    %c0_6 = arith.constant 0 : index
    %c0_7 = arith.constant 0 : index
    %c1 = arith.constant 1 : index
    %3 = vector.load %arg1[%c0_5, %c0_6, %c0_7, %c1] : memref<1x1x32x32xf32, #tpu.memory_space<vmem>>, vector<1x1x28x28xf32>
    %4 = vector.shape_cast %3 : vector<1x1x28x28xf32> to vector<28x28xf32>
    %c0_8 = arith.constant 0 : index
    %c28 = arith.constant 28 : index
    %5 = vector.load %arg17[%c0_8, %c28] : memref<28x700xf32, #tpu.memory_space<vmem>>, vector<28x28xf32>
    tpu.vector_store %arg17[%c0_8, %c28], %4 {strides = array<i32>} : memref<28x700xf32, #tpu.memory_space<vmem>>, vector<28x28xf32>,
    %c0_9 = arith.constant 0 : index
    %c0_10 = arith.constant 0 : index
    %c0_11 = arith.constant 0 : index
    %c2 = arith.constant 2 : index
    %6 = vector.load %arg1[%c0_9, %c0_10, %c0_11, %c2] : memref<1x1x32x32xf32, #tpu.memory_space<vmem>>, vector<1x1x28x28xf32>
    %7 = vector.shape_cast %6 : vector<1x1x28x28xf32> to vector<28x28xf32>
    %c0_12 = arith.constant 0 : index
    %c56 = arith.constant 56 : index
    %8 = vector.load %arg17[%c0_12, %c56] : memref<28x700xf32, #tpu.memory_space<vmem>>, vector<28x28xf32>
    tpu.vector_store %arg17[%c0_12, %c56], %7 {strides = array<i32>} : memref<28x700xf32, #tpu.memory_space<vmem>>, vector<28x28xf32>,
    %c0_13 = arith.constant 0 : index
    %c0_14 = arith.constant 0 : index
    %c0_15 = arith.constant 0 : index
    %c3 = arith.constant 3 : index
    %9 = vector.load %arg1[%c0_13, %c0_14, %c0_15, %c3] : memref<1x1x32x32xf32, #tpu.memory_space<vmem>>, vector<1x1x28x28xf32>
    %10 = vector.shape_cast %9 : vector<1x1x28x28xf32> to vector<28x28xf32>
    %c0_16 = arith.constant 0 : index
    %c84 = arith.constant 84 : index
    %11 = vector.load %arg17[%c0_16, %c84] : memref<28x700xf32, #tpu.memory_space<vmem>>, vector<28x28xf32>
    tpu.vector_store %arg17[%c0_16, %c84], %10 {strides = array<i32>} : memref<28x700xf32, #tpu.memory_space<vmem>>, vector<28x28xf32>,
    %c0_17 = arith.constant 0 : index
    %c0_18 = arith.constant 0 : index
    %c0_19 = arith.constant 0 : index
    %c4 = arith.constant 4 : index
    %12 = vector.load %arg1[%c0_17, %c0_18, %c0_19, %c4] : memref<1x1x32x32xf32, #tpu.memory_space<vmem>>, vector<1x1x28x28xf32>
    %13 = vector.shape_cast %12 : vector<1x1x28x28xf32> to vector<28x28xf32>
    %c0_20 = arith.constant 0 : index
    %c112 = arith.constant 112 : index
    %14 = vector.load %arg17[%c0_20, %c112] : memref<28x700xf32, #tpu.memory_space<vmem>>, vector<28x28xf32>
    tpu.vector_store %arg17[%c0_20, %c112], %13 {strides = array<i32>} : memref<28x700xf32, #tpu.memory_space<vmem>>, vector<28x28xf32>,
    %c0_21 = arith.constant 0 : index
    %c0_22 = arith.constant 0 : index
    %c1_23 = arith.constant 1 : index
    %c0_24 = arith.constant 0 : index
    %15 = vector.load %arg1[%c0_21, %c0_22, %c1_23, %c0_24] : memref<1x1x32x32xf32, #tpu.memory_space<vmem>>, vector<1x1x28x28xf32>
    %16 = vector.shape_cast %15 : vector<1x1x28x28xf32> to vector<28x28xf32>
    %c0_25 = arith.constant 0 : index
    %c140 = arith.constant 140 : index
    %17 = vector.load %arg17[%c0_25, %c140] : memref<28x700xf32, #tpu.memory_space<vmem>>, vector<28x28xf32>
    tpu.vector_store %arg17[%c0_25, %c140], %16 {strides = array<i32>} : memref<28x700xf32, #tpu.memory_space<vmem>>, vector<28x28xf32>,
    %c0_26 = arith.constant 0 : index
    %c0_27 = arith.constant 0 : index
    %c1_28 = arith.constant 1 : index
    %c1_29 = arith.constant 1 : index
    %18 = vector.load %arg1[%c0_26, %c0_27, %c1_28, %c1_29] : memref<1x1x32x32xf32, #tpu.memory_space<vmem>>, vector<1x1x28x28xf32>
    %19 = vector.shape_cast %18 : vector<1x1x28x28xf32> to vector<28x28xf32>
    %c0_30 = arith.constant 0 : index
    %c168 = arith.constant 168 : index
    %20 = vector.load %arg17[%c0_30, %c168] : memref<28x700xf32, #tpu.memory_space<vmem>>, vector<28x28xf32>
    tpu.vector_store %arg17[%c0_30, %c168], %19 {strides = array<i32>} : memref<28x700xf32, #tpu.memory_space<vmem>>, vector<28x28xf32>,
    %c0_31 = arith.constant 0 : index
    %c0_32 = arith.constant 0 : index
    %c1_33 = arith.constant 1 : index
    %c2_34 = arith.constant 2 : index
    %21 = vector.load %arg1[%c0_31, %c0_32, %c1_33, %c2_34] : memref<1x1x32x32xf32, #tpu.memory_space<vmem>>, vector<1x1x28x28xf32>
    %22 = vector.shape_cast %21 : vector<1x1x28x28xf32> to vector<28x28xf32>
    %c0_35 = arith.constant 0 : index
    %c196 = arith.constant 196 : index
    %23 = vector.load %arg17[%c0_35, %c196] : memref<28x700xf32, #tpu.memory_space<vmem>>, vector<28x28xf32>
    tpu.vector_store %arg17[%c0_35, %c196], %22 {strides = array<i32>} : memref<28x700xf32, #tpu.memory_space<vmem>>, vector<28x28xf32>,
    %c0_36 = arith.constant 0 : index
    %c0_37 = arith.constant 0 : index
    %c1_38 = arith.constant 1 : index
    %c3_39 = arith.constant 3 : index
    %24 = vector.load %arg1[%c0_36, %c0_37, %c1_38, %c3_39] : memref<1x1x32x32xf32, #tpu.memory_space<vmem>>, vector<1x1x28x28xf32>
    %25 = vector.shape_cast %24 : vector<1x1x28x28xf32> to vector<28x28xf32>
    %c0_40 = arith.constant 0 : index
    %c224 = arith.constant 224 : index
    %26 = vector.load %arg17[%c0_40, %c224] : memref<28x700xf32, #tpu.memory_space<vmem>>, vector<28x28xf32>
    tpu.vector_store %arg17[%c0_40, %c224], %25 {strides = array<i32>} : memref<28x700xf32, #tpu.memory_space<vmem>>, vector<28x28xf32>,
    %c0_41 = arith.constant 0 : index
    %c0_42 = arith.constant 0 : index
    %c1_43 = arith.constant 1 : index
    %c4_44 = arith.constant 4 : index
    %27 = vector.load %arg1[%c0_41, %c0_42, %c1_43, %c4_44] : memref<1x1x32x32xf32, #tpu.memory_space<vmem>>, vector<1x1x28x28xf32>
    %28 = vector.shape_cast %27 : vector<1x1x28x28xf32> to vector<28x28xf32>
    %c0_45 = arith.constant 0 : index
    %c252 = arith.constant 252 : index
    %29 = vector.load %arg17[%c0_45, %c252] : memref<28x700xf32, #tpu.memory_space<vmem>>, vector<28x28xf32>
    tpu.vector_store %arg17[%c0_45, %c252], %28 {strides = array<i32>} : memref<28x700xf32, #tpu.memory_space<vmem>>, vector<28x28xf32>,
    %c0_46 = arith.constant 0 : index
    %c0_47 = arith.constant 0 : index
    %c2_48 = arith.constant 2 : index
    %c0_49 = arith.constant 0 : index
    %30 = vector.load %arg1[%c0_46, %c0_47, %c2_48, %c0_49] : memref<1x1x32x32xf32, #tpu.memory_space<vmem>>, vector<1x1x28x28xf32>
    %31 = vector.shape_cast %30 : vector<1x1x28x28xf32> to vector<28x28xf32>
    %c0_50 = arith.constant 0 : index
    %c280 = arith.constant 280 : index
    %32 = vector.load %arg17[%c0_50, %c280] : memref<28x700xf32, #tpu.memory_space<vmem>>, vector<28x28xf32>
    tpu.vector_store %arg17[%c0_50, %c280], %31 {strides = array<i32>} : memref<28x700xf32, #tpu.memory_space<vmem>>, vector<28x28xf32>,
    %c0_51 = arith.constant 0 : index
    %c0_52 = arith.constant 0 : index
    %c2_53 = arith.constant 2 : index
    %c1_54 = arith.constant 1 : index
    %33 = vector.load %arg1[%c0_51, %c0_52, %c2_53, %c1_54] : memref<1x1x32x32xf32, #tpu.memory_space<vmem>>, vector<1x1x28x28xf32>
    %34 = vector.shape_cast %33 : vector<1x1x28x28xf32> to vector<28x28xf32>
    %c0_55 = arith.constant 0 : index
    %c308 = arith.constant 308 : index
    %35 = vector.load %arg17[%c0_55, %c308] : memref<28x700xf32, #tpu.memory_space<vmem>>, vector<28x28xf32>
    tpu.vector_store %arg17[%c0_55, %c308], %34 {strides = array<i32>} : memref<28x700xf32, #tpu.memory_space<vmem>>, vector<28x28xf32>,
    %c0_56 = arith.constant 0 : index
    %c0_57 = arith.constant 0 : index
    %c2_58 = arith.constant 2 : index
    %c2_59 = arith.constant 2 : index
    %36 = vector.load %arg1[%c0_56, %c0_57, %c2_58, %c2_59] : memref<1x1x32x32xf32, #tpu.memory_space<vmem>>, vector<1x1x28x28xf32>
    %37 = vector.shape_cast %36 : vector<1x1x28x28xf32> to vector<28x28xf32>
    %c0_60 = arith.constant 0 : index
    %c336 = arith.constant 336 : index
    %38 = vector.load %arg17[%c0_60, %c336] : memref<28x700xf32, #tpu.memory_space<vmem>>, vector<28x28xf32>
    tpu.vector_store %arg17[%c0_60, %c336], %37 {strides = array<i32>} : memref<28x700xf32, #tpu.memory_space<vmem>>, vector<28x28xf32>,
    %c0_61 = arith.constant 0 : index
    %c0_62 = arith.constant 0 : index
    %c2_63 = arith.constant 2 : index
    %c3_64 = arith.constant 3 : index
    %39 = vector.load %arg1[%c0_61, %c0_62, %c2_63, %c3_64] : memref<1x1x32x32xf32, #tpu.memory_space<vmem>>, vector<1x1x28x28xf32>
    %40 = vector.shape_cast %39 : vector<1x1x28x28xf32> to vector<28x28xf32>
    %c0_65 = arith.constant 0 : index
    %c364 = arith.constant 364 : index
    %41 = vector.load %arg17[%c0_65, %c364] : memref<28x700xf32, #tpu.memory_space<vmem>>, vector<28x28xf32>
    tpu.vector_store %arg17[%c0_65, %c364], %40 {strides = array<i32>} : memref<28x700xf32, #tpu.memory_space<vmem>>, vector<28x28xf32>,
    %c0_66 = arith.constant 0 : index
    %c0_67 = arith.constant 0 : index
    %c2_68 = arith.constant 2 : index
    %c4_69 = arith.constant 4 : index
    %42 = vector.load %arg1[%c0_66, %c0_67, %c2_68, %c4_69] : memref<1x1x32x32xf32, #tpu.memory_space<vmem>>, vector<1x1x28x28xf32>
    %43 = vector.shape_cast %42 : vector<1x1x28x28xf32> to vector<28x28xf32>
    %c0_70 = arith.constant 0 : index
    %c392 = arith.constant 392 : index
    %44 = vector.load %arg17[%c0_70, %c392] : memref<28x700xf32, #tpu.memory_space<vmem>>, vector<28x28xf32>
    tpu.vector_store %arg17[%c0_70, %c392], %43 {strides = array<i32>} : memref<28x700xf32, #tpu.memory_space<vmem>>, vector<28x28xf32>,
    %c0_71 = arith.constant 0 : index
    %c0_72 = arith.constant 0 : index
    %c3_73 = arith.constant 3 : index
    %c0_74 = arith.constant 0 : index
    %45 = vector.load %arg1[%c0_71, %c0_72, %c3_73, %c0_74] : memref<1x1x32x32xf32, #tpu.memory_space<vmem>>, vector<1x1x28x28xf32>
    %46 = vector.shape_cast %45 : vector<1x1x28x28xf32> to vector<28x28xf32>
    %c0_75 = arith.constant 0 : index
    %c420 = arith.constant 420 : index
    %47 = vector.load %arg17[%c0_75, %c420] : memref<28x700xf32, #tpu.memory_space<vmem>>, vector<28x28xf32>
    tpu.vector_store %arg17[%c0_75, %c420], %46 {strides = array<i32>} : memref<28x700xf32, #tpu.memory_space<vmem>>, vector<28x28xf32>,
    %c0_76 = arith.constant 0 : index
    %c0_77 = arith.constant 0 : index
    %c3_78 = arith.constant 3 : index
    %c1_79 = arith.constant 1 : index
    %48 = vector.load %arg1[%c0_76, %c0_77, %c3_78, %c1_79] : memref<1x1x32x32xf32, #tpu.memory_space<vmem>>, vector<1x1x28x28xf32>
    %49 = vector.shape_cast %48 : vector<1x1x28x28xf32> to vector<28x28xf32>
    %c0_80 = arith.constant 0 : index
    %c448 = arith.constant 448 : index
    %50 = vector.load %arg17[%c0_80, %c448] : memref<28x700xf32, #tpu.memory_space<vmem>>, vector<28x28xf32>
    tpu.vector_store %arg17[%c0_80, %c448], %49 {strides = array<i32>} : memref<28x700xf32, #tpu.memory_space<vmem>>, vector<28x28xf32>,
    %c0_81 = arith.constant 0 : index
    %c0_82 = arith.constant 0 : index
    %c3_83 = arith.constant 3 : index
    %c2_84 = arith.constant 2 : index
    %51 = vector.load %arg1[%c0_81, %c0_82, %c3_83, %c2_84] : memref<1x1x32x32xf32, #tpu.memory_space<vmem>>, vector<1x1x28x28xf32>
    %52 = vector.shape_cast %51 : vector<1x1x28x28xf32> to vector<28x28xf32>
    %c0_85 = arith.constant 0 : index
    %c476 = arith.constant 476 : index
    %53 = vector.load %arg17[%c0_85, %c476] : memref<28x700xf32, #tpu.memory_space<vmem>>, vector<28x28xf32>
    tpu.vector_store %arg17[%c0_85, %c476], %52 {strides = array<i32>} : memref<28x700xf32, #tpu.memory_space<vmem>>, vector<28x28xf32>,
    %c0_86 = arith.constant 0 : index
    %c0_87 = arith.constant 0 : index
    %c3_88 = arith.constant 3 : index
    %c3_89 = arith.constant 3 : index
    %54 = vector.load %arg1[%c0_86, %c0_87, %c3_88, %c3_89] : memref<1x1x32x32xf32, #tpu.memory_space<vmem>>, vector<1x1x28x28xf32>
    %55 = vector.shape_cast %54 : vector<1x1x28x28xf32> to vector<28x28xf32>
    %c0_90 = arith.constant 0 : index
    %c504 = arith.constant 504 : index
    %56 = vector.load %arg17[%c0_90, %c504] : memref<28x700xf32, #tpu.memory_space<vmem>>, vector<28x28xf32>
    tpu.vector_store %arg17[%c0_90, %c504], %55 {strides = array<i32>} : memref<28x700xf32, #tpu.memory_space<vmem>>, vector<28x28xf32>,
    %c0_91 = arith.constant 0 : index
    %c0_92 = arith.constant 0 : index
    %c3_93 = arith.constant 3 : index
    %c4_94 = arith.constant 4 : index
    %57 = vector.load %arg1[%c0_91, %c0_92, %c3_93, %c4_94] : memref<1x1x32x32xf32, #tpu.memory_space<vmem>>, vector<1x1x28x28xf32>
    %58 = vector.shape_cast %57 : vector<1x1x28x28xf32> to vector<28x28xf32>
    %c0_95 = arith.constant 0 : index
    %c532 = arith.constant 532 : index
    %59 = vector.load %arg17[%c0_95, %c532] : memref<28x700xf32, #tpu.memory_space<vmem>>, vector<28x28xf32>
    tpu.vector_store %arg17[%c0_95, %c532], %58 {strides = array<i32>} : memref<28x700xf32, #tpu.memory_space<vmem>>, vector<28x28xf32>,
    %c0_96 = arith.constant 0 : index
    %c0_97 = arith.constant 0 : index
    %c4_98 = arith.constant 4 : index
    %c0_99 = arith.constant 0 : index
    %60 = vector.load %arg1[%c0_96, %c0_97, %c4_98, %c0_99] : memref<1x1x32x32xf32, #tpu.memory_space<vmem>>, vector<1x1x28x28xf32>
    %61 = vector.shape_cast %60 : vector<1x1x28x28xf32> to vector<28x28xf32>
    %c0_100 = arith.constant 0 : index
    %c560 = arith.constant 560 : index
    %62 = vector.load %arg17[%c0_100, %c560] : memref<28x700xf32, #tpu.memory_space<vmem>>, vector<28x28xf32>
    tpu.vector_store %arg17[%c0_100, %c560], %61 {strides = array<i32>} : memref<28x700xf32, #tpu.memory_space<vmem>>, vector<28x28xf32>,
    %c0_101 = arith.constant 0 : index
    %c0_102 = arith.constant 0 : index
    %c4_103 = arith.constant 4 : index
    %c1_104 = arith.constant 1 : index
    %63 = vector.load %arg1[%c0_101, %c0_102, %c4_103, %c1_104] : memref<1x1x32x32xf32, #tpu.memory_space<vmem>>, vector<1x1x28x28xf32>
    %64 = vector.shape_cast %63 : vector<1x1x28x28xf32> to vector<28x28xf32>
    %c0_105 = arith.constant 0 : index
    %c588 = arith.constant 588 : index
    %65 = vector.load %arg17[%c0_105, %c588] : memref<28x700xf32, #tpu.memory_space<vmem>>, vector<28x28xf32>
    tpu.vector_store %arg17[%c0_105, %c588], %64 {strides = array<i32>} : memref<28x700xf32, #tpu.memory_space<vmem>>, vector<28x28xf32>,
    %c0_106 = arith.constant 0 : index
    %c0_107 = arith.constant 0 : index
    %c4_108 = arith.constant 4 : index
    %c2_109 = arith.constant 2 : index
    %66 = vector.load %arg1[%c0_106, %c0_107, %c4_108, %c2_109] : memref<1x1x32x32xf32, #tpu.memory_space<vmem>>, vector<1x1x28x28xf32>
    %67 = vector.shape_cast %66 : vector<1x1x28x28xf32> to vector<28x28xf32>
    %c0_110 = arith.constant 0 : index
    %c616 = arith.constant 616 : index
    %68 = vector.load %arg17[%c0_110, %c616] : memref<28x700xf32, #tpu.memory_space<vmem>>, vector<28x28xf32>
    tpu.vector_store %arg17[%c0_110, %c616], %67 {strides = array<i32>} : memref<28x700xf32, #tpu.memory_space<vmem>>, vector<28x28xf32>,
    %c0_111 = arith.constant 0 : index
    %c0_112 = arith.constant 0 : index
    %c4_113 = arith.constant 4 : index
    %c3_114 = arith.constant 3 : index
    %69 = vector.load %arg1[%c0_111, %c0_112, %c4_113, %c3_114] : memref<1x1x32x32xf32, #tpu.memory_space<vmem>>, vector<1x1x28x28xf32>
    %70 = vector.shape_cast %69 : vector<1x1x28x28xf32> to vector<28x28xf32>
    %c0_115 = arith.constant 0 : index
    %c644 = arith.constant 644 : index
    %71 = vector.load %arg17[%c0_115, %c644] : memref<28x700xf32, #tpu.memory_space<vmem>>, vector<28x28xf32>
    tpu.vector_store %arg17[%c0_115, %c644], %70 {strides = array<i32>} : memref<28x700xf32, #tpu.memory_space<vmem>>, vector<28x28xf32>,
    %c0_116 = arith.constant 0 : index
    %c0_117 = arith.constant 0 : index
    %c4_118 = arith.constant 4 : index
    %c4_119 = arith.constant 4 : index
    %72 = vector.load %arg1[%c0_116, %c0_117, %c4_118, %c4_119] : memref<1x1x32x32xf32, #tpu.memory_space<vmem>>, vector<1x1x28x28xf32>
    %73 = vector.shape_cast %72 : vector<1x1x28x28xf32> to vector<28x28xf32>
    %c0_120 = arith.constant 0 : index
    %c672 = arith.constant 672 : index
    %74 = vector.load %arg17[%c0_120, %c672] : memref<28x700xf32, #tpu.memory_space<vmem>>, vector<28x28xf32>
    tpu.vector_store %arg17[%c0_120, %c672], %73 {strides = array<i32>} : memref<28x700xf32, #tpu.memory_space<vmem>>, vector<28x28xf32>,
    %c0_121 = arith.constant 0 : index
    %c0_122 = arith.constant 0 : index
    %75 = vector.load %arg17[%c0_121, %c0_122] : memref<28x700xf32, #tpu.memory_space<vmem>>, vector<28x700xf32>
    %c0_123 = arith.constant 0 : index
    %c0_124 = arith.constant 0 : index
    %76 = vector.load %arg2[%c0_123, %c0_124] : memref<700x168xf32, #tpu.memory_space<vmem>>, vector<700x168xf32>
    %cst = arith.constant dense<0.000000e+00> : vector<28x168xf32>
    %77 = tpu.matmul %75, %76, %cst {dimension_numbers = #tpu.dot_dimension_numbers<[1], [0], [0], [1], [0, 0, 1, 1], [], []>} : vector<28x700xf32>, vector<700x168xf32>, vector<28x168xf32> -> vector<28x168xf32>
    %c0_125 = arith.constant 0 : index
    %c0_126 = arith.constant 0 : index
    %78 = vector.load %arg3[%c0_125, %c0_126] : memref<1x168xf32, #tpu.memory_space<vmem>>, vector<1x168xf32>
    %79 = vector.broadcast %78 : vector<1x168xf32> to vector<28x168xf32>
    %80 = arith.addf %77, %79 : vector<28x168xf32>
    %cst_127 = arith.constant 0.000000e+00 : f32
    %81 = vector.broadcast %cst_127 : f32 to vector<28x168xf32>
    %82 = arith.maximumf %80, %81 : vector<28x168xf32>
    %c0_128 = arith.constant 0 : index
    %c0_129 = arith.constant 0 : index
    %83 = vector.load %arg4[%c0_128, %c0_129] : memref<14x28xf32, #tpu.memory_space<vmem>>, vector<14x28xf32>
    %cst_130 = arith.constant dense<0.000000e+00> : vector<14x168xf32>
    %84 = tpu.matmul %83, %82, %cst_130 {dimension_numbers = #tpu.dot_dimension_numbers<[1], [0], [0], [1], [0, 0, 1, 1], [], []>} : vector<14x28xf32>, vector<28x168xf32>, vector<14x168xf32> -> vector<14x168xf32>
    %c0_131 = arith.constant 0 : index
    %c0_132 = arith.constant 0 : index
    %85 = vector.load %arg5[%c0_131, %c0_132] : memref<168x84xf32, #tpu.memory_space<vmem>>, vector<168x84xf32>
    %cst_133 = arith.constant dense<0.000000e+00> : vector<14x84xf32>
    %86 = tpu.matmul %84, %85, %cst_133 {dimension_numbers = #tpu.dot_dimension_numbers<[1], [0], [0], [1], [0, 0, 1, 1], [], []>} : vector<14x168xf32>, vector<168x84xf32>, vector<14x84xf32> -> vector<14x84xf32>
    %87 = vector.extract_strided_slice %86 {offsets = [0, 0], sizes = [12, 12], strides = [1, 1]} : vector<14x84xf32> to vector<12x12xf32>
    %c0_134 = arith.constant 0 : index
    %c0_135 = arith.constant 0 : index
    %88 = vector.load %arg18[%c0_134, %c0_135] : memref<12x648xf32, #tpu.memory_space<vmem>>, vector<12x12xf32>
    tpu.vector_store %arg18[%c0_134, %c0_135], %87 {strides = array<i32>} : memref<12x648xf32, #tpu.memory_space<vmem>>, vector<12x12xf32>,
    %89 = vector.extract_strided_slice %86 {offsets = [0, 1], sizes = [12, 12], strides = [1, 1]} : vector<14x84xf32> to vector<12x12xf32>
    %c0_136 = arith.constant 0 : index
    %c12 = arith.constant 12 : index
    %90 = vector.load %arg18[%c0_136, %c12] : memref<12x648xf32, #tpu.memory_space<vmem>>, vector<12x12xf32>
    tpu.vector_store %arg18[%c0_136, %c12], %89 {strides = array<i32>} : memref<12x648xf32, #tpu.memory_space<vmem>>, vector<12x12xf32>,
    %91 = vector.extract_strided_slice %86 {offsets = [0, 2], sizes = [12, 12], strides = [1, 1]} : vector<14x84xf32> to vector<12x12xf32>
    %c0_137 = arith.constant 0 : index
    %c24 = arith.constant 24 : index
    %92 = vector.load %arg18[%c0_137, %c24] : memref<12x648xf32, #tpu.memory_space<vmem>>, vector<12x12xf32>
    tpu.vector_store %arg18[%c0_137, %c24], %91 {strides = array<i32>} : memref<12x648xf32, #tpu.memory_space<vmem>>, vector<12x12xf32>,
    %93 = vector.extract_strided_slice %86 {offsets = [1, 0], sizes = [12, 12], strides = [1, 1]} : vector<14x84xf32> to vector<12x12xf32>
    %c0_138 = arith.constant 0 : index
    %c36 = arith.constant 36 : index
    %94 = vector.load %arg18[%c0_138, %c36] : memref<12x648xf32, #tpu.memory_space<vmem>>, vector<12x12xf32>
    tpu.vector_store %arg18[%c0_138, %c36], %93 {strides = array<i32>} : memref<12x648xf32, #tpu.memory_space<vmem>>, vector<12x12xf32>,
    %95 = vector.extract_strided_slice %86 {offsets = [1, 1], sizes = [12, 12], strides = [1, 1]} : vector<14x84xf32> to vector<12x12xf32>
    %c0_139 = arith.constant 0 : index
    %c48 = arith.constant 48 : index
    %96 = vector.load %arg18[%c0_139, %c48] : memref<12x648xf32, #tpu.memory_space<vmem>>, vector<12x12xf32>
    tpu.vector_store %arg18[%c0_139, %c48], %95 {strides = array<i32>} : memref<12x648xf32, #tpu.memory_space<vmem>>, vector<12x12xf32>,
    %97 = vector.extract_strided_slice %86 {offsets = [1, 2], sizes = [12, 12], strides = [1, 1]} : vector<14x84xf32> to vector<12x12xf32>
    %c0_140 = arith.constant 0 : index
    %c60 = arith.constant 60 : index
    %98 = vector.load %arg18[%c0_140, %c60] : memref<12x648xf32, #tpu.memory_space<vmem>>, vector<12x12xf32>
    tpu.vector_store %arg18[%c0_140, %c60], %97 {strides = array<i32>} : memref<12x648xf32, #tpu.memory_space<vmem>>, vector<12x12xf32>,
    %99 = vector.extract_strided_slice %86 {offsets = [2, 0], sizes = [12, 12], strides = [1, 1]} : vector<14x84xf32> to vector<12x12xf32>
    %c0_141 = arith.constant 0 : index
    %c72 = arith.constant 72 : index
    %100 = vector.load %arg18[%c0_141, %c72] : memref<12x648xf32, #tpu.memory_space<vmem>>, vector<12x12xf32>
    tpu.vector_store %arg18[%c0_141, %c72], %99 {strides = array<i32>} : memref<12x648xf32, #tpu.memory_space<vmem>>, vector<12x12xf32>,
    %101 = vector.extract_strided_slice %86 {offsets = [2, 1], sizes = [12, 12], strides = [1, 1]} : vector<14x84xf32> to vector<12x12xf32>
    %c0_142 = arith.constant 0 : index
    %c84_143 = arith.constant 84 : index
    %102 = vector.load %arg18[%c0_142, %c84_143] : memref<12x648xf32, #tpu.memory_space<vmem>>, vector<12x12xf32>
    tpu.vector_store %arg18[%c0_142, %c84_143], %101 {strides = array<i32>} : memref<12x648xf32, #tpu.memory_space<vmem>>, vector<12x12xf32>,
    %103 = vector.extract_strided_slice %86 {offsets = [2, 2], sizes = [12, 12], strides = [1, 1]} : vector<14x84xf32> to vector<12x12xf32>
    %c0_144 = arith.constant 0 : index
    %c96 = arith.constant 96 : index
    %104 = vector.load %arg18[%c0_144, %c96] : memref<12x648xf32, #tpu.memory_space<vmem>>, vector<12x12xf32>
    tpu.vector_store %arg18[%c0_144, %c96], %103 {strides = array<i32>} : memref<12x648xf32, #tpu.memory_space<vmem>>, vector<12x12xf32>,
    %105 = vector.extract_strided_slice %86 {offsets = [0, 14], sizes = [12, 12], strides = [1, 1]} : vector<14x84xf32> to vector<12x12xf32>
    %c0_145 = arith.constant 0 : index
    %c108 = arith.constant 108 : index
    %106 = vector.load %arg18[%c0_145, %c108] : memref<12x648xf32, #tpu.memory_space<vmem>>, vector<12x12xf32>
    tpu.vector_store %arg18[%c0_145, %c108], %105 {strides = array<i32>} : memref<12x648xf32, #tpu.memory_space<vmem>>, vector<12x12xf32>,
    %107 = vector.extract_strided_slice %86 {offsets = [0, 15], sizes = [12, 12], strides = [1, 1]} : vector<14x84xf32> to vector<12x12xf32>
    %c0_146 = arith.constant 0 : index
    %c120 = arith.constant 120 : index
    %108 = vector.load %arg18[%c0_146, %c120] : memref<12x648xf32, #tpu.memory_space<vmem>>, vector<12x12xf32>
    tpu.vector_store %arg18[%c0_146, %c120], %107 {strides = array<i32>} : memref<12x648xf32, #tpu.memory_space<vmem>>, vector<12x12xf32>,
    %109 = vector.extract_strided_slice %86 {offsets = [0, 16], sizes = [12, 12], strides = [1, 1]} : vector<14x84xf32> to vector<12x12xf32>
    %c0_147 = arith.constant 0 : index
    %c132 = arith.constant 132 : index
    %110 = vector.load %arg18[%c0_147, %c132] : memref<12x648xf32, #tpu.memory_space<vmem>>, vector<12x12xf32>
    tpu.vector_store %arg18[%c0_147, %c132], %109 {strides = array<i32>} : memref<12x648xf32, #tpu.memory_space<vmem>>, vector<12x12xf32>,
    %111 = vector.extract_strided_slice %86 {offsets = [1, 14], sizes = [12, 12], strides = [1, 1]} : vector<14x84xf32> to vector<12x12xf32>
    %c0_148 = arith.constant 0 : index
    %c144 = arith.constant 144 : index
    %112 = vector.load %arg18[%c0_148, %c144] : memref<12x648xf32, #tpu.memory_space<vmem>>, vector<12x12xf32>
    tpu.vector_store %arg18[%c0_148, %c144], %111 {strides = array<i32>} : memref<12x648xf32, #tpu.memory_space<vmem>>, vector<12x12xf32>,
    %113 = vector.extract_strided_slice %86 {offsets = [1, 15], sizes = [12, 12], strides = [1, 1]} : vector<14x84xf32> to vector<12x12xf32>
    %c0_149 = arith.constant 0 : index
    %c156 = arith.constant 156 : index
    %114 = vector.load %arg18[%c0_149, %c156] : memref<12x648xf32, #tpu.memory_space<vmem>>, vector<12x12xf32>
    tpu.vector_store %arg18[%c0_149, %c156], %113 {strides = array<i32>} : memref<12x648xf32, #tpu.memory_space<vmem>>, vector<12x12xf32>,
    %115 = vector.extract_strided_slice %86 {offsets = [1, 16], sizes = [12, 12], strides = [1, 1]} : vector<14x84xf32> to vector<12x12xf32>
    %c0_150 = arith.constant 0 : index
    %c168_151 = arith.constant 168 : index
    %116 = vector.load %arg18[%c0_150, %c168_151] : memref<12x648xf32, #tpu.memory_space<vmem>>, vector<12x12xf32>
    tpu.vector_store %arg18[%c0_150, %c168_151], %115 {strides = array<i32>} : memref<12x648xf32, #tpu.memory_space<vmem>>, vector<12x12xf32>,
    %117 = vector.extract_strided_slice %86 {offsets = [2, 14], sizes = [12, 12], strides = [1, 1]} : vector<14x84xf32> to vector<12x12xf32>
    %c0_152 = arith.constant 0 : index
    %c180 = arith.constant 180 : index
    %118 = vector.load %arg18[%c0_152, %c180] : memref<12x648xf32, #tpu.memory_space<vmem>>, vector<12x12xf32>
    tpu.vector_store %arg18[%c0_152, %c180], %117 {strides = array<i32>} : memref<12x648xf32, #tpu.memory_space<vmem>>, vector<12x12xf32>,
    %119 = vector.extract_strided_slice %86 {offsets = [2, 15], sizes = [12, 12], strides = [1, 1]} : vector<14x84xf32> to vector<12x12xf32>
    %c0_153 = arith.constant 0 : index
    %c192 = arith.constant 192 : index
    %120 = vector.load %arg18[%c0_153, %c192] : memref<12x648xf32, #tpu.memory_space<vmem>>, vector<12x12xf32>
    tpu.vector_store %arg18[%c0_153, %c192], %119 {strides = array<i32>} : memref<12x648xf32, #tpu.memory_space<vmem>>, vector<12x12xf32>,
    %121 = vector.extract_strided_slice %86 {offsets = [2, 16], sizes = [12, 12], strides = [1, 1]} : vector<14x84xf32> to vector<12x12xf32>
    %c0_154 = arith.constant 0 : index
    %c204 = arith.constant 204 : index
    %122 = vector.load %arg18[%c0_154, %c204] : memref<12x648xf32, #tpu.memory_space<vmem>>, vector<12x12xf32>
    tpu.vector_store %arg18[%c0_154, %c204], %121 {strides = array<i32>} : memref<12x648xf32, #tpu.memory_space<vmem>>, vector<12x12xf32>,
    %123 = vector.extract_strided_slice %86 {offsets = [0, 28], sizes = [12, 12], strides = [1, 1]} : vector<14x84xf32> to vector<12x12xf32>
    %c0_155 = arith.constant 0 : index
    %c216 = arith.constant 216 : index
    %124 = vector.load %arg18[%c0_155, %c216] : memref<12x648xf32, #tpu.memory_space<vmem>>, vector<12x12xf32>
    tpu.vector_store %arg18[%c0_155, %c216], %123 {strides = array<i32>} : memref<12x648xf32, #tpu.memory_space<vmem>>, vector<12x12xf32>,
    %125 = vector.extract_strided_slice %86 {offsets = [0, 29], sizes = [12, 12], strides = [1, 1]} : vector<14x84xf32> to vector<12x12xf32>
    %c0_156 = arith.constant 0 : index
    %c228 = arith.constant 228 : index
    %126 = vector.load %arg18[%c0_156, %c228] : memref<12x648xf32, #tpu.memory_space<vmem>>, vector<12x12xf32>
    tpu.vector_store %arg18[%c0_156, %c228], %125 {strides = array<i32>} : memref<12x648xf32, #tpu.memory_space<vmem>>, vector<12x12xf32>,
    %127 = vector.extract_strided_slice %86 {offsets = [0, 30], sizes = [12, 12], strides = [1, 1]} : vector<14x84xf32> to vector<12x12xf32>
    %c0_157 = arith.constant 0 : index
    %c240 = arith.constant 240 : index
    %128 = vector.load %arg18[%c0_157, %c240] : memref<12x648xf32, #tpu.memory_space<vmem>>, vector<12x12xf32>
    tpu.vector_store %arg18[%c0_157, %c240], %127 {strides = array<i32>} : memref<12x648xf32, #tpu.memory_space<vmem>>, vector<12x12xf32>,
    %129 = vector.extract_strided_slice %86 {offsets = [1, 28], sizes = [12, 12], strides = [1, 1]} : vector<14x84xf32> to vector<12x12xf32>
    %c0_158 = arith.constant 0 : index
    %c252_159 = arith.constant 252 : index
    %130 = vector.load %arg18[%c0_158, %c252_159] : memref<12x648xf32, #tpu.memory_space<vmem>>, vector<12x12xf32>
    tpu.vector_store %arg18[%c0_158, %c252_159], %129 {strides = array<i32>} : memref<12x648xf32, #tpu.memory_space<vmem>>, vector<12x12xf32>,
    %131 = vector.extract_strided_slice %86 {offsets = [1, 29], sizes = [12, 12], strides = [1, 1]} : vector<14x84xf32> to vector<12x12xf32>
    %c0_160 = arith.constant 0 : index
    %c264 = arith.constant 264 : index
    %132 = vector.load %arg18[%c0_160, %c264] : memref<12x648xf32, #tpu.memory_space<vmem>>, vector<12x12xf32>
    tpu.vector_store %arg18[%c0_160, %c264], %131 {strides = array<i32>} : memref<12x648xf32, #tpu.memory_space<vmem>>, vector<12x12xf32>,
    %133 = vector.extract_strided_slice %86 {offsets = [1, 30], sizes = [12, 12], strides = [1, 1]} : vector<14x84xf32> to vector<12x12xf32>
    %c0_161 = arith.constant 0 : index
    %c276 = arith.constant 276 : index
    %134 = vector.load %arg18[%c0_161, %c276] : memref<12x648xf32, #tpu.memory_space<vmem>>, vector<12x12xf32>
    tpu.vector_store %arg18[%c0_161, %c276], %133 {strides = array<i32>} : memref<12x648xf32, #tpu.memory_space<vmem>>, vector<12x12xf32>,
    %135 = vector.extract_strided_slice %86 {offsets = [2, 28], sizes = [12, 12], strides = [1, 1]} : vector<14x84xf32> to vector<12x12xf32>
    %c0_162 = arith.constant 0 : index
    %c288 = arith.constant 288 : index
    %136 = vector.load %arg18[%c0_162, %c288] : memref<12x648xf32, #tpu.memory_space<vmem>>, vector<12x12xf32>
    tpu.vector_store %arg18[%c0_162, %c288], %135 {strides = array<i32>} : memref<12x648xf32, #tpu.memory_space<vmem>>, vector<12x12xf32>,
    %137 = vector.extract_strided_slice %86 {offsets = [2, 29], sizes = [12, 12], strides = [1, 1]} : vector<14x84xf32> to vector<12x12xf32>
    %c0_163 = arith.constant 0 : index
    %c300 = arith.constant 300 : index
    %138 = vector.load %arg18[%c0_163, %c300] : memref<12x648xf32, #tpu.memory_space<vmem>>, vector<12x12xf32>
    tpu.vector_store %arg18[%c0_163, %c300], %137 {strides = array<i32>} : memref<12x648xf32, #tpu.memory_space<vmem>>, vector<12x12xf32>,
    %139 = vector.extract_strided_slice %86 {offsets = [2, 30], sizes = [12, 12], strides = [1, 1]} : vector<14x84xf32> to vector<12x12xf32>
    %c0_164 = arith.constant 0 : index
    %c312 = arith.constant 312 : index
    %140 = vector.load %arg18[%c0_164, %c312] : memref<12x648xf32, #tpu.memory_space<vmem>>, vector<12x12xf32>
    tpu.vector_store %arg18[%c0_164, %c312], %139 {strides = array<i32>} : memref<12x648xf32, #tpu.memory_space<vmem>>, vector<12x12xf32>,
    %141 = vector.extract_strided_slice %86 {offsets = [0, 42], sizes = [12, 12], strides = [1, 1]} : vector<14x84xf32> to vector<12x12xf32>
    %c0_165 = arith.constant 0 : index
    %c324 = arith.constant 324 : index
    %142 = vector.load %arg18[%c0_165, %c324] : memref<12x648xf32, #tpu.memory_space<vmem>>, vector<12x12xf32>
    tpu.vector_store %arg18[%c0_165, %c324], %141 {strides = array<i32>} : memref<12x648xf32, #tpu.memory_space<vmem>>, vector<12x12xf32>,
    %143 = vector.extract_strided_slice %86 {offsets = [0, 43], sizes = [12, 12], strides = [1, 1]} : vector<14x84xf32> to vector<12x12xf32>
    %c0_166 = arith.constant 0 : index
    %c336_167 = arith.constant 336 : index
    %144 = vector.load %arg18[%c0_166, %c336_167] : memref<12x648xf32, #tpu.memory_space<vmem>>, vector<12x12xf32>
    tpu.vector_store %arg18[%c0_166, %c336_167], %143 {strides = array<i32>} : memref<12x648xf32, #tpu.memory_space<vmem>>, vector<12x12xf32>,
    %145 = vector.extract_strided_slice %86 {offsets = [0, 44], sizes = [12, 12], strides = [1, 1]} : vector<14x84xf32> to vector<12x12xf32>
    %c0_168 = arith.constant 0 : index
    %c348 = arith.constant 348 : index
    %146 = vector.load %arg18[%c0_168, %c348] : memref<12x648xf32, #tpu.memory_space<vmem>>, vector<12x12xf32>
    tpu.vector_store %arg18[%c0_168, %c348], %145 {strides = array<i32>} : memref<12x648xf32, #tpu.memory_space<vmem>>, vector<12x12xf32>,
    %147 = vector.extract_strided_slice %86 {offsets = [1, 42], sizes = [12, 12], strides = [1, 1]} : vector<14x84xf32> to vector<12x12xf32>
    %c0_169 = arith.constant 0 : index
    %c360 = arith.constant 360 : index
    %148 = vector.load %arg18[%c0_169, %c360] : memref<12x648xf32, #tpu.memory_space<vmem>>, vector<12x12xf32>
    tpu.vector_store %arg18[%c0_169, %c360], %147 {strides = array<i32>} : memref<12x648xf32, #tpu.memory_space<vmem>>, vector<12x12xf32>,
    %149 = vector.extract_strided_slice %86 {offsets = [1, 43], sizes = [12, 12], strides = [1, 1]} : vector<14x84xf32> to vector<12x12xf32>
    %c0_170 = arith.constant 0 : index
    %c372 = arith.constant 372 : index
    %150 = vector.load %arg18[%c0_170, %c372] : memref<12x648xf32, #tpu.memory_space<vmem>>, vector<12x12xf32>
    tpu.vector_store %arg18[%c0_170, %c372], %149 {strides = array<i32>} : memref<12x648xf32, #tpu.memory_space<vmem>>, vector<12x12xf32>,
    %151 = vector.extract_strided_slice %86 {offsets = [1, 44], sizes = [12, 12], strides = [1, 1]} : vector<14x84xf32> to vector<12x12xf32>
    %c0_171 = arith.constant 0 : index
    %c384 = arith.constant 384 : index
    %152 = vector.load %arg18[%c0_171, %c384] : memref<12x648xf32, #tpu.memory_space<vmem>>, vector<12x12xf32>
    tpu.vector_store %arg18[%c0_171, %c384], %151 {strides = array<i32>} : memref<12x648xf32, #tpu.memory_space<vmem>>, vector<12x12xf32>,
    %153 = vector.extract_strided_slice %86 {offsets = [2, 42], sizes = [12, 12], strides = [1, 1]} : vector<14x84xf32> to vector<12x12xf32>
    %c0_172 = arith.constant 0 : index
    %c396 = arith.constant 396 : index
    %154 = vector.load %arg18[%c0_172, %c396] : memref<12x648xf32, #tpu.memory_space<vmem>>, vector<12x12xf32>
    tpu.vector_store %arg18[%c0_172, %c396], %153 {strides = array<i32>} : memref<12x648xf32, #tpu.memory_space<vmem>>, vector<12x12xf32>,
    %155 = vector.extract_strided_slice %86 {offsets = [2, 43], sizes = [12, 12], strides = [1, 1]} : vector<14x84xf32> to vector<12x12xf32>
    %c0_173 = arith.constant 0 : index
    %c408 = arith.constant 408 : index
    %156 = vector.load %arg18[%c0_173, %c408] : memref<12x648xf32, #tpu.memory_space<vmem>>, vector<12x12xf32>
    tpu.vector_store %arg18[%c0_173, %c408], %155 {strides = array<i32>} : memref<12x648xf32, #tpu.memory_space<vmem>>, vector<12x12xf32>,
    %157 = vector.extract_strided_slice %86 {offsets = [2, 44], sizes = [12, 12], strides = [1, 1]} : vector<14x84xf32> to vector<12x12xf32>
    %c0_174 = arith.constant 0 : index
    %c420_175 = arith.constant 420 : index
    %158 = vector.load %arg18[%c0_174, %c420_175] : memref<12x648xf32, #tpu.memory_space<vmem>>, vector<12x12xf32>
    tpu.vector_store %arg18[%c0_174, %c420_175], %157 {strides = array<i32>} : memref<12x648xf32, #tpu.memory_space<vmem>>, vector<12x12xf32>,
    %159 = vector.extract_strided_slice %86 {offsets = [0, 56], sizes = [12, 12], strides = [1, 1]} : vector<14x84xf32> to vector<12x12xf32>
    %c0_176 = arith.constant 0 : index
    %c432 = arith.constant 432 : index
    %160 = vector.load %arg18[%c0_176, %c432] : memref<12x648xf32, #tpu.memory_space<vmem>>, vector<12x12xf32>
    tpu.vector_store %arg18[%c0_176, %c432], %159 {strides = array<i32>} : memref<12x648xf32, #tpu.memory_space<vmem>>, vector<12x12xf32>,
    %161 = vector.extract_strided_slice %86 {offsets = [0, 57], sizes = [12, 12], strides = [1, 1]} : vector<14x84xf32> to vector<12x12xf32>
    %c0_177 = arith.constant 0 : index
    %c444 = arith.constant 444 : index
    %162 = vector.load %arg18[%c0_177, %c444] : memref<12x648xf32, #tpu.memory_space<vmem>>, vector<12x12xf32>
    tpu.vector_store %arg18[%c0_177, %c444], %161 {strides = array<i32>} : memref<12x648xf32, #tpu.memory_space<vmem>>, vector<12x12xf32>,
    %163 = vector.extract_strided_slice %86 {offsets = [0, 58], sizes = [12, 12], strides = [1, 1]} : vector<14x84xf32> to vector<12x12xf32>
    %c0_178 = arith.constant 0 : index
    %c456 = arith.constant 456 : index
    %164 = vector.load %arg18[%c0_178, %c456] : memref<12x648xf32, #tpu.memory_space<vmem>>, vector<12x12xf32>
    tpu.vector_store %arg18[%c0_178, %c456], %163 {strides = array<i32>} : memref<12x648xf32, #tpu.memory_space<vmem>>, vector<12x12xf32>,
    %165 = vector.extract_strided_slice %86 {offsets = [1, 56], sizes = [12, 12], strides = [1, 1]} : vector<14x84xf32> to vector<12x12xf32>
    %c0_179 = arith.constant 0 : index
    %c468 = arith.constant 468 : index
    %166 = vector.load %arg18[%c0_179, %c468] : memref<12x648xf32, #tpu.memory_space<vmem>>, vector<12x12xf32>
    tpu.vector_store %arg18[%c0_179, %c468], %165 {strides = array<i32>} : memref<12x648xf32, #tpu.memory_space<vmem>>, vector<12x12xf32>,
    %167 = vector.extract_strided_slice %86 {offsets = [1, 57], sizes = [12, 12], strides = [1, 1]} : vector<14x84xf32> to vector<12x12xf32>
    %c0_180 = arith.constant 0 : index
    %c480 = arith.constant 480 : index
    %168 = vector.load %arg18[%c0_180, %c480] : memref<12x648xf32, #tpu.memory_space<vmem>>, vector<12x12xf32>
    tpu.vector_store %arg18[%c0_180, %c480], %167 {strides = array<i32>} : memref<12x648xf32, #tpu.memory_space<vmem>>, vector<12x12xf32>,
    %169 = vector.extract_strided_slice %86 {offsets = [1, 58], sizes = [12, 12], strides = [1, 1]} : vector<14x84xf32> to vector<12x12xf32>
    %c0_181 = arith.constant 0 : index
    %c492 = arith.constant 492 : index
    %170 = vector.load %arg18[%c0_181, %c492] : memref<12x648xf32, #tpu.memory_space<vmem>>, vector<12x12xf32>
    tpu.vector_store %arg18[%c0_181, %c492], %169 {strides = array<i32>} : memref<12x648xf32, #tpu.memory_space<vmem>>, vector<12x12xf32>,
    %171 = vector.extract_strided_slice %86 {offsets = [2, 56], sizes = [12, 12], strides = [1, 1]} : vector<14x84xf32> to vector<12x12xf32>
    %c0_182 = arith.constant 0 : index
    %c504_183 = arith.constant 504 : index
    %172 = vector.load %arg18[%c0_182, %c504_183] : memref<12x648xf32, #tpu.memory_space<vmem>>, vector<12x12xf32>
    tpu.vector_store %arg18[%c0_182, %c504_183], %171 {strides = array<i32>} : memref<12x648xf32, #tpu.memory_space<vmem>>, vector<12x12xf32>,
    %173 = vector.extract_strided_slice %86 {offsets = [2, 57], sizes = [12, 12], strides = [1, 1]} : vector<14x84xf32> to vector<12x12xf32>
    %c0_184 = arith.constant 0 : index
    %c516 = arith.constant 516 : index
    %174 = vector.load %arg18[%c0_184, %c516] : memref<12x648xf32, #tpu.memory_space<vmem>>, vector<12x12xf32>
    tpu.vector_store %arg18[%c0_184, %c516], %173 {strides = array<i32>} : memref<12x648xf32, #tpu.memory_space<vmem>>, vector<12x12xf32>,
    %175 = vector.extract_strided_slice %86 {offsets = [2, 58], sizes = [12, 12], strides = [1, 1]} : vector<14x84xf32> to vector<12x12xf32>
    %c0_185 = arith.constant 0 : index
    %c528 = arith.constant 528 : index
    %176 = vector.load %arg18[%c0_185, %c528] : memref<12x648xf32, #tpu.memory_space<vmem>>, vector<12x12xf32>
    tpu.vector_store %arg18[%c0_185, %c528], %175 {strides = array<i32>} : memref<12x648xf32, #tpu.memory_space<vmem>>, vector<12x12xf32>,
    %177 = vector.extract_strided_slice %86 {offsets = [0, 70], sizes = [12, 12], strides = [1, 1]} : vector<14x84xf32> to vector<12x12xf32>
    %c0_186 = arith.constant 0 : index
    %c540 = arith.constant 540 : index
    %178 = vector.load %arg18[%c0_186, %c540] : memref<12x648xf32, #tpu.memory_space<vmem>>, vector<12x12xf32>
    tpu.vector_store %arg18[%c0_186, %c540], %177 {strides = array<i32>} : memref<12x648xf32, #tpu.memory_space<vmem>>, vector<12x12xf32>,
    %179 = vector.extract_strided_slice %86 {offsets = [0, 71], sizes = [12, 12], strides = [1, 1]} : vector<14x84xf32> to vector<12x12xf32>
    %c0_187 = arith.constant 0 : index
    %c552 = arith.constant 552 : index
    %180 = vector.load %arg18[%c0_187, %c552] : memref<12x648xf32, #tpu.memory_space<vmem>>, vector<12x12xf32>
    tpu.vector_store %arg18[%c0_187, %c552], %179 {strides = array<i32>} : memref<12x648xf32, #tpu.memory_space<vmem>>, vector<12x12xf32>,
    %181 = vector.extract_strided_slice %86 {offsets = [0, 72], sizes = [12, 12], strides = [1, 1]} : vector<14x84xf32> to vector<12x12xf32>
    %c0_188 = arith.constant 0 : index
    %c564 = arith.constant 564 : index
    %182 = vector.load %arg18[%c0_188, %c564] : memref<12x648xf32, #tpu.memory_space<vmem>>, vector<12x12xf32>
    tpu.vector_store %arg18[%c0_188, %c564], %181 {strides = array<i32>} : memref<12x648xf32, #tpu.memory_space<vmem>>, vector<12x12xf32>,
    %183 = vector.extract_strided_slice %86 {offsets = [1, 70], sizes = [12, 12], strides = [1, 1]} : vector<14x84xf32> to vector<12x12xf32>
    %c0_189 = arith.constant 0 : index
    %c576 = arith.constant 576 : index
    %184 = vector.load %arg18[%c0_189, %c576] : memref<12x648xf32, #tpu.memory_space<vmem>>, vector<12x12xf32>
    tpu.vector_store %arg18[%c0_189, %c576], %183 {strides = array<i32>} : memref<12x648xf32, #tpu.memory_space<vmem>>, vector<12x12xf32>,
    %185 = vector.extract_strided_slice %86 {offsets = [1, 71], sizes = [12, 12], strides = [1, 1]} : vector<14x84xf32> to vector<12x12xf32>
    %c0_190 = arith.constant 0 : index
    %c588_191 = arith.constant 588 : index
    %186 = vector.load %arg18[%c0_190, %c588_191] : memref<12x648xf32, #tpu.memory_space<vmem>>, vector<12x12xf32>
    tpu.vector_store %arg18[%c0_190, %c588_191], %185 {strides = array<i32>} : memref<12x648xf32, #tpu.memory_space<vmem>>, vector<12x12xf32>,
    %187 = vector.extract_strided_slice %86 {offsets = [1, 72], sizes = [12, 12], strides = [1, 1]} : vector<14x84xf32> to vector<12x12xf32>
    %c0_192 = arith.constant 0 : index
    %c600 = arith.constant 600 : index
    %188 = vector.load %arg18[%c0_192, %c600] : memref<12x648xf32, #tpu.memory_space<vmem>>, vector<12x12xf32>
    tpu.vector_store %arg18[%c0_192, %c600], %187 {strides = array<i32>} : memref<12x648xf32, #tpu.memory_space<vmem>>, vector<12x12xf32>,
    %189 = vector.extract_strided_slice %86 {offsets = [2, 70], sizes = [12, 12], strides = [1, 1]} : vector<14x84xf32> to vector<12x12xf32>
    %c0_193 = arith.constant 0 : index
    %c612 = arith.constant 612 : index
    %190 = vector.load %arg18[%c0_193, %c612] : memref<12x648xf32, #tpu.memory_space<vmem>>, vector<12x12xf32>
    tpu.vector_store %arg18[%c0_193, %c612], %189 {strides = array<i32>} : memref<12x648xf32, #tpu.memory_space<vmem>>, vector<12x12xf32>,
    %191 = vector.extract_strided_slice %86 {offsets = [2, 71], sizes = [12, 12], strides = [1, 1]} : vector<14x84xf32> to vector<12x12xf32>
    %c0_194 = arith.constant 0 : index
    %c624 = arith.constant 624 : index
    %192 = vector.load %arg18[%c0_194, %c624] : memref<12x648xf32, #tpu.memory_space<vmem>>, vector<12x12xf32>
    tpu.vector_store %arg18[%c0_194, %c624], %191 {strides = array<i32>} : memref<12x648xf32, #tpu.memory_space<vmem>>, vector<12x12xf32>,
    %193 = vector.extract_strided_slice %86 {offsets = [2, 72], sizes = [12, 12], strides = [1, 1]} : vector<14x84xf32> to vector<12x12xf32>
    %c0_195 = arith.constant 0 : index
    %c636 = arith.constant 636 : index
    %194 = vector.load %arg18[%c0_195, %c636] : memref<12x648xf32, #tpu.memory_space<vmem>>, vector<12x12xf32>
    tpu.vector_store %arg18[%c0_195, %c636], %193 {strides = array<i32>} : memref<12x648xf32, #tpu.memory_space<vmem>>, vector<12x12xf32>,
    %c0_196 = arith.constant 0 : index
    %c0_197 = arith.constant 0 : index
    %195 = vector.load %arg18[%c0_196, %c0_197] : memref<12x648xf32, #tpu.memory_space<vmem>>, vector<12x648xf32>
    %c0_198 = arith.constant 0 : index
    %c0_199 = arith.constant 0 : index
    %196 = vector.load %arg6[%c0_198, %c0_199] : memref<648x192xf32, #tpu.memory_space<vmem>>, vector<648x192xf32>
    %cst_200 = arith.constant dense<0.000000e+00> : vector<12x192xf32>
    %197 = tpu.matmul %195, %196, %cst_200 {dimension_numbers = #tpu.dot_dimension_numbers<[1], [0], [0], [1], [0, 0, 1, 1], [], []>} : vector<12x648xf32>, vector<648x192xf32>, vector<12x192xf32> -> vector<12x192xf32>
    %c0_201 = arith.constant 0 : index
    %c0_202 = arith.constant 0 : index
    %198 = vector.load %arg7[%c0_201, %c0_202] : memref<1x192xf32, #tpu.memory_space<vmem>>, vector<1x192xf32>
    %199 = vector.broadcast %198 : vector<1x192xf32> to vector<12x192xf32>
    %200 = arith.addf %197, %199 : vector<12x192xf32>
    %cst_203 = arith.constant 0.000000e+00 : f32
    %201 = vector.broadcast %cst_203 : f32 to vector<12x192xf32>
    %202 = arith.maximumf %200, %201 : vector<12x192xf32>
    %c0_204 = arith.constant 0 : index
    %c0_205 = arith.constant 0 : index
    %203 = vector.load %arg8[%c0_204, %c0_205] : memref<6x12xf32, #tpu.memory_space<vmem>>, vector<6x12xf32>
    %cst_206 = arith.constant dense<0.000000e+00> : vector<6x192xf32>
    %204 = tpu.matmul %203, %202, %cst_206 {dimension_numbers = #tpu.dot_dimension_numbers<[1], [0], [0], [1], [0, 0, 1, 1], [], []>} : vector<6x12xf32>, vector<12x192xf32>, vector<6x192xf32> -> vector<6x192xf32>
    %c0_207 = arith.constant 0 : index
    %c0_208 = arith.constant 0 : index
    %205 = vector.load %arg9[%c0_207, %c0_208] : memref<192x96xf32, #tpu.memory_space<vmem>>, vector<192x96xf32>
    %cst_209 = arith.constant dense<0.000000e+00> : vector<6x96xf32>
    %206 = tpu.matmul %204, %205, %cst_209 {dimension_numbers = #tpu.dot_dimension_numbers<[1], [0], [0], [1], [0, 0, 1, 1], [], []>} : vector<6x192xf32>, vector<192x96xf32>, vector<6x96xf32> -> vector<6x96xf32>
    %c0_210 = arith.constant 0 : index
    %c0_211 = arith.constant 0 : index
    %207 = vector.load %arg11[%c0_210, %c0_211] : memref<1x64xf32, #tpu.memory_space<vmem>>, vector<1x64xf32>
    %208 = vector.extract_strided_slice %206 {offsets = [0, 0], sizes = [1, 96], strides = [1, 1]} : vector<6x96xf32> to vector<1x96xf32>
    %c0_212 = arith.constant 0 : index
    %c0_213 = arith.constant 0 : index
    %c0_214 = arith.constant 0 : index
    %209 = vector.load %arg10[%c0_212, %c0_213, %c0_214] : memref<6x96x64xf32, #tpu.memory_space<vmem>>, vector<1x96x64xf32>
    %210 = vector.shape_cast %209 : vector<1x96x64xf32> to vector<96x64xf32>
    %cst_215 = arith.constant dense<0.000000e+00> : vector<1x64xf32>
    %211 = tpu.matmul %208, %210, %cst_215 {dimension_numbers = #tpu.dot_dimension_numbers<[1], [0], [0], [1], [0, 0, 1, 1], [], []>} : vector<1x96xf32>, vector<96x64xf32>, vector<1x64xf32> -> vector<1x64xf32>
    %212 = arith.addf %207, %211 : vector<1x64xf32>
    %213 = vector.extract_strided_slice %206 {offsets = [1, 0], sizes = [1, 96], strides = [1, 1]} : vector<6x96xf32> to vector<1x96xf32>
    %c1_216 = arith.constant 1 : index
    %c0_217 = arith.constant 0 : index
    %c0_218 = arith.constant 0 : index
    %214 = vector.load %arg10[%c1_216, %c0_217, %c0_218] : memref<6x96x64xf32, #tpu.memory_space<vmem>>, vector<1x96x64xf32>
    %215 = vector.shape_cast %214 : vector<1x96x64xf32> to vector<96x64xf32>
    %cst_219 = arith.constant dense<0.000000e+00> : vector<1x64xf32>
    %216 = tpu.matmul %213, %215, %cst_219 {dimension_numbers = #tpu.dot_dimension_numbers<[1], [0], [0], [1], [0, 0, 1, 1], [], []>} : vector<1x96xf32>, vector<96x64xf32>, vector<1x64xf32> -> vector<1x64xf32>
    %217 = arith.addf %212, %216 : vector<1x64xf32>
    %218 = vector.extract_strided_slice %206 {offsets = [2, 0], sizes = [1, 96], strides = [1, 1]} : vector<6x96xf32> to vector<1x96xf32>
    %c2_220 = arith.constant 2 : index
    %c0_221 = arith.constant 0 : index
    %c0_222 = arith.constant 0 : index
    %219 = vector.load %arg10[%c2_220, %c0_221, %c0_222] : memref<6x96x64xf32, #tpu.memory_space<vmem>>, vector<1x96x64xf32>
    %220 = vector.shape_cast %219 : vector<1x96x64xf32> to vector<96x64xf32>
    %cst_223 = arith.constant dense<0.000000e+00> : vector<1x64xf32>
    %221 = tpu.matmul %218, %220, %cst_223 {dimension_numbers = #tpu.dot_dimension_numbers<[1], [0], [0], [1], [0, 0, 1, 1], [], []>} : vector<1x96xf32>, vector<96x64xf32>, vector<1x64xf32> -> vector<1x64xf32>
    %222 = arith.addf %217, %221 : vector<1x64xf32>
    %223 = vector.extract_strided_slice %206 {offsets = [3, 0], sizes = [1, 96], strides = [1, 1]} : vector<6x96xf32> to vector<1x96xf32>
    %c3_224 = arith.constant 3 : index
    %c0_225 = arith.constant 0 : index
    %c0_226 = arith.constant 0 : index
    %224 = vector.load %arg10[%c3_224, %c0_225, %c0_226] : memref<6x96x64xf32, #tpu.memory_space<vmem>>, vector<1x96x64xf32>
    %225 = vector.shape_cast %224 : vector<1x96x64xf32> to vector<96x64xf32>
    %cst_227 = arith.constant dense<0.000000e+00> : vector<1x64xf32>
    %226 = tpu.matmul %223, %225, %cst_227 {dimension_numbers = #tpu.dot_dimension_numbers<[1], [0], [0], [1], [0, 0, 1, 1], [], []>} : vector<1x96xf32>, vector<96x64xf32>, vector<1x64xf32> -> vector<1x64xf32>
    %227 = arith.addf %222, %226 : vector<1x64xf32>
    %228 = vector.extract_strided_slice %206 {offsets = [4, 0], sizes = [1, 96], strides = [1, 1]} : vector<6x96xf32> to vector<1x96xf32>
    %c4_228 = arith.constant 4 : index
    %c0_229 = arith.constant 0 : index
    %c0_230 = arith.constant 0 : index
    %229 = vector.load %arg10[%c4_228, %c0_229, %c0_230] : memref<6x96x64xf32, #tpu.memory_space<vmem>>, vector<1x96x64xf32>
    %230 = vector.shape_cast %229 : vector<1x96x64xf32> to vector<96x64xf32>
    %cst_231 = arith.constant dense<0.000000e+00> : vector<1x64xf32>
    %231 = tpu.matmul %228, %230, %cst_231 {dimension_numbers = #tpu.dot_dimension_numbers<[1], [0], [0], [1], [0, 0, 1, 1], [], []>} : vector<1x96xf32>, vector<96x64xf32>, vector<1x64xf32> -> vector<1x64xf32>
    %232 = arith.addf %227, %231 : vector<1x64xf32>
    %233 = vector.extract_strided_slice %206 {offsets = [5, 0], sizes = [1, 96], strides = [1, 1]} : vector<6x96xf32> to vector<1x96xf32>
    %c5 = arith.constant 5 : index
    %c0_232 = arith.constant 0 : index
    %c0_233 = arith.constant 0 : index
    %234 = vector.load %arg10[%c5, %c0_232, %c0_233] : memref<6x96x64xf32, #tpu.memory_space<vmem>>, vector<1x96x64xf32>
    %235 = vector.shape_cast %234 : vector<1x96x64xf32> to vector<96x64xf32>
    %cst_234 = arith.constant dense<0.000000e+00> : vector<1x64xf32>
    %236 = tpu.matmul %233, %235, %cst_234 {dimension_numbers = #tpu.dot_dimension_numbers<[1], [0], [0], [1], [0, 0, 1, 1], [], []>} : vector<1x96xf32>, vector<96x64xf32>, vector<1x64xf32> -> vector<1x64xf32>
    %237 = arith.addf %232, %236 : vector<1x64xf32>
    %cst_235 = arith.constant 0.000000e+00 : f32
    %238 = vector.broadcast %cst_235 : f32 to vector<1x64xf32>
    %239 = arith.maximumf %237, %238 : vector<1x64xf32>
    %c0_236 = arith.constant 0 : index
    %c0_237 = arith.constant 0 : index
    %240 = vector.load %arg12[%c0_236, %c0_237] : memref<64x32xf32, #tpu.memory_space<vmem>>, vector<64x32xf32>
    %cst_238 = arith.constant dense<0.000000e+00> : vector<1x32xf32>
    %241 = tpu.matmul %239, %240, %cst_238 {dimension_numbers = #tpu.dot_dimension_numbers<[1], [0], [0], [1], [0, 0, 1, 1], [], []>} : vector<1x64xf32>, vector<64x32xf32>, vector<1x32xf32> -> vector<1x32xf32>
    %c0_239 = arith.constant 0 : index
    %c0_240 = arith.constant 0 : index
    %242 = vector.load %arg13[%c0_239, %c0_240] : memref<1x32xf32, #tpu.memory_space<vmem>>, vector<1x32xf32>
    %243 = arith.addf %241, %242 : vector<1x32xf32>
    %cst_241 = arith.constant 0.000000e+00 : f32
    %244 = vector.broadcast %cst_241 : f32 to vector<1x32xf32>
    %245 = arith.maximumf %243, %244 : vector<1x32xf32>
    %c0_242 = arith.constant 0 : index
    %c0_243 = arith.constant 0 : index
    %246 = vector.load %arg14[%c0_242, %c0_243] : memref<32x10xf32, #tpu.memory_space<vmem>>, vector<32x10xf32>
    %cst_244 = arith.constant dense<0.000000e+00> : vector<1x10xf32>
    %247 = tpu.matmul %245, %246, %cst_244 {dimension_numbers = #tpu.dot_dimension_numbers<[1], [0], [0], [1], [0, 0, 1, 1], [], []>} : vector<1x32xf32>, vector<32x10xf32>, vector<1x10xf32> -> vector<1x10xf32>
    %c0_245 = arith.constant 0 : index
    %c0_246 = arith.constant 0 : index
    %248 = vector.load %arg15[%c0_245, %c0_246] : memref<1x10xf32, #tpu.memory_space<vmem>>, vector<1x10xf32>
    %249 = arith.addf %247, %248 : vector<1x10xf32>
    %cst_247 = arith.constant 0.000000e+00 : f32
    %250 = vector.broadcast %cst_247 : f32 to vector<1x10xf32>
    %251 = arith.subf %250, %249 : vector<1x10xf32>
    %252 = math.exp %251 : vector<1x10xf32>
    %cst_248 = arith.constant 1.000000e+00 : f32
    %253 = vector.broadcast %cst_248 : f32 to vector<1x10xf32>
    %254 = arith.addf %253, %252 : vector<1x10xf32>
    %cst_249 = arith.constant 1.000000e+00 : f32
    %255 = vector.broadcast %cst_249 : f32 to vector<1x10xf32>
    %256 = arith.divf %255, %254 : vector<1x10xf32>
    %c0_250 = arith.constant 0 : index
    %c0_251 = arith.constant 0 : index
    %c0_252 = arith.constant 0 : index
    %257 = vector.load %arg16[%c0_250, %c0_251, %c0_252] : memref<1x1x10xf32, #tpu.memory_space<vmem>>, vector<1x1x10xf32>
    %258 = vector.shape_cast %257 : vector<1x1x10xf32> to vector<1x10xf32>
    %259 = vector.shape_cast %256 : vector<1x10xf32> to vector<1x1x10xf32>
    tpu.vector_store %arg16[%c0_250, %c0_251, %c0_252], %259 {strides = array<i32>} : memref<1x1x10xf32, #tpu.memory_space<vmem>>, vector<1x1x10xf32>,
    return
  }
  func.func @transform_0(%arg0: i32) -> (i32, i32, i32, i32) {
    %c0_i32 = arith.constant 0 : i32
    %c0_i32_0 = arith.constant 0 : i32
    %c0_i32_1 = arith.constant 0 : i32
    %c0_i32_2 = arith.constant 0 : i32
    return %arg0, %c0_i32, %c0_i32_0, %c0_i32_1 : i32, i32, i32, i32
  }
  func.func @transform_1(%arg0: i32) -> (i32, i32) {
    %c0_i32 = arith.constant 0 : i32
    %c0_i32_0 = arith.constant 0 : i32
    %c0_i32_1 = arith.constant 0 : i32
    return %c0_i32, %c0_i32_0 : i32, i32
  }
  func.func @transform_2(%arg0: i32) -> (i32, i32) {
    %c0_i32 = arith.constant 0 : i32
    %c0_i32_0 = arith.constant 0 : i32
    %c0_i32_1 = arith.constant 0 : i32
    return %c0_i32, %c0_i32_0 : i32, i32
  }
  func.func @transform_3(%arg0: i32) -> (i32, i32) {
    %c0_i32 = arith.constant 0 : i32
    %c0_i32_0 = arith.constant 0 : i32
    %c0_i32_1 = arith.constant 0 : i32
    return %c0_i32, %c0_i32_0 : i32, i32
  }
  func.func @transform_4(%arg0: i32) -> (i32, i32) {
    %c0_i32 = arith.constant 0 : i32
    %c0_i32_0 = arith.constant 0 : i32
    %c0_i32_1 = arith.constant 0 : i32
    return %c0_i32, %c0_i32_0 : i32, i32
  }
  func.func @transform_5(%arg0: i32) -> (i32, i32) {
    %c0_i32 = arith.constant 0 : i32
    %c0_i32_0 = arith.constant 0 : i32
    %c0_i32_1 = arith.constant 0 : i32
    return %c0_i32, %c0_i32_0 : i32, i32
  }
  func.func @transform_6(%arg0: i32) -> (i32, i32) {
    %c0_i32 = arith.constant 0 : i32
    %c0_i32_0 = arith.constant 0 : i32
    %c0_i32_1 = arith.constant 0 : i32
    return %c0_i32, %c0_i32_0 : i32, i32
  }
  func.func @transform_7(%arg0: i32) -> (i32, i32) {
    %c0_i32 = arith.constant 0 : i32
    %c0_i32_0 = arith.constant 0 : i32
    %c0_i32_1 = arith.constant 0 : i32
    return %c0_i32, %c0_i32_0 : i32, i32
  }
  func.func @transform_8(%arg0: i32) -> (i32, i32) {
    %c0_i32 = arith.constant 0 : i32
    %c0_i32_0 = arith.constant 0 : i32
    %c0_i32_1 = arith.constant 0 : i32
    return %c0_i32, %c0_i32_0 : i32, i32
  }
  func.func @transform_9(%arg0: i32) -> (i32, i32, i32) {
    %c0_i32 = arith.constant 0 : i32
    %c0_i32_0 = arith.constant 0 : i32
    %c0_i32_1 = arith.constant 0 : i32
    %c0_i32_2 = arith.constant 0 : i32
    return %c0_i32, %c0_i32_0, %c0_i32_1 : i32, i32, i32
  }
  func.func @transform_10(%arg0: i32) -> (i32, i32) {
    %c0_i32 = arith.constant 0 : i32
    %c0_i32_0 = arith.constant 0 : i32
    %c0_i32_1 = arith.constant 0 : i32
    return %c0_i32, %c0_i32_0 : i32, i32
  }
  func.func @transform_11(%arg0: i32) -> (i32, i32) {
    %c0_i32 = arith.constant 0 : i32
    %c0_i32_0 = arith.constant 0 : i32
    %c0_i32_1 = arith.constant 0 : i32
    return %c0_i32, %c0_i32_0 : i32, i32
  }
  func.func @transform_12(%arg0: i32) -> (i32, i32) {
    %c0_i32 = arith.constant 0 : i32
    %c0_i32_0 = arith.constant 0 : i32
    %c0_i32_1 = arith.constant 0 : i32
    return %c0_i32, %c0_i32_0 : i32, i32
  }
  func.func @transform_13(%arg0: i32) -> (i32, i32) {
    %c0_i32 = arith.constant 0 : i32
    %c0_i32_0 = arith.constant 0 : i32
    %c0_i32_1 = arith.constant 0 : i32
    return %c0_i32, %c0_i32_0 : i32, i32
  }
  func.func @transform_14(%arg0: i32) -> (i32, i32) {
    %c0_i32 = arith.constant 0 : i32
    %c0_i32_0 = arith.constant 0 : i32
    %c0_i32_1 = arith.constant 0 : i32
    return %c0_i32, %c0_i32_0 : i32, i32
  }
  func.func @transform_15(%arg0: i32) -> (i32, i32, i32) {
    %c0_i32 = arith.constant 0 : i32
    %c0_i32_0 = arith.constant 0 : i32
    %c0_i32_1 = arith.constant 0 : i32
    return %arg0, %c0_i32, %c0_i32_0 : i32, i32, i32
  }
}

</mosaic_0001>

<llo_original>
// kernel: net_forward.1
$region0: #{net_forward.1}
  #allocation0 [shape = 'u32[]', space=smem, size = 0x4, offset = 0x4, fixed_abs, tag = 'smem constant byte address 0x4 - core index']
  #allocation1 [shape = 'u32[144,128]{1,0:T(1,128)}', space=vmem, size = 0x12000, scoped, tag = 'internal scratch']
  #allocation2 [shape = 'f32[28,700]{1,0:T(8,128)}', space=vmem, size = 0x18000, scoped, tag = 'scratch operand']
  #allocation3 [shape = 'f32[12,648]{1,0:T(8,128)}', space=vmem, size = 0xc000, scoped, tag = 'scratch operand']
  %s0 = inlined_call_operand.vmem [shape: f32[2,1,32,32], index: 0, kind: input, shape index: {}]
  %s1 = inlined_call_operand.vmem [shape: f32[700,168], index: 1, kind: input, shape index: {}]
  %s2 = inlined_call_operand.vmem [shape: f32[1,168], index: 2, kind: input, shape index: {}]
  %s3 = inlined_call_operand.vmem [shape: f32[14,28], index: 3, kind: input, shape index: {}]
  %s4 = inlined_call_operand.vmem [shape: f32[168,84], index: 4, kind: input, shape index: {}]
  %s5 = inlined_call_operand.vmem [shape: f32[648,192], index: 5, kind: input, shape index: {}]
  %s6 = inlined_call_operand.vmem [shape: f32[1,192], index: 6, kind: input, shape index: {}]
  %s7 = inlined_call_operand.vmem [shape: f32[6,12], index: 7, kind: input, shape index: {}]
  %s8 = inlined_call_operand.vmem [shape: f32[192,96], index: 8, kind: input, shape index: {}]
  %s9 = inlined_call_operand.vmem [shape: f32[6,96,64], index: 9, kind: input, shape index: {}]
  %s10 = inlined_call_operand.vmem [shape: f32[1,64], index: 10, kind: input, shape index: {}]
  %s11 = inlined_call_operand.vmem [shape: f32[64,32], index: 11, kind: input, shape index: {}]
  %s12 = inlined_call_operand.vmem [shape: f32[1,32], index: 12, kind: input, shape index: {}]
  %s13 = inlined_call_operand.vmem [shape: f32[32,10], index: 13, kind: input, shape index: {}]
  %s14 = inlined_call_operand.vmem [shape: f32[1,10], index: 14, kind: input, shape index: {}]
  %s15 = inlined_call_operand.hbm [shape: f32[2,1,10], index: 15, kind: output, shape index: {}]
  %s16 = sld [smem:[#allocation0]]
  $region93: #{net_forward.1} parent=0
    _
  %s18 = ssub.s32 1, %s16
  %s19 = scalar_select 0, %s18, %s16
  $region1: #{net_forward.1} parent=0
    #allocation4 [shape = 'u8[1024]{0}', space=vmem, size = 0x400, scoped, tag = 'output window, operand 0']
    #allocation5 [shape = 's32[2]{0}', space=sflag, size = 0x8, scoped, tag = 'scoped memory for net_forward.1']
    %20 = vsyncpa [#allocation5], 0
    %s21 = scalar_lea.sflag [#allocation5], 1
    %22 = vsyncpa %s21, 0
    loop: start=0, step=1, limit=4
    $region2: #{net_forward.1} parent=1 // loop_pre_header
      _
    $region3: #{net_forward.1} parent=1 // loop_header
      %s24 = sphi 0, %s28
      %p25 = scmp.ge.s32.totalorder %s24, 4
      %s34 = sphi 0, %s36
      %s37 = sphi 0, %s34
      %s38 = sphi 0, %s37
      %s54 = sphi 0, %s38
      %s58 = sphi 0, %s58
      %s60 = sphi 0, %s58
      %s61 = sphi 0, %s60
      %s75 = sphi 0, %s61
      %s79 = sphi 0, %s79
      %s81 = sphi 0, %s79
      %s82 = sphi 0, %s81
      %s96 = sphi 0, %s82
      %s100 = sphi 0, %s100
      %s102 = sphi 0, %s100
      %s103 = sphi 0, %s102
      %s117 = sphi 0, %s103
      %s121 = sphi 0, %s121
      %s123 = sphi 0, %s121
      %s124 = sphi 0, %s123
      %s138 = sphi 0, %s124
      %s142 = sphi 0, %s142
      %s144 = sphi 0, %s142
      %s145 = sphi 0, %s144
      %s159 = sphi 0, %s145
      %s163 = sphi 0, %s163
      %s165 = sphi 0, %s163
      %s166 = sphi 0, %s165
      %s180 = sphi 0, %s166
      %s184 = sphi 0, %s184
      %s186 = sphi 0, %s184
      %s187 = sphi 0, %s186
      %s201 = sphi 0, %s187
      %s205 = sphi 0, %s205
      %s207 = sphi 0, %s205
      %s208 = sphi 0, %s207
      %s222 = sphi 0, %s208
      %s226 = sphi 0, %s226
      %s228 = sphi 0, %s226
      %s229 = sphi 0, %s228
      %s243 = sphi 0, %s229
      %s247 = sphi 0, %s247
      %s249 = sphi 0, %s247
      %s250 = sphi 0, %s249
      %s264 = sphi 0, %s250
      %s268 = sphi 0, %s268
      %s270 = sphi 0, %s268
      %s271 = sphi 0, %s270
      %s285 = sphi 0, %s271
      %s289 = sphi 0, %s289
      %s291 = sphi 0, %s289
      %s292 = sphi 0, %s291
      %s306 = sphi 0, %s292
      %s310 = sphi 0, %s310
      %s312 = sphi 0, %s310
      %s313 = sphi 0, %s312
      %s327 = sphi 0, %s313
      %s331 = sphi 0, %s331
      %s333 = sphi 0, %s331
      %s334 = sphi 0, %s333
      %s348 = sphi 0, %s334
      %s354 = sphi 0, %s356
      %s357 = sphi 0, %s354
      %s358 = sphi 0, %s357
      %s374 = sphi 0, %s358
    $region4: #{net_forward.1} parent=1 // loop_header_branch
      %27 = sbr.rel (%p25) target = $region8
    $region5: #{net_forward.1} parent=1 // loop_body
      %s29 = ssub.s32 %s24, 1
      %s30 = ssub.s32 %s24, 2
      %s31 = sadd.s32 %s24, 1
      %s32 = ssub.s32 %s24, %s31
      %p33 = scmp.eq.s32.totalorder %s32, 0
      %s35 = sadd.s32 %s34, 1
      %s36 = scalar_select %p33, %s34, %s35
      %p39 = pneg %p33
      %p40 = scmp.eq.s32.totalorder %s24, 1
      %p41 = por %p39, %p40
      %p42 = scmp.ne.s32.totalorder %s34, %s37
      %p43 = scmp.eq.s32.totalorder %s24, 0
      %p44 = por %p42, %p43
      %p45 = scmp.ne.s32.totalorder %s34, %s37
      %p46 = scmp.eq.s32.totalorder %s29, 1
      %p47 = por %p45, %p46
      %p48 = scmp.ne.s32.totalorder %s37, %s38
      %p49 = scmp.eq.s32.totalorder %s29, 0
      %p50 = por %p48, %p49
      %p51 = scmp.ne.s32.totalorder %s37, %s38
      %p52 = scmp.eq.s32.totalorder %s30, 1
      %p53 = por %p51, %p52
      %p55 = scmp.ne.s32.totalorder %s38, %s54
      %p56 = scmp.eq.s32.totalorder %s30, 0
      %p57 = por %p55, %p56
      %s59 = sadd.s32 %s58, 1
      %p62 = scmp.eq.s32.totalorder %s24, 1
      %p63 = scmp.ne.s32.totalorder %s58, %s60
      %p64 = scmp.eq.s32.totalorder %s24, 0
      %p65 = por %p63, %p64
      %p66 = scmp.ne.s32.totalorder %s58, %s60
      %p67 = scmp.eq.s32.totalorder %s29, 1
      %p68 = por %p66, %p67
      %p69 = scmp.ne.s32.totalorder %s60, %s61
      %p70 = scmp.eq.s32.totalorder %s29, 0
      %p71 = por %p69, %p70
      %p72 = scmp.ne.s32.totalorder %s60, %s61
      %p73 = scmp.eq.s32.totalorder %s30, 1
      %p74 = por %p72, %p73
      %p76 = scmp.ne.s32.totalorder %s61, %s75
      %p77 = scmp.eq.s32.totalorder %s30, 0
      %p78 = por %p76, %p77
      %s80 = sadd.s32 %s79, 1
      %p83 = scmp.eq.s32.totalorder %s24, 1
      %p84 = scmp.ne.s32.totalorder %s79, %s81
      %p85 = scmp.eq.s32.totalorder %s24, 0
      %p86 = por %p84, %p85
      %p87 = scmp.ne.s32.totalorder %s79, %s81
      %p88 = scmp.eq.s32.totalorder %s29, 1
      %p89 = por %p87, %p88
      %p90 = scmp.ne.s32.totalorder %s81, %s82
      %p91 = scmp.eq.s32.totalorder %s29, 0
      %p92 = por %p90, %p91
      %p93 = scmp.ne.s32.totalorder %s81, %s82
      %p94 = scmp.eq.s32.totalorder %s30, 1
      %p95 = por %p93, %p94
      %p97 = scmp.ne.s32.totalorder %s82, %s96
      %p98 = scmp.eq.s32.totalorder %s30, 0
      %p99 = por %p97, %p98
      %s101 = sadd.s32 %s100, 1
      %p104 = scmp.eq.s32.totalorder %s24, 1
      %p105 = scmp.ne.s32.totalorder %s100, %s102
      %p106 = scmp.eq.s32.totalorder %s24, 0
      %p107 = por %p105, %p106
      %p108 = scmp.ne.s32.totalorder %s100, %s102
      %p109 = scmp.eq.s32.totalorder %s29, 1
      %p110 = por %p108, %p109
      %p111 = scmp.ne.s32.totalorder %s102, %s103
      %p112 = scmp.eq.s32.totalorder %s29, 0
      %p113 = por %p111, %p112
      %p114 = scmp.ne.s32.totalorder %s102, %s103
      %p115 = scmp.eq.s32.totalorder %s30, 1
      %p116 = por %p114, %p115
      %p118 = scmp.ne.s32.totalorder %s103, %s117
      %p119 = scmp.eq.s32.totalorder %s30, 0
      %p120 = por %p118, %p119
      %s122 = sadd.s32 %s121, 1
      %p125 = scmp.eq.s32.totalorder %s24, 1
      %p126 = scmp.ne.s32.totalorder %s121, %s123
      %p127 = scmp.eq.s32.totalorder %s24, 0
      %p128 = por %p126, %p127
      %p129 = scmp.ne.s32.totalorder %s121, %s123
      %p130 = scmp.eq.s32.totalorder %s29, 1
      %p131 = por %p129, %p130
      %p132 = scmp.ne.s32.totalorder %s123, %s124
      %p133 = scmp.eq.s32.totalorder %s29, 0
      %p134 = por %p132, %p133
      %p135 = scmp.ne.s32.totalorder %s123, %s124
      %p136 = scmp.eq.s32.totalorder %s30, 1
      %p137 = por %p135, %p136
      %p139 = scmp.ne.s32.totalorder %s124, %s138
      %p140 = scmp.eq.s32.totalorder %s30, 0
      %p141 = por %p139, %p140
      %s143 = sadd.s32 %s142, 1
      %p146 = scmp.eq.s32.totalorder %s24, 1
      %p147 = scmp.ne.s32.totalorder %s142, %s144
      %p148 = scmp.eq.s32.totalorder %s24, 0
      %p149 = por %p147, %p148
      %p150 = scmp.ne.s32.totalorder %s142, %s144
      %p151 = scmp.eq.s32.totalorder %s29, 1
      %p152 = por %p150, %p151
      %p153 = scmp.ne.s32.totalorder %s144, %s145
      %p154 = scmp.eq.s32.totalorder %s29, 0
      %p155 = por %p153, %p154
      %p156 = scmp.ne.s32.totalorder %s144, %s145
      %p157 = scmp.eq.s32.totalorder %s30, 1
      %p158 = por %p156, %p157
      %p160 = scmp.ne.s32.totalorder %s145, %s159
      %p161 = scmp.eq.s32.totalorder %s30, 0
      %p162 = por %p160, %p161
      %s164 = sadd.s32 %s163, 1
      %p167 = scmp.eq.s32.totalorder %s24, 1
      %p168 = scmp.ne.s32.totalorder %s163, %s165
      %p169 = scmp.eq.s32.totalorder %s24, 0
      %p170 = por %p168, %p169
      %p171 = scmp.ne.s32.totalorder %s163, %s165
      %p172 = scmp.eq.s32.totalorder %s29, 1
      %p173 = por %p171, %p172
      %p174 = scmp.ne.s32.totalorder %s165, %s166
      %p175 = scmp.eq.s32.totalorder %s29, 0
      %p176 = por %p174, %p175
      %p177 = scmp.ne.s32.totalorder %s165, %s166
      %p178 = scmp.eq.s32.totalorder %s30, 1
      %p179 = por %p177, %p178
      %p181 = scmp.ne.s32.totalorder %s166, %s180
      %p182 = scmp.eq.s32.totalorder %s30, 0
      %p183 = por %p181, %p182
      %s185 = sadd.s32 %s184, 1
      %p188 = scmp.eq.s32.totalorder %s24, 1
      %p189 = scmp.ne.s32.totalorder %s184, %s186
      %p190 = scmp.eq.s32.totalorder %s24, 0
      %p191 = por %p189, %p190
      %p192 = scmp.ne.s32.totalorder %s184, %s186
      %p193 = scmp.eq.s32.totalorder %s29, 1
      %p194 = por %p192, %p193
      %p195 = scmp.ne.s32.totalorder %s186, %s187
      %p196 = scmp.eq.s32.totalorder %s29, 0
      %p197 = por %p195, %p196
      %p198 = scmp.ne.s32.totalorder %s186, %s187
      %p199 = scmp.eq.s32.totalorder %s30, 1
      %p200 = por %p198, %p199
      %p202 = scmp.ne.s32.totalorder %s187, %s201
      %p203 = scmp.eq.s32.totalorder %s30, 0
      %p204 = por %p202, %p203
      %s206 = sadd.s32 %s205, 1
      %p209 = scmp.eq.s32.totalorder %s24, 1
      %p210 = scmp.ne.s32.totalorder %s205, %s207
      %p211 = scmp.eq.s32.totalorder %s24, 0
      %p212 = por %p210, %p211
      %p213 = scmp.ne.s32.totalorder %s205, %s207
      %p214 = scmp.eq.s32.totalorder %s29, 1
      %p215 = por %p213, %p214
      %p216 = scmp.ne.s32.totalorder %s207, %s208
      %p217 = scmp.eq.s32.totalorder %s29, 0
      %p218 = por %p216, %p217
      %p219 = scmp.ne.s32.totalorder %s207, %s208
      %p220 = scmp.eq.s32.totalorder %s30, 1
      %p221 = por %p219, %p220
      %p223 = scmp.ne.s32.totalorder %s208, %s222
      %p224 = scmp.eq.s32.totalorder %s30, 0
      %p225 = por %p223, %p224
      %s227 = sadd.s32 %s226, 1
      %p230 = scmp.eq.s32.totalorder %s24, 1
      %p231 = scmp.ne.s32.totalorder %s226, %s228
      %p232 = scmp.eq.s32.totalorder %s24, 0
      %p233 = por %p231, %p232
      %p234 = scmp.ne.s32.totalorder %s226, %s228
      %p235 = scmp.eq.s32.totalorder %s29, 1
      %p236 = por %p234, %p235
      %p237 = scmp.ne.s32.totalorder %s228, %s229
      %p238 = scmp.eq.s32.totalorder %s29, 0
      %p239 = por %p237, %p238
      %p240 = scmp.ne.s32.totalorder %s228, %s229
      %p241 = scmp.eq.s32.totalorder %s30, 1
      %p242 = por %p240, %p241
      %p244 = scmp.ne.s32.totalorder %s229, %s243
      %p245 = scmp.eq.s32.totalorder %s30, 0
      %p246 = por %p244, %p245
      %s248 = sadd.s32 %s247, 1
      %p251 = scmp.eq.s32.totalorder %s24, 1
      %p252 = scmp.ne.s32.totalorder %s247, %s249
      %p253 = scmp.eq.s32.totalorder %s24, 0
      %p254 = por %p252, %p253
      %p255 = scmp.ne.s32.totalorder %s247, %s249
      %p256 = scmp.eq.s32.totalorder %s29, 1
      %p257 = por %p255, %p256
      %p258 = scmp.ne.s32.totalorder %s249, %s250
      %p259 = scmp.eq.s32.totalorder %s29, 0
      %p260 = por %p258, %p259
      %p261 = scmp.ne.s32.totalorder %s249, %s250
      %p262 = scmp.eq.s32.totalorder %s30, 1
      %p263 = por %p261, %p262
      %p265 = scmp.ne.s32.totalorder %s250, %s264
      %p266 = scmp.eq.s32.totalorder %s30, 0
      %p267 = por %p265, %p266
      %s269 = sadd.s32 %s268, 1
      %p272 = scmp.eq.s32.totalorder %s24, 1
      %p273 = scmp.ne.s32.totalorder %s268, %s270
      %p274 = scmp.eq.s32.totalorder %s24, 0
      %p275 = por %p273, %p274
      %p276 = scmp.ne.s32.totalorder %s268, %s270
      %p277 = scmp.eq.s32.totalorder %s29, 1
      %p278 = por %p276, %p277
      %p279 = scmp.ne.s32.totalorder %s270, %s271
      %p280 = scmp.eq.s32.totalorder %s29, 0
      %p281 = por %p279, %p280
      %p282 = scmp.ne.s32.totalorder %s270, %s271
      %p283 = scmp.eq.s32.totalorder %s30, 1
      %p284 = por %p282, %p283
      %p286 = scmp.ne.s32.totalorder %s271, %s285
      %p287 = scmp.eq.s32.totalorder %s30, 0
      %p288 = por %p286, %p287
      %s290 = sadd.s32 %s289, 1
      %p293 = scmp.eq.s32.totalorder %s24, 1
      %p294 = scmp.ne.s32.totalorder %s289, %s291
      %p295 = scmp.eq.s32.totalorder %s24, 0
      %p296 = por %p294, %p295
      %p297 = scmp.ne.s32.totalorder %s289, %s291
      %p298 = scmp.eq.s32.totalorder %s29, 1
      %p299 = por %p297, %p298
      %p300 = scmp.ne.s32.totalorder %s291, %s292
      %p301 = scmp.eq.s32.totalorder %s29, 0
      %p302 = por %p300, %p301
      %p303 = scmp.ne.s32.totalorder %s291, %s292
      %p304 = scmp.eq.s32.totalorder %s30, 1
      %p305 = por %p303, %p304
      %p307 = scmp.ne.s32.totalorder %s292, %s306
      %p308 = scmp.eq.s32.totalorder %s30, 0
      %p309 = por %p307, %p308
      %s311 = sadd.s32 %s310, 1
      %p314 = scmp.eq.s32.totalorder %s24, 1
      %p315 = scmp.ne.s32.totalorder %s310, %s312
      %p316 = scmp.eq.s32.totalorder %s24, 0
      %p317 = por %p315, %p316
      %p318 = scmp.ne.s32.totalorder %s310, %s312
      %p319 = scmp.eq.s32.totalorder %s29, 1
      %p320 = por %p318, %p319
      %p321 = scmp.ne.s32.totalorder %s312, %s313
      %p322 = scmp.eq.s32.totalorder %s29, 0
      %p323 = por %p321, %p322
      %p324 = scmp.ne.s32.totalorder %s312, %s313
      %p325 = scmp.eq.s32.totalorder %s30, 1
      %p326 = por %p324, %p325
      %p328 = scmp.ne.s32.totalorder %s313, %s327
      %p329 = scmp.eq.s32.totalorder %s30, 0
      %p330 = por %p328, %p329
      %s332 = sadd.s32 %s331, 1
      %p335 = scmp.eq.s32.totalorder %s24, 1
      %p336 = scmp.ne.s32.totalorder %s331, %s333
      %p337 = scmp.eq.s32.totalorder %s24, 0
      %p338 = por %p336, %p337
      %p339 = scmp.ne.s32.totalorder %s331, %s333
      %p340 = scmp.eq.s32.totalorder %s29, 1
      %p341 = por %p339, %p340
      %p342 = scmp.ne.s32.totalorder %s333, %s334
      %p343 = scmp.eq.s32.totalorder %s29, 0
      %p344 = por %p342, %p343
      %p345 = scmp.ne.s32.totalorder %s333, %s334
      %p346 = scmp.eq.s32.totalorder %s30, 1
      %p347 = por %p345, %p346
      %p349 = scmp.ne.s32.totalorder %s334, %s348
      %p350 = scmp.eq.s32.totalorder %s30, 0
      %p351 = por %p349, %p350
      %s352 = ssub.s32 %s24, %s31
      %p353 = scmp.eq.s32.totalorder %s352, 0
      %s355 = sadd.s32 %s354, 1
      %s356 = scalar_select %p353, %s354, %s355
      %p359 = pneg %p353
      %p360 = scmp.eq.s32.totalorder %s24, 1
      %p361 = por %p359, %p360
      %p362 = scmp.ne.s32.totalorder %s354, %s357
      %p363 = scmp.eq.s32.totalorder %s24, 0
      %p364 = por %p362, %p363
      %p365 = scmp.ne.s32.totalorder %s354, %s357
      %p366 = scmp.eq.s32.totalorder %s29, 1
      %p367 = por %p365, %p366
      %p368 = scmp.ne.s32.totalorder %s357, %s358
      %p369 = scmp.eq.s32.totalorder %s29, 0
      %p370 = por %p368, %p369
      %p371 = scmp.ne.s32.totalorder %s357, %s358
      %p372 = scmp.eq.s32.totalorder %s30, 1
      %p373 = por %p371, %p372
      %p375 = scmp.ne.s32.totalorder %s358, %s374
      %p376 = scmp.eq.s32.totalorder %s30, 0
      %p377 = por %p375, %p376
      %p378 = scmp.le.s32.totalorder 1, %s24
      %p379 = scmp.lt.s32.totalorder %s24, 3
      %p380 = pnand %p378, %p379
      %p381 = pneg %p380
      // Predicated region
      $region9: #{net_forward.1} parent=5 // pred_check
        _
      $region10: #{net_forward.1} parent=5 // pred_check_branch
        %383 = sbr.rel (%p380) target = $region12
      $region11: #{net_forward.1} parent=5 // pred_region
        %s384 = ssub.s32 %s24, 1
        // Predicated region
        $region13: #{net_forward.1} parent=11 // pred_check
          %p385 = pneg %p71
        $region14: #{net_forward.1} parent=11 // pred_check_branch
          %387 = sbr.rel (%p385) target = $region16
        $region15: #{net_forward.1} parent=11 // pred_region
          _
        $region16: #{net_forward.1} parent=11 // pred_fallthru
          _
        // Predicated region
        $region17: #{net_forward.1} parent=11 // pred_check
          %p388 = pneg %p92
        $region18: #{net_forward.1} parent=11 // pred_check_branch
          %390 = sbr.rel (%p388) target = $region20
        $region19: #{net_forward.1} parent=11 // pred_region
          _
        $region20: #{net_forward.1} parent=11 // pred_fallthru
          _
        // Predicated region
        $region21: #{net_forward.1} parent=11 // pred_check
          %p391 = pneg %p113
        $region22: #{net_forward.1} parent=11 // pred_check_branch
          %393 = sbr.rel (%p391) target = $region24
        $region23: #{net_forward.1} parent=11 // pred_region
          _
        $region24: #{net_forward.1} parent=11 // pred_fallthru
          _
        // Predicated region
        $region25: #{net_forward.1} parent=11 // pred_check
          %p394 = pneg %p134
        $region26: #{net_forward.1} parent=11 // pred_check_branch
          %396 = sbr.rel (%p394) target = $region28
        $region27: #{net_forward.1} parent=11 // pred_region
          _
        $region28: #{net_forward.1} parent=11 // pred_fallthru
          _
        // Predicated region
        $region29: #{net_forward.1} parent=11 // pred_check
          %p397 = pneg %p155
        $region30: #{net_forward.1} parent=11 // pred_check_branch
          %399 = sbr.rel (%p397) target = $region32
        $region31: #{net_forward.1} parent=11 // pred_region
          _
        $region32: #{net_forward.1} parent=11 // pred_fallthru
          _
        // Predicated region
        $region33: #{net_forward.1} parent=11 // pred_check
          %p400 = pneg %p176
        $region34: #{net_forward.1} parent=11 // pred_check_branch
          %402 = sbr.rel (%p400) target = $region36
        $region35: #{net_forward.1} parent=11 // pred_region
          _
        $region36: #{net_forward.1} parent=11 // pred_fallthru
          _
        // Predicated region
        $region37: #{net_forward.1} parent=11 // pred_check
          %p403 = pneg %p197
        $region38: #{net_forward.1} parent=11 // pred_check_branch
          %405 = sbr.rel (%p403) target = $region40
        $region39: #{net_forward.1} parent=11 // pred_region
          _
        $region40: #{net_forward.1} parent=11 // pred_fallthru
          _
        // Predicated region
        $region41: #{net_forward.1} parent=11 // pred_check
          %p406 = pneg %p218
        $region42: #{net_forward.1} parent=11 // pred_check_branch
          %408 = sbr.rel (%p406) target = $region44
        $region43: #{net_forward.1} parent=11 // pred_region
          _
        $region44: #{net_forward.1} parent=11 // pred_fallthru
          _
        // Predicated region
        $region45: #{net_forward.1} parent=11 // pred_check
          %p409 = pneg %p239
        $region46: #{net_forward.1} parent=11 // pred_check_branch
          %411 = sbr.rel (%p409) target = $region48
        $region47: #{net_forward.1} parent=11 // pred_region
          _
        $region48: #{net_forward.1} parent=11 // pred_fallthru
          _
        // Predicated region
        $region49: #{net_forward.1} parent=11 // pred_check
          %p412 = pneg %p260
        $region50: #{net_forward.1} parent=11 // pred_check_branch
          %414 = sbr.rel (%p412) target = $region52
        $region51: #{net_forward.1} parent=11 // pred_region
          _
        $region52: #{net_forward.1} parent=11 // pred_fallthru
          _
        // Predicated region
        $region53: #{net_forward.1} parent=11 // pred_check
          %p415 = pneg %p281
        $region54: #{net_forward.1} parent=11 // pred_check_branch
          %417 = sbr.rel (%p415) target = $region56
        $region55: #{net_forward.1} parent=11 // pred_region
          _
        $region56: #{net_forward.1} parent=11 // pred_fallthru
          _
        // Predicated region
        $region57: #{net_forward.1} parent=11 // pred_check
          %p418 = pneg %p302
        $region58: #{net_forward.1} parent=11 // pred_check_branch
          %420 = sbr.rel (%p418) target = $region60
        $region59: #{net_forward.1} parent=11 // pred_region
          _
        $region60: #{net_forward.1} parent=11 // pred_fallthru
          _
        // Predicated region
        $region61: #{net_forward.1} parent=11 // pred_check
          %p421 = pneg %p323
        $region62: #{net_forward.1} parent=11 // pred_check_branch
          %423 = sbr.rel (%p421) target = $region64
        $region63: #{net_forward.1} parent=11 // pred_region
          _
        $region64: #{net_forward.1} parent=11 // pred_fallthru
          _
        // Predicated region
        $region65: #{net_forward.1} parent=11 // pred_check
          %p424 = pneg %p344
        $region66: #{net_forward.1} parent=11 // pred_check_branch
          %426 = sbr.rel (%p424) target = $region68
        $region67: #{net_forward.1} parent=11 // pred_region
          _
        $region68: #{net_forward.1} parent=11 // pred_fallthru
          _
      $region12: #{net_forward.1} parent=5 // pred_fallthru
        _
      %p427 = scmp.lt.s32.totalorder %s24, 2
      // Predicated region
      $region69: #{net_forward.1} parent=5 // pred_check
        %p428 = pneg %p427
      $region70: #{net_forward.1} parent=5 // pred_check_branch
        %430 = sbr.rel (%p428) target = $region72
      $region71: #{net_forward.1} parent=5 // pred_region
        // Predicated region
        $region73: #{net_forward.1} parent=71 // pred_check
          %p431 = pneg %p44
        $region74: #{net_forward.1} parent=71 // pred_check_branch
          %433 = sbr.rel (%p431) target = $region76
        $region75: #{net_forward.1} parent=71 // pred_region
          %p434 = scmp.lt.s32.totalorder %s24, 1
          %s435 = scalar_select %p434, %s24, 1
          %s436 = smul.addr %s435, 4
          %s437 = smul.addr %s436, 8
          %s438 = scalar_lea.vmem %s0, %s437
        $region76: #{net_forward.1} parent=71 // pred_fallthru
          _
      $region72: #{net_forward.1} parent=5 // pred_fallthru
        _
      %p439 = scmp.le.s32.totalorder 1, %s24
      %p440 = scmp.lt.s32.totalorder %s24, 3
      %p441 = pnand %p439, %p440
      %p442 = pneg %p441
      // Predicated region
      $region77: #{net_forward.1} parent=5 // pred_check
        _
      $region78: #{net_forward.1} parent=5 // pred_check_branch
        %444 = sbr.rel (%p441) target = $region80
      $region79: #{net_forward.1} parent=5 // pred_region
        %s445 = ssub.s32 %s24, 1
        %p446 = scmp.lt.s32.totalorder %s29, 1
        %s447 = scalar_select %p446, %s29, 1
        %s448 = smul.addr %s447, 4
        %s449 = smul.addr %s448, 8
        %s450 = scalar_lea.vmem %s0, %s449
        %p451 = pneg %p50
        %p452 = pneg %p47
        %p453 = pneg %p71
        %p454 = pneg %p68
        %p455 = pneg %p92
        %p456 = pneg %p89
        %p457 = pneg %p113
        %p458 = pneg %p110
        %p459 = pneg %p134
        %p460 = pneg %p131
        %p461 = pneg %p155
        %p462 = pneg %p152
        %p463 = pneg %p176
        %p464 = pneg %p173
        %p465 = pneg %p197
        %p466 = pneg %p194
        %p467 = pneg %p218
        %p468 = pneg %p215
        %p469 = pneg %p239
        %p470 = pneg %p236
        %p471 = pneg %p260
        %p472 = pneg %p257
        %p473 = pneg %p281
        %p474 = pneg %p278
        %p475 = pneg %p302
        %p476 = pneg %p299
        %p477 = pneg %p323
        %p478 = pneg %p320
        %p479 = pneg %p344
        %p480 = pneg %p341
        %p481 = pneg %p370
        %p482 = pneg %p367
        %s483 = sand.u32 %s357, 1
        %s484 = scalar_lea.sflag [#allocation5], %s483
        %s485 = sand.u32 %s357, 1
        %s486 = scalar_lea.vmem [#allocation4], %s485
        %p487 = scmp.lt.s32.totalorder %s29, 1
        %s488 = scalar_select %p487, %s29, 1
        %s489 = smul.addr %s488, 4
        %s490 = smul.addr %s489, 8
        %s491 = scalar_lea.vmem %s0, %s490
        %v492 = vld [vmem:[%s491] sm:$0xff]
        %v493 = vld [vmem:[%s491 + $0x8] sm:$0xff]
        %v494 = vld [vmem:[%s491 + $0x10] sm:$0xff]
        %v495 = vld [vmem:[%s491 + $0x18] sm:$0xf]
        %vm496 = vcmask 228352
        %497 = vst.msk [vmem:[#allocation2] sm:$0xff] %vm496, %v492
        %498 = vst.msk [vmem:[#allocation2 + $0x30] sm:$0xff] %vm496, %v493
        %499 = vst.msk [vmem:[#allocation2 + $0x60] sm:$0xff] %vm496, %v494
        %vm500 = vcmask 224256
        %501 = vst.msk [vmem:[#allocation2 + $0x90] sm:$0xf] %vm500, %v495
        %v502 = vld [vmem:[%s491] sm:$0xff]
        %v503 = vld [vmem:[%s491 + $0x8] sm:$0xff]
        %v504 = vld [vmem:[%s491 + $0x10] sm:$0xff]
        %v505 = vld [vmem:[%s491 + $0x18] sm:$0xf]
        %510 = vrot.lane.b32.xlu0 %v502, 27
        %v511 = vpop.permute.xlu0 %510
        %512 = vrot.lane.b32.xlu0 %v503, 27
        %v513 = vpop.permute.xlu0 %512
        %514 = vrot.lane.b32.xlu0 %v504, 27
        %v515 = vpop.permute.xlu0 %514
        %516 = vrot.lane.b32.xlu0 %v505, 27
        %v517 = vpop.permute.xlu0 %516
        %vm522 = vcmask 457952
        %523 = vst.msk [vmem:[#allocation2] sm:$0xff] %vm522, %v511
        %524 = vst.msk [vmem:[#allocation2 + $0x30] sm:$0xff] %vm522, %v513
        %525 = vst.msk [vmem:[#allocation2 + $0x60] sm:$0xff] %vm522, %v515
        %vm526 = vcmask 453856
        %527 = vst.msk [vmem:[#allocation2 + $0x90] sm:$0xf] %vm526, %v517
        %v528 = vld [vmem:[%s491] sm:$0xff]
        %v529 = vld [vmem:[%s491 + $0x8] sm:$0xff]
        %v530 = vld [vmem:[%s491 + $0x10] sm:$0xff]
        %v531 = vld [vmem:[%s491 + $0x18] sm:$0xf]
        %536 = vrot.lane.b32.xlu0 %v528, 54
        %v537 = vpop.permute.xlu0 %536
        %538 = vrot.lane.b32.xlu0 %v529, 54
        %v539 = vpop.permute.xlu0 %538
        %540 = vrot.lane.b32.xlu0 %v530, 54
        %v541 = vpop.permute.xlu0 %540
        %542 = vrot.lane.b32.xlu0 %v531, 54
        %v543 = vpop.permute.xlu0 %542
        %vm548 = vcmask 687552
        %549 = vst.msk [vmem:[#allocation2] sm:$0xff] %vm548, %v537
        %550 = vst.msk [vmem:[#allocation2 + $0x30] sm:$0xff] %vm548, %v539
        %551 = vst.msk [vmem:[#allocation2 + $0x60] sm:$0xff] %vm548, %v541
        %vm552 = vcmask 683456
        %553 = vst.msk [vmem:[#allocation2 + $0x90] sm:$0xf] %vm552, %v543
        %v554 = vld [vmem:[%s491] sm:$0xff]
        %v555 = vld [vmem:[%s491 + $0x8] sm:$0xff]
        %v556 = vld [vmem:[%s491 + $0x10] sm:$0xff]
        %v557 = vld [vmem:[%s491 + $0x18] sm:$0xf]
        %562 = vrot.lane.b32.xlu0 %v554, 81
        %v563 = vpop.permute.xlu0 %562
        %564 = vrot.lane.b32.xlu0 %v555, 81
        %v565 = vpop.permute.xlu0 %564
        %566 = vrot.lane.b32.xlu0 %v556, 81
        %v567 = vpop.permute.xlu0 %566
        %568 = vrot.lane.b32.xlu0 %v557, 81
        %v569 = vpop.permute.xlu0 %568
        %vm574 = vcmask 917152
        %575 = vst.msk [vmem:[#allocation2] sm:$0xff] %vm574, %v563
        %576 = vst.msk [vmem:[#allocation2 + $0x30] sm:$0xff] %vm574, %v565
        %577 = vst.msk [vmem:[#allocation2 + $0x60] sm:$0xff] %vm574, %v567
        %vm578 = vcmask 913056
        %579 = vst.msk [vmem:[#allocation2 + $0x90] sm:$0xf] %vm578, %v569
        %v580 = vld [vmem:[%s491] sm:$0xff]
        %v581 = vld [vmem:[%s491 + $0x8] sm:$0xff]
        %v582 = vld [vmem:[%s491 + $0x10] sm:$0xff]
        %v583 = vld [vmem:[%s491 + $0x18] sm:$0xf]
        %588 = vrot.lane.b32.xlu0 %v580, 108
        %v589 = vpop.permute.xlu0 %588
        %590 = vrot.lane.b32.xlu0 %v581, 108
        %v591 = vpop.permute.xlu0 %590
        %592 = vrot.lane.b32.xlu0 %v582, 108
        %v593 = vpop.permute.xlu0 %592
        %594 = vrot.lane.b32.xlu0 %v583, 108
        %v595 = vpop.permute.xlu0 %594
        %vm600 = vcmask 1048448
        %601 = vst.msk [vmem:[#allocation2] sm:$0xff] %vm600, %v589
        %vm602 = vcmask 97280
        %603 = vst.msk [vmem:[#allocation2 + $0x8] sm:$0xff] %vm602, %v589
        %604 = vst.msk [vmem:[#allocation2 + $0x30] sm:$0xff] %vm600, %v591
        %605 = vst.msk [vmem:[#allocation2 + $0x38] sm:$0xff] %vm602, %v591
        %606 = vst.msk [vmem:[#allocation2 + $0x60] sm:$0xff] %vm600, %v593
        %607 = vst.msk [vmem:[#allocation2 + $0x68] sm:$0xff] %vm602, %v593
        %vm608 = vcmask 1044352
        %609 = vst.msk [vmem:[#allocation2 + $0x90] sm:$0xf] %vm608, %v595
        %vm610 = vcmask 93184
        %611 = vst.msk [vmem:[#allocation2 + $0x98] sm:$0xf] %vm610, %v595
        %v612 = vld [vmem:[%s491 + $0x1] sm:$0xff]
        %v613 = vld [vmem:[%s491 + $0x9] sm:$0xff]
        %v614 = vld [vmem:[%s491 + $0x11] sm:$0xff]
        %v615 = vld [vmem:[%s491 + $0x19] sm:$0xf]
        %620 = vrot.lane.b32.xlu0 %v612, 12
        %v621 = vpop.permute.xlu0 %620
        %622 = vrot.lane.b32.xlu0 %v613, 12
        %v623 = vpop.permute.xlu0 %622
        %624 = vrot.lane.b32.xlu0 %v614, 12
        %v625 = vpop.permute.xlu0 %624
        %626 = vrot.lane.b32.xlu0 %v615, 12
        %v627 = vpop.permute.xlu0 %626
        %vm632 = vcmask 326752
        %633 = vst.msk [vmem:[#allocation2 + $0x8] sm:$0xff] %vm632, %v621
        %634 = vst.msk [vmem:[#allocation2 + $0x38] sm:$0xff] %vm632, %v623
        %635 = vst.msk [vmem:[#allocation2 + $0x68] sm:$0xff] %vm632, %v625
        %vm636 = vcmask 322656
        %637 = vst.msk [vmem:[#allocation2 + $0x98] sm:$0xf] %vm636, %v627
        %v638 = vld [vmem:[%s491 + $0x1] sm:$0xff]
        %v639 = vld [vmem:[%s491 + $0x9] sm:$0xff]
        %v640 = vld [vmem:[%s491 + $0x11] sm:$0xff]
        %v641 = vld [vmem:[%s491 + $0x19] sm:$0xf]
        %646 = vrot.lane.b32.xlu0 %v638, 39
        %v647 = vpop.permute.xlu0 %646
        %648 = vrot.lane.b32.xlu0 %v639, 39
        %v649 = vpop.permute.xlu0 %648
        %650 = vrot.lane.b32.xlu0 %v640, 39
        %v651 = vpop.permute.xlu0 %650
        %652 = vrot.lane.b32.xlu0 %v641, 39
        %v653 = vpop.permute.xlu0 %652
        %vm658 = vcmask 556352
        %659 = vst.msk [vmem:[#allocation2 + $0x8] sm:$0xff] %vm658, %v647
        %660 = vst.msk [vmem:[#allocation2 + $0x38] sm:$0xff] %vm658, %v649
        %661 = vst.msk [vmem:[#allocation2 + $0x68] sm:$0xff] %vm658, %v651
        %vm662 = vcmask 552256
        %663 = vst.msk [vmem:[#allocation2 + $0x98] sm:$0xf] %vm662, %v653
        %v664 = vld [vmem:[%s491 + $0x1] sm:$0xff]
        %v665 = vld [vmem:[%s491 + $0x9] sm:$0xff]
        %v666 = vld [vmem:[%s491 + $0x11] sm:$0xff]
        %v667 = vld [vmem:[%s491 + $0x19] sm:$0xf]
        %672 = vrot.lane.b32.xlu0 %v664, 66
        %v673 = vpop.permute.xlu0 %672
        %674 = vrot.lane.b32.xlu0 %v665, 66
        %v675 = vpop.permute.xlu0 %674
        %676 = vrot.lane.b32.xlu0 %v666, 66
        %v677 = vpop.permute.xlu0 %676
        %678 = vrot.lane.b32.xlu0 %v667, 66
        %v679 = vpop.permute.xlu0 %678
        %vm684 = vcmask 785952
        %685 = vst.msk [vmem:[#allocation2 + $0x8] sm:$0xff] %vm684, %v673
        %686 = vst.msk [vmem:[#allocation2 + $0x38] sm:$0xff] %vm684, %v675
        %687 = vst.msk [vmem:[#allocation2 + $0x68] sm:$0xff] %vm684, %v677
        %vm688 = vcmask 781856
        %689 = vst.msk [vmem:[#allocation2 + $0x98] sm:$0xf] %vm688, %v679
        %v690 = vld [vmem:[%s491 + $0x1] sm:$0xff]
        %v691 = vld [vmem:[%s491 + $0x9] sm:$0xff]
        %v692 = vld [vmem:[%s491 + $0x11] sm:$0xff]
        %v693 = vld [vmem:[%s491 + $0x19] sm:$0xf]
        %698 = vrot.lane.b32.xlu0 %v690, 93
        %v699 = vpop.permute.xlu0 %698
        %700 = vrot.lane.b32.xlu0 %v691, 93
        %v701 = vpop.permute.xlu0 %700
        %702 = vrot.lane.b32.xlu0 %v692, 93
        %v703 = vpop.permute.xlu0 %702
        %704 = vrot.lane.b32.xlu0 %v693, 93
        %v705 = vpop.permute.xlu0 %704
        %vm710 = vcmask 1015552
        %711 = vst.msk [vmem:[#allocation2 + $0x8] sm:$0xff] %vm710, %v699
        %712 = vst.msk [vmem:[#allocation2 + $0x38] sm:$0xff] %vm710, %v701
        %713 = vst.msk [vmem:[#allocation2 + $0x68] sm:$0xff] %vm710, %v703
        %vm714 = vcmask 1011456
        %715 = vst.msk [vmem:[#allocation2 + $0x98] sm:$0xf] %vm714, %v705
        %v716 = vld [vmem:[%s491 + $0x1] sm:$0xff]
        %v717 = vld [vmem:[%s491 + $0x9] sm:$0xff]
        %v718 = vld [vmem:[%s491 + $0x11] sm:$0xff]
        %v719 = vld [vmem:[%s491 + $0x19] sm:$0xf]
        %724 = vrot.lane.b32.xlu0 %v716, 120
        %v725 = vpop.permute.xlu0 %724
        %726 = vrot.lane.b32.xlu0 %v717, 120
        %v727 = vpop.permute.xlu0 %726
        %728 = vrot.lane.b32.xlu0 %v718, 120
        %v729 = vpop.permute.xlu0 %728
        %730 = vrot.lane.b32.xlu0 %v719, 120
        %v731 = vpop.permute.xlu0 %730
        %vm736 = vcmask 1048544
        %737 = vst.msk [vmem:[#allocation2 + $0x8] sm:$0xff] %vm736, %v725
        %vm738 = vcmask 195584
        %739 = vst.msk [vmem:[#allocation2 + $0x10] sm:$0xff] %vm738, %v725
        %740 = vst.msk [vmem:[#allocation2 + $0x38] sm:$0xff] %vm736, %v727
        %741 = vst.msk [vmem:[#allocation2 + $0x40] sm:$0xff] %vm738, %v727
        %742 = vst.msk [vmem:[#allocation2 + $0x68] sm:$0xff] %vm736, %v729
        %743 = vst.msk [vmem:[#allocation2 + $0x70] sm:$0xff] %vm738, %v729
        %vm744 = vcmask 1044448
        %745 = vst.msk [vmem:[#allocation2 + $0x98] sm:$0xf] %vm744, %v731
        %vm746 = vcmask 191488
        %747 = vst.msk [vmem:[#allocation2 + $0xa0] sm:$0xf] %vm746, %v731
        %v748 = vld [vmem:[%s491 + $0x2] sm:$0xff]
        %v749 = vld [vmem:[%s491 + $0xa] sm:$0xff]
        %v750 = vld [vmem:[%s491 + $0x12] sm:$0xff]
        %v751 = vld [vmem:[%s491 + $0x1a] sm:$0xf]
        %756 = vrot.lane.b32.xlu0 %v748, 24
        %v757 = vpop.permute.xlu0 %756
        %758 = vrot.lane.b32.xlu0 %v749, 24
        %v759 = vpop.permute.xlu0 %758
        %760 = vrot.lane.b32.xlu0 %v750, 24
        %v761 = vpop.permute.xlu0 %760
        %762 = vrot.lane.b32.xlu0 %v751, 24
        %v763 = vpop.permute.xlu0 %762
        %vm768 = vcmask 425152
        %769 = vst.msk [vmem:[#allocation2 + $0x10] sm:$0xff] %vm768, %v757
        %770 = vst.msk [vmem:[#allocation2 + $0x40] sm:$0xff] %vm768, %v759
        %771 = vst.msk [vmem:[#allocation2 + $0x70] sm:$0xff] %vm768, %v761
        %vm772 = vcmask 421056
        %773 = vst.msk [vmem:[#allocation2 + $0xa0] sm:$0xf] %vm772, %v763
        %v774 = vld [vmem:[%s491 + $0x2] sm:$0xff]
        %v775 = vld [vmem:[%s491 + $0xa] sm:$0xff]
        %v776 = vld [vmem:[%s491 + $0x12] sm:$0xff]
        %v777 = vld [vmem:[%s491 + $0x1a] sm:$0xf]
        %782 = vrot.lane.b32.xlu0 %v774, 51
        %v783 = vpop.permute.xlu0 %782
        %784 = vrot.lane.b32.xlu0 %v775, 51
        %v785 = vpop.permute.xlu0 %784
        %786 = vrot.lane.b32.xlu0 %v776, 51
        %v787 = vpop.permute.xlu0 %786
        %788 = vrot.lane.b32.xlu0 %v777, 51
        %v789 = vpop.permute.xlu0 %788
        %vm794 = vcmask 654752
        %795 = vst.msk [vmem:[#allocation2 + $0x10] sm:$0xff] %vm794, %v783
        %796 = vst.msk [vmem:[#allocation2 + $0x40] sm:$0xff] %vm794, %v785
        %797 = vst.msk [vmem:[#allocation2 + $0x70] sm:$0xff] %vm794, %v787
        %vm798 = vcmask 650656
        %799 = vst.msk [vmem:[#allocation2 + $0xa0] sm:$0xf] %vm798, %v789
        %v800 = vld [vmem:[%s491 + $0x2] sm:$0xff]
        %v801 = vld [vmem:[%s491 + $0xa] sm:$0xff]
        %v802 = vld [vmem:[%s491 + $0x12] sm:$0xff]
        %v803 = vld [vmem:[%s491 + $0x1a] sm:$0xf]
        %808 = vrot.lane.b32.xlu0 %v800, 78
        %v809 = vpop.permute.xlu0 %808
        %810 = vrot.lane.b32.xlu0 %v801, 78
        %v811 = vpop.permute.xlu0 %810
        %812 = vrot.lane.b32.xlu0 %v802, 78
        %v813 = vpop.permute.xlu0 %812
        %814 = vrot.lane.b32.xlu0 %v803, 78
        %v815 = vpop.permute.xlu0 %814
        %vm820 = vcmask 884352
        %821 = vst.msk [vmem:[#allocation2 + $0x10] sm:$0xff] %vm820, %v809
        %822 = vst.msk [vmem:[#allocation2 + $0x40] sm:$0xff] %vm820, %v811
        %823 = vst.msk [vmem:[#allocation2 + $0x70] sm:$0xff] %vm820, %v813
        %vm824 = vcmask 880256
        %825 = vst.msk [vmem:[#allocation2 + $0xa0] sm:$0xf] %vm824, %v815
        %v826 = vld [vmem:[%s491 + $0x2] sm:$0xff]
        %v827 = vld [vmem:[%s491 + $0xa] sm:$0xff]
        %v828 = vld [vmem:[%s491 + $0x12] sm:$0xff]
        %v829 = vld [vmem:[%s491 + $0x1a] sm:$0xf]
        %834 = vrot.lane.b32.xlu0 %v826, 105
        %v835 = vpop.permute.xlu0 %834
        %836 = vrot.lane.b32.xlu0 %v827, 105
        %v837 = vpop.permute.xlu0 %836
        %838 = vrot.lane.b32.xlu0 %v828, 105
        %v839 = vpop.permute.xlu0 %838
        %840 = vrot.lane.b32.xlu0 %v829, 105
        %v841 = vpop.permute.xlu0 %840
        %vm846 = vcmask 1048416
        %847 = vst.msk [vmem:[#allocation2 + $0x10] sm:$0xff] %vm846, %v835
        %vm848 = vcmask 64512
        %849 = vst.msk [vmem:[#allocation2 + $0x18] sm:$0xff] %vm848, %v835
        %850 = vst.msk [vmem:[#allocation2 + $0x40] sm:$0xff] %vm846, %v837
        %851 = vst.msk [vmem:[#allocation2 + $0x48] sm:$0xff] %vm848, %v837
        %852 = vst.msk [vmem:[#allocation2 + $0x70] sm:$0xff] %vm846, %v839
        %853 = vst.msk [vmem:[#allocation2 + $0x78] sm:$0xff] %vm848, %v839
        %vm854 = vcmask 1044320
        %855 = vst.msk [vmem:[#allocation2 + $0xa0] sm:$0xf] %vm854, %v841
        %vm856 = vcmask 60416
        %857 = vst.msk [vmem:[#allocation2 + $0xa8] sm:$0xf] %vm856, %v841
        %v858 = vld [vmem:[%s491 + $0x2] sm:$0xff]
        %v859 = vld [vmem:[%s491 + $0xa] sm:$0xff]
        %v860 = vld [vmem:[%s491 + $0x12] sm:$0xff]
        %v861 = vld [vmem:[%s491 + $0x1a] sm:$0xf]
        %866 = vrot.lane.b32.xlu0 %v858, 4
        %v867 = vpop.permute.xlu0 %866
        %868 = vrot.lane.b32.xlu0 %v859, 4
        %v869 = vpop.permute.xlu0 %868
        %870 = vrot.lane.b32.xlu0 %v860, 4
        %v871 = vpop.permute.xlu0 %870
        %872 = vrot.lane.b32.xlu0 %v861, 4
        %v873 = vpop.permute.xlu0 %872
        %vm878 = vcmask 293952
        %879 = vst.msk [vmem:[#allocation2 + $0x18] sm:$0xff] %vm878, %v867
        %880 = vst.msk [vmem:[#allocation2 + $0x48] sm:$0xff] %vm878, %v869
        %881 = vst.msk [vmem:[#allocation2 + $0x78] sm:$0xff] %vm878, %v871
        %vm882 = vcmask 289856
        %883 = vst.msk [vmem:[#allocation2 + $0xa8] sm:$0xf] %vm882, %v873
        %v884 = vld [vmem:[%s491 + $0x3] sm:$0xff]
        %v885 = vld [vmem:[%s491 + $0xb] sm:$0xff]
        %v886 = vld [vmem:[%s491 + $0x13] sm:$0xff]
        %v887 = vld [vmem:[%s491 + $0x1b] sm:$0xf]
        %892 = vrot.lane.b32.xlu0 %v884, 36
        %v893 = vpop.permute.xlu0 %892
        %894 = vrot.lane.b32.xlu0 %v885, 36
        %v895 = vpop.permute.xlu0 %894
        %896 = vrot.lane.b32.xlu0 %v886, 36
        %v897 = vpop.permute.xlu0 %896
        %898 = vrot.lane.b32.xlu0 %v887, 36
        %v899 = vpop.permute.xlu0 %898
        %vm904 = vcmask 523552
        %905 = vst.msk [vmem:[#allocation2 + $0x18] sm:$0xff] %vm904, %v893
        %906 = vst.msk [vmem:[#allocation2 + $0x48] sm:$0xff] %vm904, %v895
        %907 = vst.msk [vmem:[#allocation2 + $0x78] sm:$0xff] %vm904, %v897
        %vm908 = vcmask 519456
        %909 = vst.msk [vmem:[#allocation2 + $0xa8] sm:$0xf] %vm908, %v899
        %v910 = vld [vmem:[%s491 + $0x3] sm:$0xff]
        %v911 = vld [vmem:[%s491 + $0xb] sm:$0xff]
        %v912 = vld [vmem:[%s491 + $0x13] sm:$0xff]
        %v913 = vld [vmem:[%s491 + $0x1b] sm:$0xf]
        %918 = vrot.lane.b32.xlu0 %v910, 63
        %v919 = vpop.permute.xlu0 %918
        %920 = vrot.lane.b32.xlu0 %v911, 63
        %v921 = vpop.permute.xlu0 %920
        %922 = vrot.lane.b32.xlu0 %v912, 63
        %v923 = vpop.permute.xlu0 %922
        %924 = vrot.lane.b32.xlu0 %v913, 63
        %v925 = vpop.permute.xlu0 %924
        %vm930 = vcmask 753152
        %931 = vst.msk [vmem:[#allocation2 + $0x18] sm:$0xff] %vm930, %v919
        %932 = vst.msk [vmem:[#allocation2 + $0x48] sm:$0xff] %vm930, %v921
        %933 = vst.msk [vmem:[#allocation2 + $0x78] sm:$0xff] %vm930, %v923
        %vm934 = vcmask 749056
        %935 = vst.msk [vmem:[#allocation2 + $0xa8] sm:$0xf] %vm934, %v925
        %v936 = vld [vmem:[%s491 + $0x3] sm:$0xff]
        %v937 = vld [vmem:[%s491 + $0xb] sm:$0xff]
        %v938 = vld [vmem:[%s491 + $0x13] sm:$0xff]
        %v939 = vld [vmem:[%s491 + $0x1b] sm:$0xf]
        %944 = vrot.lane.b32.xlu0 %v936, 90
        %v945 = vpop.permute.xlu0 %944
        %946 = vrot.lane.b32.xlu0 %v937, 90
        %v947 = vpop.permute.xlu0 %946
        %948 = vrot.lane.b32.xlu0 %v938, 90
        %v949 = vpop.permute.xlu0 %948
        %950 = vrot.lane.b32.xlu0 %v939, 90
        %v951 = vpop.permute.xlu0 %950
        %vm956 = vcmask 982752
        %957 = vst.msk [vmem:[#allocation2 + $0x18] sm:$0xff] %vm956, %v945
        %958 = vst.msk [vmem:[#allocation2 + $0x48] sm:$0xff] %vm956, %v947
        %959 = vst.msk [vmem:[#allocation2 + $0x78] sm:$0xff] %vm956, %v949
        %vm960 = vcmask 978656
        %961 = vst.msk [vmem:[#allocation2 + $0xa8] sm:$0xf] %vm960, %v951
        %v962 = vld [vmem:[%s491 + $0x3] sm:$0xff]
        %v963 = vld [vmem:[%s491 + $0xb] sm:$0xff]
        %v964 = vld [vmem:[%s491 + $0x13] sm:$0xff]
        %v965 = vld [vmem:[%s491 + $0x1b] sm:$0xf]
        %970 = vrot.lane.b32.xlu0 %v962, 117
        %v971 = vpop.permute.xlu0 %970
        %972 = vrot.lane.b32.xlu0 %v963, 117
        %v973 = vpop.permute.xlu0 %972
        %974 = vrot.lane.b32.xlu0 %v964, 117
        %v975 = vpop.permute.xlu0 %974
        %976 = vrot.lane.b32.xlu0 %v965, 117
        %v977 = vpop.permute.xlu0 %976
        %vm982 = vcmask 1048512
        %983 = vst.msk [vmem:[#allocation2 + $0x18] sm:$0xff] %vm982, %v971
        %vm984 = vcmask 162816
        %985 = vst.msk [vmem:[#allocation2 + $0x20] sm:$0xff] %vm984, %v971
        %986 = vst.msk [vmem:[#allocation2 + $0x48] sm:$0xff] %vm982, %v973
        %987 = vst.msk [vmem:[#allocation2 + $0x50] sm:$0xff] %vm984, %v973
        %988 = vst.msk [vmem:[#allocation2 + $0x78] sm:$0xff] %vm982, %v975
        %989 = vst.msk [vmem:[#allocation2 + $0x80] sm:$0xff] %vm984, %v975
        %vm990 = vcmask 1044416
        %991 = vst.msk [vmem:[#allocation2 + $0xa8] sm:$0xf] %vm990, %v977
        %vm992 = vcmask 158720
        %993 = vst.msk [vmem:[#allocation2 + $0xb0] sm:$0xf] %vm992, %v977
        %v994 = vld [vmem:[%s491 + $0x3] sm:$0xff]
        %v995 = vld [vmem:[%s491 + $0xb] sm:$0xff]
        %v996 = vld [vmem:[%s491 + $0x13] sm:$0xff]
        %v997 = vld [vmem:[%s491 + $0x1b] sm:$0xf]
        %1002 = vrot.lane.b32.xlu0 %v994, 16
        %v1003 = vpop.permute.xlu0 %1002
        %1004 = vrot.lane.b32.xlu0 %v995, 16
        %v1005 = vpop.permute.xlu0 %1004
        %1006 = vrot.lane.b32.xlu0 %v996, 16
        %v1007 = vpop.permute.xlu0 %1006
        %1008 = vrot.lane.b32.xlu0 %v997, 16
        %v1009 = vpop.permute.xlu0 %1008
        %vm1014 = vcmask 392352
        %1015 = vst.msk [vmem:[#allocation2 + $0x20] sm:$0xff] %vm1014, %v1003
        %1016 = vst.msk [vmem:[#allocation2 + $0x50] sm:$0xff] %vm1014, %v1005
        %1017 = vst.msk [vmem:[#allocation2 + $0x80] sm:$0xff] %vm1014, %v1007
        %vm1018 = vcmask 388256
        %1019 = vst.msk [vmem:[#allocation2 + $0xb0] sm:$0xf] %vm1018, %v1009
        %v1020 = vld [vmem:[%s491 + $0x4] sm:$0xff]
        %v1021 = vld [vmem:[%s491 + $0xc] sm:$0xff]
        %v1022 = vld [vmem:[%s491 + $0x14] sm:$0xff]
        %v1023 = vld [vmem:[%s491 + $0x1c] sm:$0xf]
        %1028 = vrot.lane.b32.xlu0 %v1020, 48
        %v1029 = vpop.permute.xlu0 %1028
        %1030 = vrot.lane.b32.xlu0 %v1021, 48
        %v1031 = vpop.permute.xlu0 %1030
        %1032 = vrot.lane.b32.xlu0 %v1022, 48
        %v1033 = vpop.permute.xlu0 %1032
        %1034 = vrot.lane.b32.xlu0 %v1023, 48
        %v1035 = vpop.permute.xlu0 %1034
        %vm1040 = vcmask 621952
        %1041 = vst.msk [vmem:[#allocation2 + $0x20] sm:$0xff] %vm1040, %v1029
        %1042 = vst.msk [vmem:[#allocation2 + $0x50] sm:$0xff] %vm1040, %v1031
        %1043 = vst.msk [vmem:[#allocation2 + $0x80] sm:$0xff] %vm1040, %v1033
        %vm1044 = vcmask 617856
        %1045 = vst.msk [vmem:[#allocation2 + $0xb0] sm:$0xf] %vm1044, %v1035
        %v1046 = vld [vmem:[%s491 + $0x4] sm:$0xff]
        %v1047 = vld [vmem:[%s491 + $0xc] sm:$0xff]
        %v1048 = vld [vmem:[%s491 + $0x14] sm:$0xff]
        %v1049 = vld [vmem:[%s491 + $0x1c] sm:$0xf]
        %1054 = vrot.lane.b32.xlu0 %v1046, 75
        %v1055 = vpop.permute.xlu0 %1054
        %1056 = vrot.lane.b32.xlu0 %v1047, 75
        %v1057 = vpop.permute.xlu0 %1056
        %1058 = vrot.lane.b32.xlu0 %v1048, 75
        %v1059 = vpop.permute.xlu0 %1058
        %1060 = vrot.lane.b32.xlu0 %v1049, 75
        %v1061 = vpop.permute.xlu0 %1060
        %vm1066 = vcmask 851552
        %1067 = vst.msk [vmem:[#allocation2 + $0x20] sm:$0xff] %vm1066, %v1055
        %1068 = vst.msk [vmem:[#allocation2 + $0x50] sm:$0xff] %vm1066, %v1057
        %1069 = vst.msk [vmem:[#allocation2 + $0x80] sm:$0xff] %vm1066, %v1059
        %vm1070 = vcmask 847456
        %1071 = vst.msk [vmem:[#allocation2 + $0xb0] sm:$0xf] %vm1070, %v1061
        %v1072 = vld [vmem:[%s491 + $0x4] sm:$0xff]
        %v1073 = vld [vmem:[%s491 + $0xc] sm:$0xff]
        %v1074 = vld [vmem:[%s491 + $0x14] sm:$0xff]
        %v1075 = vld [vmem:[%s491 + $0x1c] sm:$0xf]
        %1080 = vrot.lane.b32.xlu0 %v1072, 102
        %v1081 = vpop.permute.xlu0 %1080
        %1082 = vrot.lane.b32.xlu0 %v1073, 102
        %v1083 = vpop.permute.xlu0 %1082
        %1084 = vrot.lane.b32.xlu0 %v1074, 102
        %v1085 = vpop.permute.xlu0 %1084
        %1086 = vrot.lane.b32.xlu0 %v1075, 102
        %v1087 = vpop.permute.xlu0 %1086
        %vm1092 = vcmask 1048384
        %1093 = vst.msk [vmem:[#allocation2 + $0x20] sm:$0xff] %vm1092, %v1081
        %vm1094 = vcmask 31744
        %1095 = vst.msk [vmem:[#allocation2 + $0x28] sm:$0xff] %vm1094, %v1081
        %1096 = vst.msk [vmem:[#allocation2 + $0x50] sm:$0xff] %vm1092, %v1083
        %1097 = vst.msk [vmem:[#allocation2 + $0x58] sm:$0xff] %vm1094, %v1083
        %1098 = vst.msk [vmem:[#allocation2 + $0x80] sm:$0xff] %vm1092, %v1085
        %1099 = vst.msk [vmem:[#allocation2 + $0x88] sm:$0xff] %vm1094, %v1085
        %vm1100 = vcmask 1044288
        %1101 = vst.msk [vmem:[#allocation2 + $0xb0] sm:$0xf] %vm1100, %v1087
        %vm1102 = vcmask 27648
        %1103 = vst.msk [vmem:[#allocation2 + $0xb8] sm:$0xf] %vm1102, %v1087
        %v1104 = vld [vmem:[%s491 + $0x4] sm:$0xff]
        %v1105 = vld [vmem:[%s491 + $0xc] sm:$0xff]
        %v1106 = vld [vmem:[%s491 + $0x14] sm:$0xff]
        %v1107 = vld [vmem:[%s491 + $0x1c] sm:$0xf]
        %1112 = vrot.lane.b32.xlu0 %v1104, 1
        %v1113 = vpop.permute.xlu0 %1112
        %1114 = vrot.lane.b32.xlu0 %v1105, 1
        %v1115 = vpop.permute.xlu0 %1114
        %1116 = vrot.lane.b32.xlu0 %v1106, 1
        %v1117 = vpop.permute.xlu0 %1116
        %1118 = vrot.lane.b32.xlu0 %v1107, 1
        %v1119 = vpop.permute.xlu0 %1118
        %vm1124 = vcmask 261152
        %1125 = vst.msk [vmem:[#allocation2 + $0x28] sm:$0xff] %vm1124, %v1113
        %1126 = vst.msk [vmem:[#allocation2 + $0x58] sm:$0xff] %vm1124, %v1115
        %1127 = vst.msk [vmem:[#allocation2 + $0x88] sm:$0xff] %vm1124, %v1117
        %vm1128 = vcmask 257056
        %1129 = vst.msk [vmem:[#allocation2 + $0xb8] sm:$0xf] %vm1128, %v1119
        %v1130 = vld [vmem:[%s491 + $0x4] sm:$0xff]
        %v1131 = vld [vmem:[%s491 + $0xc] sm:$0xff]
        %v1132 = vld [vmem:[%s491 + $0x14] sm:$0xff]
        %v1133 = vld [vmem:[%s491 + $0x1c] sm:$0xf]
        %1138 = vrot.lane.b32.xlu0 %v1130, 28
        %v1139 = vpop.permute.xlu0 %1138
        %1140 = vrot.lane.b32.xlu0 %v1131, 28
        %v1141 = vpop.permute.xlu0 %1140
        %1142 = vrot.lane.b32.xlu0 %v1132, 28
        %v1143 = vpop.permute.xlu0 %1142
        %1144 = vrot.lane.b32.xlu0 %v1133, 28
        %v1145 = vpop.permute.xlu0 %1144
        %vm1150 = vcmask 490752
        %1151 = vst.msk [vmem:[#allocation2 + $0x28] sm:$0xff] %vm1150, %v1139
        %1152 = vst.msk [vmem:[#allocation2 + $0x58] sm:$0xff] %vm1150, %v1141
        %1153 = vst.msk [vmem:[#allocation2 + $0x88] sm:$0xff] %vm1150, %v1143
        %vm1154 = vcmask 486656
        %1155 = vst.msk [vmem:[#allocation2 + $0xb8] sm:$0xf] %vm1154, %v1145
        %v1156 = vld [vmem:[#allocation2] sm:$0xff]
        %v1157 = vld [vmem:[#allocation2 + $0x8] sm:$0xff]
        %v1158 = vld [vmem:[#allocation2 + $0x10] sm:$0xff]
        %v1159 = vld [vmem:[#allocation2 + $0x18] sm:$0xff]
        %v1160 = vld [vmem:[#allocation2 + $0x20] sm:$0xff]
        %v1161 = vld [vmem:[#allocation2 + $0x28] sm:$0xff]
        %v1162 = vld [vmem:[#allocation2 + $0x30] sm:$0xff]
        %v1163 = vld [vmem:[#allocation2 + $0x38] sm:$0xff]
        %v1164 = vld [vmem:[#allocation2 + $0x40] sm:$0xff]
        %v1165 = vld [vmem:[#allocation2 + $0x48] sm:$0xff]
        %v1166 = vld [vmem:[#allocation2 + $0x50] sm:$0xff]
        %v1167 = vld [vmem:[#allocation2 + $0x58] sm:$0xff]
        %v1168 = vld [vmem:[#allocation2 + $0x60] sm:$0xff]
        %v1169 = vld [vmem:[#allocation2 + $0x68] sm:$0xff]
        %v1170 = vld [vmem:[#allocation2 + $0x70] sm:$0xff]
        %v1171 = vld [vmem:[#allocation2 + $0x78] sm:$0xff]
        %v1172 = vld [vmem:[#allocation2 + $0x80] sm:$0xff]
        %v1173 = vld [vmem:[#allocation2 + $0x88] sm:$0xff]
        %v1174 = vld [vmem:[#allocation2 + $0x90] sm:$0xf]
        %v1175 = vld [vmem:[#allocation2 + $0x98] sm:$0xf]
        %v1176 = vld [vmem:[#allocation2 + $0xa0] sm:$0xf]
        %v1177 = vld [vmem:[#allocation2 + $0xa8] sm:$0xf]
        %v1178 = vld [vmem:[#allocation2 + $0xb0] sm:$0xf]
        %v1179 = vld [vmem:[#allocation2 + $0xb8] sm:$0xf]
        %v1180 = vld [vmem:[%s1] sm:$0xff]
        %v1181 = vld [vmem:[%s1 + $0x8] sm:$0xff]
        %v1182 = vld [vmem:[%s1 + $0x10] sm:$0xff]
        %v1183 = vld [vmem:[%s1 + $0x18] sm:$0xff]
        %v1184 = vld [vmem:[%s1 + $0x20] sm:$0xff]
        %v1185 = vld [vmem:[%s1 + $0x28] sm:$0xff]
        %v1186 = vld [vmem:[%s1 + $0x30] sm:$0xff]
        %v1187 = vld [vmem:[%s1 + $0x38] sm:$0xff]
        %v1188 = vld [vmem:[%s1 + $0x40] sm:$0xff]
        %v1189 = vld [vmem:[%s1 + $0x48] sm:$0xff]
        %v1190 = vld [vmem:[%s1 + $0x50] sm:$0xff]
        %v1191 = vld [vmem:[%s1 + $0x58] sm:$0xff]
        %v1192 = vld [vmem:[%s1 + $0x60] sm:$0xff]
        %v1193 = vld [vmem:[%s1 + $0x68] sm:$0xff]
        %v1194 = vld [vmem:[%s1 + $0x70] sm:$0xff]
        %v1195 = vld [vmem:[%s1 + $0x78] sm:$0xff]
        %v1196 = vld [vmem:[%s1 + $0x80] sm:$0xff]
        %v1197 = vld [vmem:[%s1 + $0x88] sm:$0xff]
        %v1198 = vld [vmem:[%s1 + $0x90] sm:$0xff]
        %v1199 = vld [vmem:[%s1 + $0x98] sm:$0xff]
        %v1200 = vld [vmem:[%s1 + $0xa0] sm:$0xff]
        %v1201 = vld [vmem:[%s1 + $0xa8] sm:$0xff]
        %v1202 = vld [vmem:[%s1 + $0xb0] sm:$0xff]
        %v1203 = vld [vmem:[%s1 + $0xb8] sm:$0xff]
        %v1204 = vld [vmem:[%s1 + $0xc0] sm:$0xff]
        %v1205 = vld [vmem:[%s1 + $0xc8] sm:$0xff]
        %v1206 = vld [vmem:[%s1 + $0xd0] sm:$0xff]
        %v1207 = vld [vmem:[%s1 + $0xd8] sm:$0xff]
        %v1208 = vld [vmem:[%s1 + $0xe0] sm:$0xff]
        %v1209 = vld [vmem:[%s1 + $0xe8] sm:$0xff]
        %v1210 = vld [vmem:[%s1 + $0xf0] sm:$0xff]
        %v1211 = vld [vmem:[%s1 + $0xf8] sm:$0xff]
        %v1212 = vld [vmem:[%s1 + $0x100] sm:$0xff]
        %v1213 = vld [vmem:[%s1 + $0x108] sm:$0xff]
        %v1214 = vld [vmem:[%s1 + $0x110] sm:$0xff]
        %v1215 = vld [vmem:[%s1 + $0x118] sm:$0xff]
        %v1216 = vld [vmem:[%s1 + $0x120] sm:$0xff]
        %v1217 = vld [vmem:[%s1 + $0x128] sm:$0xff]
        %v1218 = vld [vmem:[%s1 + $0x130] sm:$0xff]
        %v1219 = vld [vmem:[%s1 + $0x138] sm:$0xff]
        %v1220 = vld [vmem:[%s1 + $0x140] sm:$0xff]
        %v1221 = vld [vmem:[%s1 + $0x148] sm:$0xff]
        %v1222 = vld [vmem:[%s1 + $0x150] sm:$0xff]
        %v1223 = vld [vmem:[%s1 + $0x158] sm:$0xff]
        %v1224 = vld [vmem:[%s1 + $0x160] sm:$0xff]
        %v1225 = vld [vmem:[%s1 + $0x168] sm:$0xff]
        %v1226 = vld [vmem:[%s1 + $0x170] sm:$0xff]
        %v1227 = vld [vmem:[%s1 + $0x178] sm:$0xff]
        %v1228 = vld [vmem:[%s1 + $0x180] sm:$0xff]
        %v1229 = vld [vmem:[%s1 + $0x188] sm:$0xff]
        %v1230 = vld [vmem:[%s1 + $0x190] sm:$0xff]
        %v1231 = vld [vmem:[%s1 + $0x198] sm:$0xff]
        %v1232 = vld [vmem:[%s1 + $0x1a0] sm:$0xff]
        %v1233 = vld [vmem:[%s1 + $0x1a8] sm:$0xff]
        %v1234 = vld [vmem:[%s1 + $0x1b0] sm:$0xff]
        %v1235 = vld [vmem:[%s1 + $0x1b8] sm:$0xff]
        %v1236 = vld [vmem:[%s1 + $0x1c0] sm:$0xff]
        %v1237 = vld [vmem:[%s1 + $0x1c8] sm:$0xff]
        %v1238 = vld [vmem:[%s1 + $0x1d0] sm:$0xff]
        %v1239 = vld [vmem:[%s1 + $0x1d8] sm:$0xff]
        %v1240 = vld [vmem:[%s1 + $0x1e0] sm:$0xff]
        %v1241 = vld [vmem:[%s1 + $0x1e8] sm:$0xff]
        %v1242 = vld [vmem:[%s1 + $0x1f0] sm:$0xff]
        %v1243 = vld [vmem:[%s1 + $0x1f8] sm:$0xff]
        %v1244 = vld [vmem:[%s1 + $0x200] sm:$0xff]
        %v1245 = vld [vmem:[%s1 + $0x208] sm:$0xff]
        %v1246 = vld [vmem:[%s1 + $0x210] sm:$0xff]
        %v1247 = vld [vmem:[%s1 + $0x218] sm:$0xff]
        %v1248 = vld [vmem:[%s1 + $0x220] sm:$0xff]
        %v1249 = vld [vmem:[%s1 + $0x228] sm:$0xff]
        %v1250 = vld [vmem:[%s1 + $0x230] sm:$0xff]
        %v1251 = vld [vmem:[%s1 + $0x238] sm:$0xff]
        %v1252 = vld [vmem:[%s1 + $0x240] sm:$0xff]
        %v1253 = vld [vmem:[%s1 + $0x248] sm:$0xff]
        %v1254 = vld [vmem:[%s1 + $0x250] sm:$0xff]
        %v1255 = vld [vmem:[%s1 + $0x258] sm:$0xff]
        %v1256 = vld [vmem:[%s1 + $0x260] sm:$0xff]
        %v1257 = vld [vmem:[%s1 + $0x268] sm:$0xff]
        %v1258 = vld [vmem:[%s1 + $0x270] sm:$0xff]
        %v1259 = vld [vmem:[%s1 + $0x278] sm:$0xff]
        %v1260 = vld [vmem:[%s1 + $0x280] sm:$0xff]
        %v1261 = vld [vmem:[%s1 + $0x288] sm:$0xff]
        %v1262 = vld [vmem:[%s1 + $0x290] sm:$0xff]
        %v1263 = vld [vmem:[%s1 + $0x298] sm:$0xff]
        %v1264 = vld [vmem:[%s1 + $0x2a0] sm:$0xff]
        %v1265 = vld [vmem:[%s1 + $0x2a8] sm:$0xff]
        %v1266 = vld [vmem:[%s1 + $0x2b0] sm:$0xff]
        %v1267 = vld [vmem:[%s1 + $0x2b8] sm:$0xff]
        %v1268 = vld [vmem:[%s1 + $0x2c0] sm:$0xff]
        %v1269 = vld [vmem:[%s1 + $0x2c8] sm:$0xff]
        %v1270 = vld [vmem:[%s1 + $0x2d0] sm:$0xff]
        %v1271 = vld [vmem:[%s1 + $0x2d8] sm:$0xff]
        %v1272 = vld [vmem:[%s1 + $0x2e0] sm:$0xff]
        %v1273 = vld [vmem:[%s1 + $0x2e8] sm:$0xff]
        %v1274 = vld [vmem:[%s1 + $0x2f0] sm:$0xff]
        %v1275 = vld [vmem:[%s1 + $0x2f8] sm:$0xff]
        %v1276 = vld [vmem:[%s1 + $0x300] sm:$0xff]
        %v1277 = vld [vmem:[%s1 + $0x308] sm:$0xff]
        %v1278 = vld [vmem:[%s1 + $0x310] sm:$0xff]
        %v1279 = vld [vmem:[%s1 + $0x318] sm:$0xff]
        %v1280 = vld [vmem:[%s1 + $0x320] sm:$0xff]
        %v1281 = vld [vmem:[%s1 + $0x328] sm:$0xff]
        %v1282 = vld [vmem:[%s1 + $0x330] sm:$0xff]
        %v1283 = vld [vmem:[%s1 + $0x338] sm:$0xff]
        %v1284 = vld [vmem:[%s1 + $0x340] sm:$0xff]
        %v1285 = vld [vmem:[%s1 + $0x348] sm:$0xff]
        %v1286 = vld [vmem:[%s1 + $0x350] sm:$0xff]
        %v1287 = vld [vmem:[%s1 + $0x358] sm:$0xff]
        %v1288 = vld [vmem:[%s1 + $0x360] sm:$0xff]
        %v1289 = vld [vmem:[%s1 + $0x368] sm:$0xff]
        %v1290 = vld [vmem:[%s1 + $0x370] sm:$0xff]
        %v1291 = vld [vmem:[%s1 + $0x378] sm:$0xff]
        %v1292 = vld [vmem:[%s1 + $0x380] sm:$0xff]
        %v1293 = vld [vmem:[%s1 + $0x388] sm:$0xff]
        %v1294 = vld [vmem:[%s1 + $0x390] sm:$0xff]
        %v1295 = vld [vmem:[%s1 + $0x398] sm:$0xff]
        %v1296 = vld [vmem:[%s1 + $0x3a0] sm:$0xff]
        %v1297 = vld [vmem:[%s1 + $0x3a8] sm:$0xff]
        %v1298 = vld [vmem:[%s1 + $0x3b0] sm:$0xff]
        %v1299 = vld [vmem:[%s1 + $0x3b8] sm:$0xff]
        %v1300 = vld [vmem:[%s1 + $0x3c0] sm:$0xff]
        %v1301 = vld [vmem:[%s1 + $0x3c8] sm:$0xff]
        %v1302 = vld [vmem:[%s1 + $0x3d0] sm:$0xff]
        %v1303 = vld [vmem:[%s1 + $0x3d8] sm:$0xff]
        %v1304 = vld [vmem:[%s1 + $0x3e0] sm:$0xff]
        %v1305 = vld [vmem:[%s1 + $0x3e8] sm:$0xff]
        %v1306 = vld [vmem:[%s1 + $0x3f0] sm:$0xff]
        %v1307 = vld [vmem:[%s1 + $0x3f8] sm:$0xff]
        %v1308 = vld [vmem:[%s1 + $0x400] sm:$0xff]
        %v1309 = vld [vmem:[%s1 + $0x408] sm:$0xff]
        %v1310 = vld [vmem:[%s1 + $0x410] sm:$0xff]
        %v1311 = vld [vmem:[%s1 + $0x418] sm:$0xff]
        %v1312 = vld [vmem:[%s1 + $0x420] sm:$0xff]
        %v1313 = vld [vmem:[%s1 + $0x428] sm:$0xff]
        %v1314 = vld [vmem:[%s1 + $0x430] sm:$0xff]
        %v1315 = vld [vmem:[%s1 + $0x438] sm:$0xff]
        %v1316 = vld [vmem:[%s1 + $0x440] sm:$0xff]
        %v1317 = vld [vmem:[%s1 + $0x448] sm:$0xff]
        %v1318 = vld [vmem:[%s1 + $0x450] sm:$0xff]
        %v1319 = vld [vmem:[%s1 + $0x458] sm:$0xff]
        %v1320 = vld [vmem:[%s1 + $0x460] sm:$0xff]
        %v1321 = vld [vmem:[%s1 + $0x468] sm:$0xff]
        %v1322 = vld [vmem:[%s1 + $0x470] sm:$0xff]
        %v1323 = vld [vmem:[%s1 + $0x478] sm:$0xff]
        %v1324 = vld [vmem:[%s1 + $0x480] sm:$0xff]
        %v1325 = vld [vmem:[%s1 + $0x488] sm:$0xff]
        %v1326 = vld [vmem:[%s1 + $0x490] sm:$0xff]
        %v1327 = vld [vmem:[%s1 + $0x498] sm:$0xff]
        %v1328 = vld [vmem:[%s1 + $0x4a0] sm:$0xff]
        %v1329 = vld [vmem:[%s1 + $0x4a8] sm:$0xff]
        %v1330 = vld [vmem:[%s1 + $0x4b0] sm:$0xff]
        %v1331 = vld [vmem:[%s1 + $0x4b8] sm:$0xff]
        %v1332 = vld [vmem:[%s1 + $0x4c0] sm:$0xff]
        %v1333 = vld [vmem:[%s1 + $0x4c8] sm:$0xff]
        %v1334 = vld [vmem:[%s1 + $0x4d0] sm:$0xff]
        %v1335 = vld [vmem:[%s1 + $0x4d8] sm:$0xff]
        %v1336 = vld [vmem:[%s1 + $0x4e0] sm:$0xff]
        %v1337 = vld [vmem:[%s1 + $0x4e8] sm:$0xff]
        %v1338 = vld [vmem:[%s1 + $0x4f0] sm:$0xff]
        %v1339 = vld [vmem:[%s1 + $0x4f8] sm:$0xff]
        %v1340 = vld [vmem:[%s1 + $0x500] sm:$0xff]
        %v1341 = vld [vmem:[%s1 + $0x508] sm:$0xff]
        %v1342 = vld [vmem:[%s1 + $0x510] sm:$0xff]
        %v1343 = vld [vmem:[%s1 + $0x518] sm:$0xff]
        %v1344 = vld [vmem:[%s1 + $0x520] sm:$0xff]
        %v1345 = vld [vmem:[%s1 + $0x528] sm:$0xff]
        %v1346 = vld [vmem:[%s1 + $0x530] sm:$0xff]
        %v1347 = vld [vmem:[%s1 + $0x538] sm:$0xff]
        %v1348 = vld [vmem:[%s1 + $0x540] sm:$0xff]
        %v1349 = vld [vmem:[%s1 + $0x548] sm:$0xff]
        %v1350 = vld [vmem:[%s1 + $0x550] sm:$0xff]
        %v1351 = vld [vmem:[%s1 + $0x558] sm:$0xff]
        %v1352 = vld [vmem:[%s1 + $0x560] sm:$0xff]
        %v1353 = vld [vmem:[%s1 + $0x568] sm:$0xff]
        %v1354 = vld [vmem:[%s1 + $0x570] sm:$0xf]
        %v1355 = vld [vmem:[%s1 + $0x578] sm:$0xf]
        %v1356 = vld [vmem:[%s2] sm:$0x3]
        %v1358 = vlaneseq
        %v1359 = vshrl.u32 %v1358, 7
        %v1360 = vsub.s32 0, %v1359
        %v1361 = vrot.slane %v1356, %v1360
        %v1362 = vlaneseq
        %v1363 = vshrl.u32 %v1362, 7
        %v1364 = vsub.s32 1, %v1363
        %v1365 = vrot.slane %v1356, %v1364
        %vm1368 = vcmask 490496
        %v1370 = vsel %vm1368, %v1161, 0
        %v1373 = vsel %vm1368, %v1167, 0
        %v1376 = vsel %vm1368, %v1173, 0
        %v1379 = vsel %vm1368, %v1179, 0
        %vm1381 = vcmask 1043456
        %v1383 = vsel %vm1381, %v1354, 0
        %v1386 = vsel %vm1381, %v1355, 0
        %1388 = vmatprep.subr.mxu0 %v1211
        %1389 = vmatpush1.msra.mxu0 %v1210
        %1390 = vmatprep.subr.mxu0 %v1209
        %1391 = vmatpush1.msra.mxu0 %v1208
        %1392 = vmatprep.subr.mxu0 %v1207
        %1393 = vmatpush1.msra.mxu0 %v1206
        %1394 = vmatprep.subr.mxu0 %v1205
        %1395 = vmatpush1.msra.mxu0 %v1204
        %1396 = vmatprep.subr.mxu0 %v1203
        %1397 = vmatpush1.msra.mxu0 %v1202
        %1398 = vmatprep.subr.mxu0 %v1201
        %1399 = vmatpush1.msra.mxu0 %v1200
        %1400 = vmatprep.subr.mxu0 %v1199
        %1401 = vmatpush1.msra.mxu0 %v1198
        %1402 = vmatprep.subr.mxu0 %v1197
        %1403 = vmatpush1.msra.mxu0 %v1196
        %1404 = vmatprep.subr.mxu0 %v1195
        %1405 = vmatpush1.msra.mxu0 %v1194
        %1406 = vmatprep.subr.mxu0 %v1193
        %1407 = vmatpush1.msra.mxu0 %v1192
        %1408 = vmatprep.subr.mxu0 %v1191
        %1409 = vmatpush1.msra.mxu0 %v1190
        %1410 = vmatprep.subr.mxu0 %v1189
        %1411 = vmatpush1.msra.mxu0 %v1188
        %1412 = vmatprep.subr.mxu0 %v1187
        %1413 = vmatpush1.msra.mxu0 %v1186
        %1414 = vmatprep.subr.mxu0 %v1185
        %1415 = vmatpush1.msra.mxu0 %v1184
        %1416 = vmatprep.subr.mxu0 %v1183
        %1417 = vmatpush1.msra.mxu0 %v1182
        %1418 = vmatprep.subr.mxu0 %v1181
        %1419 = vmatpush1.msra.mxu0 %v1180
        %1420 = vmatprep.subr.mxu0 %v1243
        %1421 = vmatpush2.msra.mxu0 %v1242
        %1422 = vmatprep.subr.mxu0 %v1241
        %1423 = vmatpush2.msra.mxu0 %v1240
        %1424 = vmatprep.subr.mxu0 %v1239
        %1425 = vmatpush2.msra.mxu0 %v1238
        %1426 = vmatprep.subr.mxu0 %v1237
        %1427 = vmatpush2.msra.mxu0 %v1236
        %1428 = vmatprep.subr.mxu0 %v1235
        %1429 = vmatpush2.msra.mxu0 %v1234
        %1430 = vmatprep.subr.mxu0 %v1233
        %1431 = vmatpush2.msra.mxu0 %v1232
        %1432 = vmatprep.subr.mxu0 %v1231
        %1433 = vmatpush2.msra.mxu0 %v1230
        %1434 = vmatprep.subr.mxu0 %v1229
        %1435 = vmatpush2.msra.mxu0 %v1228
        %1436 = vmatprep.subr.mxu0 %v1227
        %1437 = vmatpush2.msra.mxu0 %v1226
        %1438 = vmatprep.subr.mxu0 %v1225
        %1439 = vmatpush2.msra.mxu0 %v1224
        %1440 = vmatprep.subr.mxu0 %v1223
        %1441 = vmatpush2.msra.mxu0 %v1222
        %1442 = vmatprep.subr.mxu0 %v1221
        %1443 = vmatpush2.msra.mxu0 %v1220
        %1444 = vmatprep.subr.mxu0 %v1219
        %1445 = vmatpush2.msra.mxu0 %v1218
        %1446 = vmatprep.subr.mxu0 %v1217
        %1447 = vmatpush2.msra.mxu0 %v1216
        %1448 = vmatprep.subr.mxu0 %v1215
        %1449 = vmatpush2.msra.mxu0 %v1214
        %1450 = vmatprep.subr.mxu0 %v1213
        %1451 = vmatpush2.msra.mxu0 %v1212
        %1452 = vmatprep.mubr.f32.mxu0 %v1157
        %1453 = vmatmul.mubr.f32.gmra.mxu0 %v1156
        %v1454 = vpop.f32.mrf.mxu0
        %v1455 = vadd.f32 %v1361, %v1454
        %v1456 = vpop.f32.mrf.mxu0
        %v1457 = vadd.f32 %v1365, %v1456
        %1458 = vmatprep.mubr.f32.mxu0 %v1163
        %1459 = vmatmul.mubr.f32.gmra.mxu0 %v1162
        %v1460 = vpop.f32.mrf.mxu0
        %v1461 = vadd.f32 %v1361, %v1460
        %v1462 = vpop.f32.mrf.mxu0
        %v1463 = vadd.f32 %v1365, %v1462
        %1464 = vmatprep.mubr.f32.mxu0 %v1169
        %1465 = vmatmul.mubr.f32.gmra.mxu0 %v1168
        %v1466 = vpop.f32.mrf.mxu0
        %v1467 = vadd.f32 %v1361, %v1466
        %v1468 = vpop.f32.mrf.mxu0
        %v1469 = vadd.f32 %v1365, %v1468
        %1470 = vmatprep.mubr.f32.mxu0 %v1175
        %1471 = vmatmul.mubr.f32.gmra.mxu0 %v1174
        %v1472 = vpop.f32.mrf.mxu0
        %v1473 = vadd.f32 %v1361, %v1472
        %v1474 = vpop.f32.mrf.mxu0
        %v1475 = vadd.f32 %v1365, %v1474
        %1476 = vdwg.mxu0
        %1477 = vmatprep.subr.mxu0 %v1275
        %1478 = vmatpush1.msra.mxu0 %v1274
        %1479 = vmatprep.subr.mxu0 %v1273
        %1480 = vmatpush1.msra.mxu0 %v1272
        %1481 = vmatprep.subr.mxu0 %v1271
        %1482 = vmatpush1.msra.mxu0 %v1270
        %1483 = vmatprep.subr.mxu0 %v1269
        %1484 = vmatpush1.msra.mxu0 %v1268
        %1485 = vmatprep.subr.mxu0 %v1267
        %1486 = vmatpush1.msra.mxu0 %v1266
        %1487 = vmatprep.subr.mxu0 %v1265
        %1488 = vmatpush1.msra.mxu0 %v1264
        %1489 = vmatprep.subr.mxu0 %v1263
        %1490 = vmatpush1.msra.mxu0 %v1262
        %1491 = vmatprep.subr.mxu0 %v1261
        %1492 = vmatpush1.msra.mxu0 %v1260
        %1493 = vmatprep.subr.mxu0 %v1259
        %1494 = vmatpush1.msra.mxu0 %v1258
        %1495 = vmatprep.subr.mxu0 %v1257
        %1496 = vmatpush1.msra.mxu0 %v1256
        %1497 = vmatprep.subr.mxu0 %v1255
        %1498 = vmatpush1.msra.mxu0 %v1254
        %1499 = vmatprep.subr.mxu0 %v1253
        %1500 = vmatpush1.msra.mxu0 %v1252
        %1501 = vmatprep.subr.mxu0 %v1251
        %1502 = vmatpush1.msra.mxu0 %v1250
        %1503 = vmatprep.subr.mxu0 %v1249
        %1504 = vmatpush1.msra.mxu0 %v1248
        %1505 = vmatprep.subr.mxu0 %v1247
        %1506 = vmatpush1.msra.mxu0 %v1246
        %1507 = vmatprep.subr.mxu0 %v1245
        %1508 = vmatpush1.msra.mxu0 %v1244
        %1509 = vmatprep.subr.mxu0 %v1307
        %1510 = vmatpush2.msra.mxu0 %v1306
        %1511 = vmatprep.subr.mxu0 %v1305
        %1512 = vmatpush2.msra.mxu0 %v1304
        %1513 = vmatprep.subr.mxu0 %v1303
        %1514 = vmatpush2.msra.mxu0 %v1302
        %1515 = vmatprep.subr.mxu0 %v1301
        %1516 = vmatpush2.msra.mxu0 %v1300
        %1517 = vmatprep.subr.mxu0 %v1299
        %1518 = vmatpush2.msra.mxu0 %v1298
        %1519 = vmatprep.subr.mxu0 %v1297
        %1520 = vmatpush2.msra.mxu0 %v1296
        %1521 = vmatprep.subr.mxu0 %v1295
        %1522 = vmatpush2.msra.mxu0 %v1294
        %1523 = vmatprep.subr.mxu0 %v1293
        %1524 = vmatpush2.msra.mxu0 %v1292
        %1525 = vmatprep.subr.mxu0 %v1291
        %1526 = vmatpush2.msra.mxu0 %v1290
        %1527 = vmatprep.subr.mxu0 %v1289
        %1528 = vmatpush2.msra.mxu0 %v1288
        %1529 = vmatprep.subr.mxu0 %v1287
        %1530 = vmatpush2.msra.mxu0 %v1286
        %1531 = vmatprep.subr.mxu0 %v1285
        %1532 = vmatpush2.msra.mxu0 %v1284
        %1533 = vmatprep.subr.mxu0 %v1283
        %1534 = vmatpush2.msra.mxu0 %v1282
        %1535 = vmatprep.subr.mxu0 %v1281
        %1536 = vmatpush2.msra.mxu0 %v1280
        %1537 = vmatprep.subr.mxu0 %v1279
        %1538 = vmatpush2.msra.mxu0 %v1278
        %1539 = vmatprep.subr.mxu0 %v1277
        %1540 = vmatpush2.msra.mxu0 %v1276
        %1541 = vmatprep.mubr.f32.mxu0 %v1159
        %1542 = vmatmul.mubr.f32.gmra.mxu0 %v1158
        %v1543 = vpop.f32.mrf.mxu0
        %v1544 = vadd.f32 %v1455, %v1543
        %v1545 = vpop.f32.mrf.mxu0
        %v1546 = vadd.f32 %v1457, %v1545
        %1547 = vmatprep.mubr.f32.mxu0 %v1165
        %1548 = vmatmul.mubr.f32.gmra.mxu0 %v1164
        %v1549 = vpop.f32.mrf.mxu0
        %v1550 = vadd.f32 %v1461, %v1549
        %v1551 = vpop.f32.mrf.mxu0
        %v1552 = vadd.f32 %v1463, %v1551
        %1553 = vmatprep.mubr.f32.mxu0 %v1171
        %1554 = vmatmul.mubr.f32.gmra.mxu0 %v1170
        %v1555 = vpop.f32.mrf.mxu0
        %v1556 = vadd.f32 %v1467, %v1555
        %v1557 = vpop.f32.mrf.mxu0
        %v1558 = vadd.f32 %v1469, %v1557
        %1559 = vmatprep.mubr.f32.mxu0 %v1177
        %1560 = vmatmul.mubr.f32.gmra.mxu0 %v1176
        %v1561 = vpop.f32.mrf.mxu0
        %v1562 = vadd.f32 %v1473, %v1561
        %v1563 = vpop.f32.mrf.mxu0
        %v1564 = vadd.f32 %v1475, %v1563
        %1565 = vdwg.mxu0
        %1566 = vmatprep.subr.mxu0 %v1339
        %1567 = vmatpush1.msra.mxu0 %v1338
        %1568 = vmatprep.subr.mxu0 %v1337
        %1569 = vmatpush1.msra.mxu0 %v1336
        %1570 = vmatprep.subr.mxu0 %v1335
        %1571 = vmatpush1.msra.mxu0 %v1334
        %1572 = vmatprep.subr.mxu0 %v1333
        %1573 = vmatpush1.msra.mxu0 %v1332
        %1574 = vmatprep.subr.mxu0 %v1331
        %1575 = vmatpush1.msra.mxu0 %v1330
        %1576 = vmatprep.subr.mxu0 %v1329
        %1577 = vmatpush1.msra.mxu0 %v1328
        %1578 = vmatprep.subr.mxu0 %v1327
        %1579 = vmatpush1.msra.mxu0 %v1326
        %1580 = vmatprep.subr.mxu0 %v1325
        %1581 = vmatpush1.msra.mxu0 %v1324
        %1582 = vmatprep.subr.mxu0 %v1323
        %1583 = vmatpush1.msra.mxu0 %v1322
        %1584 = vmatprep.subr.mxu0 %v1321
        %1585 = vmatpush1.msra.mxu0 %v1320
        %1586 = vmatprep.subr.mxu0 %v1319
        %1587 = vmatpush1.msra.mxu0 %v1318
        %1588 = vmatprep.subr.mxu0 %v1317
        %1589 = vmatpush1.msra.mxu0 %v1316
        %1590 = vmatprep.subr.mxu0 %v1315
        %1591 = vmatpush1.msra.mxu0 %v1314
        %1592 = vmatprep.subr.mxu0 %v1313
        %1593 = vmatpush1.msra.mxu0 %v1312
        %1594 = vmatprep.subr.mxu0 %v1311
        %1595 = vmatpush1.msra.mxu0 %v1310
        %1596 = vmatprep.subr.mxu0 %v1309
        %1597 = vmatpush1.msra.mxu0 %v1308
        %1598 = vmatprep.subr.mxu0 0.0
        %1599 = vmatpush2.msra.mxu0 0.0
        %1600 = vmatprep.subr.mxu0 0.0
        %1601 = vmatpush2.msra.mxu0 0.0
        %1602 = vmatprep.subr.mxu0 0.0
        %1603 = vmatpush2.msra.mxu0 0.0
        %1604 = vmatprep.subr.mxu0 0.0
        %1605 = vmatpush2.msra.mxu0 0.0
        %1606 = vmatprep.subr.mxu0 0.0
        %1607 = vmatpush2.msra.mxu0 0.0
        %1608 = vmatprep.subr.mxu0 0.0
        %1609 = vmatpush2.msra.mxu0 0.0
        %1610 = vmatprep.subr.mxu0 0.0
        %1611 = vmatpush2.msra.mxu0 0.0
        %1612 = vmatprep.subr.mxu0 0.0
        %1613 = vmatpush2.msra.mxu0 0.0
        %1614 = vmatprep.subr.mxu0 %v1386
        %1615 = vmatpush2.msra.mxu0 %v1383
        %1616 = vmatprep.subr.mxu0 %v1353
        %1617 = vmatpush2.msra.mxu0 %v1352
        %1618 = vmatprep.subr.mxu0 %v1351
        %1619 = vmatpush2.msra.mxu0 %v1350
        %1620 = vmatprep.subr.mxu0 %v1349
        %1621 = vmatpush2.msra.mxu0 %v1348
        %1622 = vmatprep.subr.mxu0 %v1347
        %1623 = vmatpush2.msra.mxu0 %v1346
        %1624 = vmatprep.subr.mxu0 %v1345
        %1625 = vmatpush2.msra.mxu0 %v1344
        %1626 = vmatprep.subr.mxu0 %v1343
        %1627 = vmatpush2.msra.mxu0 %v1342
        %1628 = vmatprep.subr.mxu0 %v1341
        %1629 = vmatpush2.msra.mxu0 %v1340
        %1630 = vmatprep.mubr.f32.mxu0 %v1370
        %1631 = vmatmul.mubr.f32.gmra.mxu0 %v1160
        %v1632 = vpop.f32.mrf.mxu0
        %v1633 = vadd.f32 %v1544, %v1632
        %v1634 = vpop.f32.mrf.mxu0
        %v1635 = vadd.f32 %v1546, %v1634
        %1636 = vmatprep.mubr.f32.mxu0 %v1373
        %1637 = vmatmul.mubr.f32.gmra.mxu0 %v1166
        %v1638 = vpop.f32.mrf.mxu0
        %v1639 = vadd.f32 %v1550, %v1638
        %v1640 = vpop.f32.mrf.mxu0
        %v1641 = vadd.f32 %v1552, %v1640
        %1642 = vmatprep.mubr.f32.mxu0 %v1376
        %1643 = vmatmul.mubr.f32.gmra.mxu0 %v1172
        %v1644 = vpop.f32.mrf.mxu0
        %v1645 = vadd.f32 %v1556, %v1644
        %v1646 = vpop.f32.mrf.mxu0
        %v1647 = vadd.f32 %v1558, %v1646
        %1648 = vmatprep.mubr.f32.mxu0 %v1379
        %1649 = vmatmul.mubr.f32.gmra.mxu0 %v1178
        %v1650 = vpop.f32.mrf.mxu0
        %v1651 = vadd.f32 %v1562, %v1650
        %v1652 = vpop.f32.mrf.mxu0
        %v1653 = vadd.f32 %v1564, %v1652
        %1654 = vdwg.mxu0
        %v1655 = vmax.f32 %v1633, 0.0
        %v1656 = vmax.f32 %v1635, 0.0
        %v1657 = vmax.f32 %v1639, 0.0
        %v1658 = vmax.f32 %v1641, 0.0
        %v1659 = vmax.f32 %v1645, 0.0
        %v1660 = vmax.f32 %v1647, 0.0
        %v1661 = vmax.f32 %v1651, 0.0
        %v1662 = vmax.f32 %v1653, 0.0
        %v1663 = vld [vmem:[%s3] sm:$0xff]
        %v1664 = vld [vmem:[%s3 + $0x8] sm:$0x3f]
        %v1666 = vsel %vm496, %v1663, 0
        %v1669 = vsel %vm496, %v1664, 0
        %v1672 = vsel %vm1381, %v1661, 0
        %v1675 = vsel %vm1381, %v1662, 0
        %1677 = vmatprep.subr.mxu0 0.0
        %1678 = vmatpush1.msra.mxu0 0.0
        %1679 = vmatprep.subr.mxu0 0.0
        %1680 = vmatpush1.msra.mxu0 0.0
        %1681 = vmatprep.subr.mxu0 0.0
        %1682 = vmatpush1.msra.mxu0 0.0
        %1683 = vmatprep.subr.mxu0 0.0
        %1684 = vmatpush1.msra.mxu0 0.0
        %1685 = vmatprep.subr.mxu0 0.0
        %1686 = vmatpush1.msra.mxu0 0.0
        %1687 = vmatprep.subr.mxu0 0.0
        %1688 = vmatpush1.msra.mxu0 0.0
        %1689 = vmatprep.subr.mxu0 0.0
        %1690 = vmatpush1.msra.mxu0 0.0
        %1691 = vmatprep.subr.mxu0 0.0
        %1692 = vmatpush1.msra.mxu0 0.0
        %1693 = vmatprep.subr.mxu0 0.0
        %1694 = vmatpush1.msra.mxu0 0.0
        %1695 = vmatprep.subr.mxu0 0.0
        %1696 = vmatpush1.msra.mxu0 0.0
        %1697 = vmatprep.subr.mxu0 0.0
        %1698 = vmatpush1.msra.mxu0 0.0
        %1699 = vmatprep.subr.mxu0 0.0
        %1700 = vmatpush1.msra.mxu0 0.0
        %1701 = vmatprep.subr.mxu0 %v1675
        %1702 = vmatpush1.msra.mxu0 %v1672
        %1703 = vmatprep.subr.mxu0 %v1660
        %1704 = vmatpush1.msra.mxu0 %v1659
        %1705 = vmatprep.subr.mxu0 %v1658
        %1706 = vmatpush1.msra.mxu0 %v1657
        %1707 = vmatprep.subr.mxu0 %v1656
        %1708 = vmatpush1.msra.mxu0 %v1655
        %1709 = vmatprep.subr.mxu0 0.0
        %1710 = vmatpush2.msra.mxu0 0.0
        %1711 = vmatprep.subr.mxu0 0.0
        %1712 = vmatpush2.msra.mxu0 0.0
        %1713 = vmatprep.subr.mxu0 0.0
        %1714 = vmatpush2.msra.mxu0 0.0
        %1715 = vmatprep.subr.mxu0 0.0
        %1716 = vmatpush2.msra.mxu0 0.0
        %1717 = vmatprep.subr.mxu0 0.0
        %1718 = vmatpush2.msra.mxu0 0.0
        %1719 = vmatprep.subr.mxu0 0.0
        %1720 = vmatpush2.msra.mxu0 0.0
        %1721 = vmatprep.subr.mxu0 0.0
        %1722 = vmatpush2.msra.mxu0 0.0
        %1723 = vmatprep.subr.mxu0 0.0
        %1724 = vmatpush2.msra.mxu0 0.0
        %1725 = vmatprep.subr.mxu0 0.0
        %1726 = vmatpush2.msra.mxu0 0.0
        %1727 = vmatprep.subr.mxu0 0.0
        %1728 = vmatpush2.msra.mxu0 0.0
        %1729 = vmatprep.subr.mxu0 0.0
        %1730 = vmatpush2.msra.mxu0 0.0
        %1731 = vmatprep.subr.mxu0 0.0
        %1732 = vmatpush2.msra.mxu0 0.0
        %1733 = vmatprep.subr.mxu0 0.0
        %1734 = vmatpush2.msra.mxu0 0.0
        %1735 = vmatprep.subr.mxu0 0.0
        %1736 = vmatpush2.msra.mxu0 0.0
        %1737 = vmatprep.subr.mxu0 0.0
        %1738 = vmatpush2.msra.mxu0 0.0
        %1739 = vmatprep.subr.mxu0 0.0
        %1740 = vmatpush2.msra.mxu0 0.0
        %1741 = vmatprep.mubr.f32.mxu0 0.0
        %1742 = vmatmul.mubr.f32.gmra.mxu0 %v1666
        %v1743 = vpop.f32.mrf.mxu0
        %v1744 = vadd.f32 0.0, %v1743
        %v1745 = vpop.f32.mrf.mxu0
        %v1746 = vadd.f32 0.0, %v1745
        %1747 = vmatprep.mubr.f32.mxu0 0.0
        %1748 = vmatmul.mubr.f32.gmra.mxu0 %v1669
        %v1749 = vpop.f32.mrf.mxu0
        %v1750 = vadd.f32 0.0, %v1749
        %v1751 = vpop.f32.mrf.mxu0
        %v1752 = vadd.f32 0.0, %v1751
        %1753 = vdwg.mxu0
        %v1754 = vld [vmem:[%s4] sm:$0xff]
        %v1755 = vld [vmem:[%s4 + $0x8] sm:$0xff]
        %v1756 = vld [vmem:[%s4 + $0x10] sm:$0xff]
        %v1757 = vld [vmem:[%s4 + $0x18] sm:$0xff]
        %v1758 = vld [vmem:[%s4 + $0x20] sm:$0xff]
        %v1759 = vld [vmem:[%s4 + $0x28] sm:$0xff]
        %v1760 = vld [vmem:[%s4 + $0x30] sm:$0xff]
        %v1761 = vld [vmem:[%s4 + $0x38] sm:$0xff]
        %v1762 = vld [vmem:[%s4 + $0x40] sm:$0xff]
        %v1763 = vld [vmem:[%s4 + $0x48] sm:$0xff]
        %v1764 = vld [vmem:[%s4 + $0x50] sm:$0xff]
        %v1765 = vld [vmem:[%s4 + $0x58] sm:$0xff]
        %v1766 = vld [vmem:[%s4 + $0x60] sm:$0xff]
        %v1767 = vld [vmem:[%s4 + $0x68] sm:$0xff]
        %v1768 = vld [vmem:[%s4 + $0x70] sm:$0xff]
        %v1769 = vld [vmem:[%s4 + $0x78] sm:$0xff]
        %v1770 = vld [vmem:[%s4 + $0x80] sm:$0xff]
        %v1771 = vld [vmem:[%s4 + $0x88] sm:$0xff]
        %v1772 = vld [vmem:[%s4 + $0x90] sm:$0xff]
        %v1773 = vld [vmem:[%s4 + $0x98] sm:$0xff]
        %v1774 = vld [vmem:[%s4 + $0xa0] sm:$0xff]
        %vm1775 = vcmask 326656
        %v1777 = vsel %vm1775, %v1746, 0
        %v1780 = vsel %vm1775, %v1752, 0
        %1782 = vmatprep.subr.mxu0 0.0
        %1783 = vmatpush1.msra.mxu0 %v1769
        %1784 = vmatprep.subr.mxu0 0.0
        %1785 = vmatpush1.msra.mxu0 %v1768
        %1786 = vmatprep.subr.mxu0 0.0
        %1787 = vmatpush1.msra.mxu0 %v1767
        %1788 = vmatprep.subr.mxu0 0.0
        %1789 = vmatpush1.msra.mxu0 %v1766
        %1790 = vmatprep.subr.mxu0 0.0
        %1791 = vmatpush1.msra.mxu0 %v1765
        %1792 = vmatprep.subr.mxu0 0.0
        %1793 = vmatpush1.msra.mxu0 %v1764
        %1794 = vmatprep.subr.mxu0 0.0
        %1795 = vmatpush1.msra.mxu0 %v1763
        %1796 = vmatprep.subr.mxu0 0.0
        %1797 = vmatpush1.msra.mxu0 %v1762
        %1798 = vmatprep.subr.mxu0 0.0
        %1799 = vmatpush1.msra.mxu0 %v1761
        %1800 = vmatprep.subr.mxu0 0.0
        %1801 = vmatpush1.msra.mxu0 %v1760
        %1802 = vmatprep.subr.mxu0 0.0
        %1803 = vmatpush1.msra.mxu0 %v1759
        %1804 = vmatprep.subr.mxu0 0.0
        %1805 = vmatpush1.msra.mxu0 %v1758
        %1806 = vmatprep.subr.mxu0 0.0
        %1807 = vmatpush1.msra.mxu0 %v1757
        %1808 = vmatprep.subr.mxu0 0.0
        %1809 = vmatpush1.msra.mxu0 %v1756
        %1810 = vmatprep.subr.mxu0 0.0
        %1811 = vmatpush1.msra.mxu0 %v1755
        %1812 = vmatprep.subr.mxu0 0.0
        %1813 = vmatpush1.msra.mxu0 %v1754
        %1814 = vmatprep.subr.mxu0 0.0
        %1815 = vmatpush2.msra.mxu0 0.0
        %1816 = vmatprep.subr.mxu0 0.0
        %1817 = vmatpush2.msra.mxu0 0.0
        %1818 = vmatprep.subr.mxu0 0.0
        %1819 = vmatpush2.msra.mxu0 0.0
        %1820 = vmatprep.subr.mxu0 0.0
        %1821 = vmatpush2.msra.mxu0 0.0
        %1822 = vmatprep.subr.mxu0 0.0
        %1823 = vmatpush2.msra.mxu0 0.0
        %1824 = vmatprep.subr.mxu0 0.0
        %1825 = vmatpush2.msra.mxu0 0.0
        %1826 = vmatprep.subr.mxu0 0.0
        %1827 = vmatpush2.msra.mxu0 0.0
        %1828 = vmatprep.subr.mxu0 0.0
        %1829 = vmatpush2.msra.mxu0 0.0
        %1830 = vmatprep.subr.mxu0 0.0
        %1831 = vmatpush2.msra.mxu0 0.0
        %1832 = vmatprep.subr.mxu0 0.0
        %1833 = vmatpush2.msra.mxu0 0.0
        %1834 = vmatprep.subr.mxu0 0.0
        %1835 = vmatpush2.msra.mxu0 0.0
        %1836 = vmatprep.subr.mxu0 0.0
        %1837 = vmatpush2.msra.mxu0 %v1774
        %1838 = vmatprep.subr.mxu0 0.0
        %1839 = vmatpush2.msra.mxu0 %v1773
        %1840 = vmatprep.subr.mxu0 0.0
        %1841 = vmatpush2.msra.mxu0 %v1772
        %1842 = vmatprep.subr.mxu0 0.0
        %1843 = vmatpush2.msra.mxu0 %v1771
        %1844 = vmatprep.subr.mxu0 0.0
        %1845 = vmatpush2.msra.mxu0 %v1770
        %1846 = vmatprep.mubr.f32.mxu0 %v1777
        %1847 = vmatmul.mubr.f32.gmra.mxu0 %v1744
        %v1848 = vpop.f32.mrf.mxu0
        %v1849 = vadd.f32 0.0, %v1848
        %v1850 = vpop.f32.mrf.mxu0
        %1851 = vmatprep.mubr.f32.mxu0 %v1780
        %1852 = vmatmul.mubr.f32.gmra.mxu0 %v1750
        %v1853 = vpop.f32.mrf.mxu0
        %v1854 = vadd.f32 0.0, %v1853
        %v1855 = vpop.f32.mrf.mxu0
        %1856 = vdwg.mxu0
        %1857 = vst.msk [vmem:[#allocation3] sm:$0xff] %vm602, %v1849
        %1858 = vst.msk [vmem:[#allocation3 + $0x30] sm:$0xf] %vm610, %v1854
        %1861 = vrot.lane.b32.xlu0 %v1849, 11
        %v1862 = vpop.permute.xlu0 %1861
        %1863 = vrot.lane.b32.xlu0 %v1854, 11
        %v1864 = vpop.permute.xlu0 %1863
        %vm1867 = vcmask 195680
        %1868 = vst.msk [vmem:[#allocation3] sm:$0xff] %vm1867, %v1862
        %vm1869 = vcmask 191584
        %1870 = vst.msk [vmem:[#allocation3 + $0x30] sm:$0xf] %vm1869, %v1864
        %1871 = vrot.lane.b32.xlu0 %v1849, 22
        %v1872 = vpop.permute.xlu0 %1871
        %1873 = vrot.lane.b32.xlu0 %v1854, 22
        %v1874 = vpop.permute.xlu0 %1873
        %vm1877 = vcmask 294080
        %1878 = vst.msk [vmem:[#allocation3] sm:$0xff] %vm1877, %v1872
        %vm1879 = vcmask 289984
        %1880 = vst.msk [vmem:[#allocation3 + $0x30] sm:$0xf] %vm1879, %v1874
        %vm1881 = vcmask 1046528
        %v1882 = vrot.slane %v1849, 1
        %v1883 = vrot.slane %v1854, 1
        %v1884 = vsel %vm1881, %v1882, %v1883
        %1885 = vrot.lane.b32.xlu0 %v1884, 36
        %v1886 = vpop.permute.xlu0 %1885
        %1887 = vrot.lane.b32.xlu0 %v1883, 36
        %v1888 = vpop.permute.xlu0 %1887
        %vm1891 = vcmask 392480
        %1892 = vst.msk [vmem:[#allocation3] sm:$0xff] %vm1891, %v1886
        %vm1893 = vcmask 388384
        %1894 = vst.msk [vmem:[#allocation3 + $0x30] sm:$0xf] %vm1893, %v1888
        %1895 = vrot.lane.b32.xlu0 %v1884, 47
        %v1896 = vpop.permute.xlu0 %1895
        %1897 = vrot.lane.b32.xlu0 %v1883, 47
        %v1898 = vpop.permute.xlu0 %1897
        %vm1901 = vcmask 490880
        %1902 = vst.msk [vmem:[#allocation3] sm:$0xff] %vm1901, %v1896
        %vm1903 = vcmask 486784
        %1904 = vst.msk [vmem:[#allocation3 + $0x30] sm:$0xf] %vm1903, %v1898
        %1905 = vrot.lane.b32.xlu0 %v1884, 58
        %v1906 = vpop.permute.xlu0 %1905
        %1907 = vrot.lane.b32.xlu0 %v1883, 58
        %v1908 = vpop.permute.xlu0 %1907
        %vm1911 = vcmask 589280
        %1912 = vst.msk [vmem:[#allocation3] sm:$0xff] %vm1911, %v1906
        %vm1913 = vcmask 585184
        %1914 = vst.msk [vmem:[#allocation3 + $0x30] sm:$0xf] %vm1913, %v1908
        %vm1915 = vcmask 1045504
        %v1916 = vrot.slane %v1849, 2
        %v1917 = vrot.slane %v1854, 2
        %v1918 = vsel %vm1915, %v1916, %v1917
        %1919 = vrot.lane.b32.xlu0 %v1918, 72
        %v1920 = vpop.permute.xlu0 %1919
        %1921 = vrot.lane.b32.xlu0 %v1917, 72
        %v1922 = vpop.permute.xlu0 %1921
        %vm1925 = vcmask 687680
        %1926 = vst.msk [vmem:[#allocation3] sm:$0xff] %vm1925, %v1920
        %vm1927 = vcmask 683584
        %1928 = vst.msk [vmem:[#allocation3 + $0x30] sm:$0xf] %vm1927, %v1922
        %1929 = vrot.lane.b32.xlu0 %v1918, 83
        %v1930 = vpop.permute.xlu0 %1929
        %1931 = vrot.lane.b32.xlu0 %v1917, 83
        %v1932 = vpop.permute.xlu0 %1931
        %vm1935 = vcmask 786080
        %1936 = vst.msk [vmem:[#allocation3] sm:$0xff] %vm1935, %v1930
        %vm1937 = vcmask 781984
        %1938 = vst.msk [vmem:[#allocation3 + $0x30] sm:$0xf] %vm1937, %v1932
        %1939 = vrot.lane.b32.xlu0 %v1918, 94
        %v1940 = vpop.permute.xlu0 %1939
        %1941 = vrot.lane.b32.xlu0 %v1917, 94
        %v1942 = vpop.permute.xlu0 %1941
        %vm1945 = vcmask 884480
        %1946 = vst.msk [vmem:[#allocation3] sm:$0xff] %vm1945, %v1940
        %vm1947 = vcmask 880384
        %1948 = vst.msk [vmem:[#allocation3 + $0x30] sm:$0xf] %vm1947, %v1942
        %1949 = vrot.lane.b32.xlu0 %v1849, 94
        %v1950 = vpop.permute.xlu0 %1949
        %1951 = vrot.lane.b32.xlu0 %v1854, 94
        %v1952 = vpop.permute.xlu0 %1951
        %vm1955 = vcmask 982880
        %1956 = vst.msk [vmem:[#allocation3] sm:$0xff] %vm1955, %v1950
        %vm1957 = vcmask 978784
        %1958 = vst.msk [vmem:[#allocation3 + $0x30] sm:$0xf] %vm1957, %v1952
        %1959 = vrot.lane.b32.xlu0 %v1849, 105
        %v1960 = vpop.permute.xlu0 %1959
        %1961 = vrot.lane.b32.xlu0 %v1854, 105
        %v1962 = vpop.permute.xlu0 %1961
        %1965 = vst.msk [vmem:[#allocation3] sm:$0xff] %vm982, %v1960
        %1966 = vst.msk [vmem:[#allocation3 + $0x8] sm:$0xff] %vm1094, %v1960
        %1967 = vst.msk [vmem:[#allocation3 + $0x30] sm:$0xf] %vm990, %v1962
        %1968 = vst.msk [vmem:[#allocation3 + $0x38] sm:$0xf] %vm1102, %v1962
        %1969 = vrot.lane.b32.xlu0 %v1849, 116
        %v1970 = vpop.permute.xlu0 %1969
        %1971 = vrot.lane.b32.xlu0 %v1854, 116
        %v1972 = vpop.permute.xlu0 %1971
        %vm1975 = vcmask 130080
        %1976 = vst.msk [vmem:[#allocation3 + $0x8] sm:$0xff] %vm1975, %v1970
        %vm1977 = vcmask 125984
        %1978 = vst.msk [vmem:[#allocation3 + $0x38] sm:$0xf] %vm1977, %v1972
        %1979 = vrot.lane.b32.xlu0 %v1884, 2
        %v1980 = vpop.permute.xlu0 %1979
        %1981 = vrot.lane.b32.xlu0 %v1883, 2
        %v1982 = vpop.permute.xlu0 %1981
        %vm1985 = vcmask 228480
        %1986 = vst.msk [vmem:[#allocation3 + $0x8] sm:$0xff] %vm1985, %v1980
        %vm1987 = vcmask 224384
        %1988 = vst.msk [vmem:[#allocation3 + $0x38] sm:$0xf] %vm1987, %v1982
        %1989 = vrot.lane.b32.xlu0 %v1884, 13
        %v1990 = vpop.permute.xlu0 %1989
        %1991 = vrot.lane.b32.xlu0 %v1883, 13
        %v1992 = vpop.permute.xlu0 %1991
        %vm1995 = vcmask 326880
        %1996 = vst.msk [vmem:[#allocation3 + $0x8] sm:$0xff] %vm1995, %v1990
        %vm1997 = vcmask 322784
        %1998 = vst.msk [vmem:[#allocation3 + $0x38] sm:$0xf] %vm1997, %v1992
        %1999 = vrot.lane.b32.xlu0 %v1884, 24
        %v2000 = vpop.permute.xlu0 %1999
        %2001 = vrot.lane.b32.xlu0 %v1883, 24
        %v2002 = vpop.permute.xlu0 %2001
        %vm2005 = vcmask 425280
        %2006 = vst.msk [vmem:[#allocation3 + $0x8] sm:$0xff] %vm2005, %v2000
        %vm2007 = vcmask 421184
        %2008 = vst.msk [vmem:[#allocation3 + $0x38] sm:$0xf] %vm2007, %v2002
        %2009 = vrot.lane.b32.xlu0 %v1918, 38
        %v2010 = vpop.permute.xlu0 %2009
        %2011 = vrot.lane.b32.xlu0 %v1917, 38
        %v2012 = vpop.permute.xlu0 %2011
        %vm2015 = vcmask 523680
        %2016 = vst.msk [vmem:[#allocation3 + $0x8] sm:$0xff] %vm2015, %v2010
        %vm2017 = vcmask 519584
        %2018 = vst.msk [vmem:[#allocation3 + $0x38] sm:$0xf] %vm2017, %v2012
        %2019 = vrot.lane.b32.xlu0 %v1918, 49
        %v2020 = vpop.permute.xlu0 %2019
        %2021 = vrot.lane.b32.xlu0 %v1917, 49
        %v2022 = vpop.permute.xlu0 %2021
        %vm2025 = vcmask 622080
        %2026 = vst.msk [vmem:[#allocation3 + $0x8] sm:$0xff] %vm2025, %v2020
        %vm2027 = vcmask 617984
        %2028 = vst.msk [vmem:[#allocation3 + $0x38] sm:$0xf] %vm2027, %v2022
        %2029 = vrot.lane.b32.xlu0 %v1918, 60
        %v2030 = vpop.permute.xlu0 %2029
        %2031 = vrot.lane.b32.xlu0 %v1917, 60
        %v2032 = vpop.permute.xlu0 %2031
        %vm2035 = vcmask 720480
        %2036 = vst.msk [vmem:[#allocation3 + $0x8] sm:$0xff] %vm2035, %v2030
        %vm2037 = vcmask 716384
        %2038 = vst.msk [vmem:[#allocation3 + $0x38] sm:$0xf] %vm2037, %v2032
        %2039 = vrot.lane.b32.xlu0 %v1849, 60
        %v2040 = vpop.permute.xlu0 %2039
        %2041 = vrot.lane.b32.xlu0 %v1854, 60
        %v2042 = vpop.permute.xlu0 %2041
        %vm2045 = vcmask 818880
        %2046 = vst.msk [vmem:[#allocation3 + $0x8] sm:$0xff] %vm2045, %v2040
        %vm2047 = vcmask 814784
        %2048 = vst.msk [vmem:[#allocation3 + $0x38] sm:$0xf] %vm2047, %v2042
        %2049 = vrot.lane.b32.xlu0 %v1849, 71
        %v2050 = vpop.permute.xlu0 %2049
        %2051 = vrot.lane.b32.xlu0 %v1854, 71
        %v2052 = vpop.permute.xlu0 %2051
        %vm2055 = vcmask 917280
        %2056 = vst.msk [vmem:[#allocation3 + $0x8] sm:$0xff] %vm2055, %v2050
        %vm2057 = vcmask 913184
        %2058 = vst.msk [vmem:[#allocation3 + $0x38] sm:$0xf] %vm2057, %v2052
        %2059 = vrot.lane.b32.xlu0 %v1849, 82
        %v2060 = vpop.permute.xlu0 %2059
        %2061 = vrot.lane.b32.xlu0 %v1854, 82
        %v2062 = vpop.permute.xlu0 %2061
        %vm2065 = vcmask 1015680
        %2066 = vst.msk [vmem:[#allocation3 + $0x8] sm:$0xff] %vm2065, %v2060
        %vm2067 = vcmask 1011584
        %2068 = vst.msk [vmem:[#allocation3 + $0x38] sm:$0xf] %vm2067, %v2062
        %2069 = vrot.lane.b32.xlu0 %v1884, 96
        %v2070 = vpop.permute.xlu0 %2069
        %2071 = vrot.lane.b32.xlu0 %v1883, 96
        %v2072 = vpop.permute.xlu0 %2071
        %2075 = vst.msk [vmem:[#allocation3 + $0x8] sm:$0xff] %vm736, %v2070
        %2076 = vst.msk [vmem:[#allocation3 + $0x10] sm:$0xff] %vm848, %v2070
        %2077 = vst.msk [vmem:[#allocation3 + $0x38] sm:$0xf] %vm744, %v2072
        %2078 = vst.msk [vmem:[#allocation3 + $0x40] sm:$0xf] %vm856, %v2072
        %2079 = vrot.lane.b32.xlu0 %v1884, 107
        %v2080 = vpop.permute.xlu0 %2079
        %2081 = vrot.lane.b32.xlu0 %v1883, 107
        %v2082 = vpop.permute.xlu0 %2081
        %vm2085 = vcmask 162880
        %2086 = vst.msk [vmem:[#allocation3 + $0x10] sm:$0xff] %vm2085, %v2080
        %vm2087 = vcmask 158784
        %2088 = vst.msk [vmem:[#allocation3 + $0x40] sm:$0xf] %vm2087, %v2082
        %2089 = vrot.lane.b32.xlu0 %v1884, 118
        %v2090 = vpop.permute.xlu0 %2089
        %2091 = vrot.lane.b32.xlu0 %v1883, 118
        %v2092 = vpop.permute.xlu0 %2091
        %vm2095 = vcmask 261280
        %2096 = vst.msk [vmem:[#allocation3 + $0x10] sm:$0xff] %vm2095, %v2090
        %vm2097 = vcmask 257184
        %2098 = vst.msk [vmem:[#allocation3 + $0x40] sm:$0xf] %vm2097, %v2092
        %2099 = vrot.lane.b32.xlu0 %v1918, 4
        %v2100 = vpop.permute.xlu0 %2099
        %2101 = vrot.lane.b32.xlu0 %v1917, 4
        %v2102 = vpop.permute.xlu0 %2101
        %vm2105 = vcmask 359680
        %2106 = vst.msk [vmem:[#allocation3 + $0x10] sm:$0xff] %vm2105, %v2100
        %vm2107 = vcmask 355584
        %2108 = vst.msk [vmem:[#allocation3 + $0x40] sm:$0xf] %vm2107, %v2102
        %2109 = vrot.lane.b32.xlu0 %v1918, 15
        %v2110 = vpop.permute.xlu0 %2109
        %2111 = vrot.lane.b32.xlu0 %v1917, 15
        %v2112 = vpop.permute.xlu0 %2111
        %vm2115 = vcmask 458080
        %2116 = vst.msk [vmem:[#allocation3 + $0x10] sm:$0xff] %vm2115, %v2110
        %vm2117 = vcmask 453984
        %2118 = vst.msk [vmem:[#allocation3 + $0x40] sm:$0xf] %vm2117, %v2112
        %2119 = vrot.lane.b32.xlu0 %v1918, 26
        %v2120 = vpop.permute.xlu0 %2119
        %2121 = vrot.lane.b32.xlu0 %v1917, 26
        %v2122 = vpop.permute.xlu0 %2121
        %vm2125 = vcmask 556480
        %2126 = vst.msk [vmem:[#allocation3 + $0x10] sm:$0xff] %vm2125, %v2120
        %vm2127 = vcmask 552384
        %2128 = vst.msk [vmem:[#allocation3 + $0x40] sm:$0xf] %vm2127, %v2122
        %2129 = vrot.lane.b32.xlu0 %v1849, 26
        %v2130 = vpop.permute.xlu0 %2129
        %2131 = vrot.lane.b32.xlu0 %v1854, 26
        %v2132 = vpop.permute.xlu0 %2131
        %vm2135 = vcmask 654880
        %2136 = vst.msk [vmem:[#allocation3 + $0x10] sm:$0xff] %vm2135, %v2130
        %vm2137 = vcmask 650784
        %2138 = vst.msk [vmem:[#allocation3 + $0x40] sm:$0xf] %vm2137, %v2132
        %2139 = vrot.lane.b32.xlu0 %v1849, 37
        %v2140 = vpop.permute.xlu0 %2139
        %2141 = vrot.lane.b32.xlu0 %v1854, 37
        %v2142 = vpop.permute.xlu0 %2141
        %vm2145 = vcmask 753280
        %2146 = vst.msk [vmem:[#allocation3 + $0x10] sm:$0xff] %vm2145, %v2140
        %vm2147 = vcmask 749184
        %2148 = vst.msk [vmem:[#allocation3 + $0x40] sm:$0xf] %vm2147, %v2142
        %2149 = vrot.lane.b32.xlu0 %v1849, 48
        %v2150 = vpop.permute.xlu0 %2149
        %2151 = vrot.lane.b32.xlu0 %v1854, 48
        %v2152 = vpop.permute.xlu0 %2151
        %vm2155 = vcmask 851680
        %2156 = vst.msk [vmem:[#allocation3 + $0x10] sm:$0xff] %vm2155, %v2150
        %vm2157 = vcmask 847584
        %2158 = vst.msk [vmem:[#allocation3 + $0x40] sm:$0xf] %vm2157, %v2152
        %2159 = vrot.lane.b32.xlu0 %v1884, 62
        %v2160 = vpop.permute.xlu0 %2159
        %2161 = vrot.lane.b32.xlu0 %v1883, 62
        %v2162 = vpop.permute.xlu0 %2161
        %vm2165 = vcmask 950080
        %2166 = vst.msk [vmem:[#allocation3 + $0x10] sm:$0xff] %vm2165, %v2160
        %vm2167 = vcmask 945984
        %2168 = vst.msk [vmem:[#allocation3 + $0x40] sm:$0xf] %vm2167, %v2162
        %2169 = vrot.lane.b32.xlu0 %v1884, 73
        %v2170 = vpop.permute.xlu0 %2169
        %2171 = vrot.lane.b32.xlu0 %v1883, 73
        %v2172 = vpop.permute.xlu0 %2171
        %vm2175 = vcmask 1048480
        %2176 = vst.msk [vmem:[#allocation3 + $0x10] sm:$0xff] %vm2175, %v2170
        %vm2177 = vcmask 1044384
        %2178 = vst.msk [vmem:[#allocation3 + $0x40] sm:$0xf] %vm2177, %v2172
        %2179 = vrot.lane.b32.xlu0 %v1884, 84
        %v2180 = vpop.permute.xlu0 %2179
        %2181 = vrot.lane.b32.xlu0 %v1883, 84
        %v2182 = vpop.permute.xlu0 %2181
        %2185 = vst.msk [vmem:[#allocation3 + $0x18] sm:$0xff] %vm602, %v2180
        %2186 = vst.msk [vmem:[#allocation3 + $0x48] sm:$0xf] %vm610, %v2182
        %2187 = vrot.lane.b32.xlu0 %v1918, 98
        %v2188 = vpop.permute.xlu0 %2187
        %2189 = vrot.lane.b32.xlu0 %v1917, 98
        %v2190 = vpop.permute.xlu0 %2189
        %2193 = vst.msk [vmem:[#allocation3 + $0x18] sm:$0xff] %vm1867, %v2188
        %2194 = vst.msk [vmem:[#allocation3 + $0x48] sm:$0xf] %vm1869, %v2190
        %2195 = vrot.lane.b32.xlu0 %v1918, 109
        %v2196 = vpop.permute.xlu0 %2195
        %2197 = vrot.lane.b32.xlu0 %v1917, 109
        %v2198 = vpop.permute.xlu0 %2197
        %2201 = vst.msk [vmem:[#allocation3 + $0x18] sm:$0xff] %vm1877, %v2196
        %2202 = vst.msk [vmem:[#allocation3 + $0x48] sm:$0xf] %vm1879, %v2198
        %2203 = vrot.lane.b32.xlu0 %v1918, 120
        %v2204 = vpop.permute.xlu0 %2203
        %2205 = vrot.lane.b32.xlu0 %v1917, 120
        %v2206 = vpop.permute.xlu0 %2205
        %2209 = vst.msk [vmem:[#allocation3 + $0x18] sm:$0xff] %vm1891, %v2204
        %2210 = vst.msk [vmem:[#allocation3 + $0x48] sm:$0xf] %vm1893, %v2206
        %2211 = vrot.lane.b32.xlu0 %v1849, 120
        %v2212 = vpop.permute.xlu0 %2211
        %2213 = vrot.lane.b32.xlu0 %v1854, 120
        %v2214 = vpop.permute.xlu0 %2213
        %2217 = vst.msk [vmem:[#allocation3 + $0x18] sm:$0xff] %vm1901, %v2212
        %2218 = vst.msk [vmem:[#allocation3 + $0x48] sm:$0xf] %vm1903, %v2214
        %2219 = vrot.lane.b32.xlu0 %v1849, 3
        %v2220 = vpop.permute.xlu0 %2219
        %2221 = vrot.lane.b32.xlu0 %v1854, 3
        %v2222 = vpop.permute.xlu0 %2221
        %2225 = vst.msk [vmem:[#allocation3 + $0x18] sm:$0xff] %vm1911, %v2220
        %2226 = vst.msk [vmem:[#allocation3 + $0x48] sm:$0xf] %vm1913, %v2222
        %2227 = vrot.lane.b32.xlu0 %v1849, 14
        %v2228 = vpop.permute.xlu0 %2227
        %2229 = vrot.lane.b32.xlu0 %v1854, 14
        %v2230 = vpop.permute.xlu0 %2229
        %2233 = vst.msk [vmem:[#allocation3 + $0x18] sm:$0xff] %vm1925, %v2228
        %2234 = vst.msk [vmem:[#allocation3 + $0x48] sm:$0xf] %vm1927, %v2230
        %2235 = vrot.lane.b32.xlu0 %v1884, 28
        %v2236 = vpop.permute.xlu0 %2235
        %2237 = vrot.lane.b32.xlu0 %v1883, 28
        %v2238 = vpop.permute.xlu0 %2237
        %2241 = vst.msk [vmem:[#allocation3 + $0x18] sm:$0xff] %vm1935, %v2236
        %2242 = vst.msk [vmem:[#allocation3 + $0x48] sm:$0xf] %vm1937, %v2238
        %2243 = vrot.lane.b32.xlu0 %v1884, 39
        %v2244 = vpop.permute.xlu0 %2243
        %2245 = vrot.lane.b32.xlu0 %v1883, 39
        %v2246 = vpop.permute.xlu0 %2245
        %2249 = vst.msk [vmem:[#allocation3 + $0x18] sm:$0xff] %vm1945, %v2244
        %2250 = vst.msk [vmem:[#allocation3 + $0x48] sm:$0xf] %vm1947, %v2246
        %2251 = vrot.lane.b32.xlu0 %v1884, 50
        %v2252 = vpop.permute.xlu0 %2251
        %2253 = vrot.lane.b32.xlu0 %v1883, 50
        %v2254 = vpop.permute.xlu0 %2253
        %2257 = vst.msk [vmem:[#allocation3 + $0x18] sm:$0xff] %vm1955, %v2252
        %2258 = vst.msk [vmem:[#allocation3 + $0x48] sm:$0xf] %vm1957, %v2254
        %2259 = vrot.lane.b32.xlu0 %v1918, 64
        %v2260 = vpop.permute.xlu0 %2259
        %2261 = vrot.lane.b32.xlu0 %v1917, 64
        %v2262 = vpop.permute.xlu0 %2261
        %2265 = vst.msk [vmem:[#allocation3 + $0x18] sm:$0xff] %vm982, %v2260
        %2266 = vst.msk [vmem:[#allocation3 + $0x20] sm:$0xff] %vm1094, %v2260
        %2267 = vst.msk [vmem:[#allocation3 + $0x48] sm:$0xf] %vm990, %v2262
        %2268 = vst.msk [vmem:[#allocation3 + $0x50] sm:$0xf] %vm1102, %v2262
        %2269 = vrot.lane.b32.xlu0 %v1918, 75
        %v2270 = vpop.permute.xlu0 %2269
        %2271 = vrot.lane.b32.xlu0 %v1917, 75
        %v2272 = vpop.permute.xlu0 %2271
        %2275 = vst.msk [vmem:[#allocation3 + $0x20] sm:$0xff] %vm1975, %v2270
        %2276 = vst.msk [vmem:[#allocation3 + $0x50] sm:$0xf] %vm1977, %v2272
        %2277 = vrot.lane.b32.xlu0 %v1918, 86
        %v2278 = vpop.permute.xlu0 %2277
        %2279 = vrot.lane.b32.xlu0 %v1917, 86
        %v2280 = vpop.permute.xlu0 %2279
        %2283 = vst.msk [vmem:[#allocation3 + $0x20] sm:$0xff] %vm1985, %v2278
        %2284 = vst.msk [vmem:[#allocation3 + $0x50] sm:$0xf] %vm1987, %v2280
        %2285 = vrot.lane.b32.xlu0 %v1849, 86
        %v2286 = vpop.permute.xlu0 %2285
        %2287 = vrot.lane.b32.xlu0 %v1854, 86
        %v2288 = vpop.permute.xlu0 %2287
        %2291 = vst.msk [vmem:[#allocation3 + $0x20] sm:$0xff] %vm1995, %v2286
        %2292 = vst.msk [vmem:[#allocation3 + $0x50] sm:$0xf] %vm1997, %v2288
        %2293 = vrot.lane.b32.xlu0 %v1849, 97
        %v2294 = vpop.permute.xlu0 %2293
        %2295 = vrot.lane.b32.xlu0 %v1854, 97
        %v2296 = vpop.permute.xlu0 %2295
        %2299 = vst.msk [vmem:[#allocation3 + $0x20] sm:$0xff] %vm2005, %v2294
        %2300 = vst.msk [vmem:[#allocation3 + $0x50] sm:$0xf] %vm2007, %v2296
        %2301 = vrot.lane.b32.xlu0 %v1849, 108
        %v2302 = vpop.permute.xlu0 %2301
        %2303 = vrot.lane.b32.xlu0 %v1854, 108
        %v2304 = vpop.permute.xlu0 %2303
        %2307 = vst.msk [vmem:[#allocation3 + $0x20] sm:$0xff] %vm2015, %v2302
        %2308 = vst.msk [vmem:[#allocation3 + $0x50] sm:$0xf] %vm2017, %v2304
        %2309 = vrot.lane.b32.xlu0 %v1884, 122
        %v2310 = vpop.permute.xlu0 %2309
        %2311 = vrot.lane.b32.xlu0 %v1883, 122
        %v2312 = vpop.permute.xlu0 %2311
        %2315 = vst.msk [vmem:[#allocation3 + $0x20] sm:$0xff] %vm2025, %v2310
        %2316 = vst.msk [vmem:[#allocation3 + $0x50] sm:$0xf] %vm2027, %v2312
        %2317 = vrot.lane.b32.xlu0 %v1884, 5
        %v2318 = vpop.permute.xlu0 %2317
        %2319 = vrot.lane.b32.xlu0 %v1883, 5
        %v2320 = vpop.permute.xlu0 %2319
        %2323 = vst.msk [vmem:[#allocation3 + $0x20] sm:$0xff] %vm2035, %v2318
        %2324 = vst.msk [vmem:[#allocation3 + $0x50] sm:$0xf] %vm2037, %v2320
        %2325 = vrot.lane.b32.xlu0 %v1884, 16
        %v2326 = vpop.permute.xlu0 %2325
        %2327 = vrot.lane.b32.xlu0 %v1883, 16
        %v2328 = vpop.permute.xlu0 %2327
        %2331 = vst.msk [vmem:[#allocation3 + $0x20] sm:$0xff] %vm2045, %v2326
        %2332 = vst.msk [vmem:[#allocation3 + $0x50] sm:$0xf] %vm2047, %v2328
        %2333 = vrot.lane.b32.xlu0 %v1918, 30
        %v2334 = vpop.permute.xlu0 %2333
        %2335 = vrot.lane.b32.xlu0 %v1917, 30
        %v2336 = vpop.permute.xlu0 %2335
        %2339 = vst.msk [vmem:[#allocation3 + $0x20] sm:$0xff] %vm2055, %v2334
        %2340 = vst.msk [vmem:[#allocation3 + $0x50] sm:$0xf] %vm2057, %v2336
        %2341 = vrot.lane.b32.xlu0 %v1918, 41
        %v2342 = vpop.permute.xlu0 %2341
        %2343 = vrot.lane.b32.xlu0 %v1917, 41
        %v2344 = vpop.permute.xlu0 %2343
        %2347 = vst.msk [vmem:[#allocation3 + $0x20] sm:$0xff] %vm2065, %v2342
        %2348 = vst.msk [vmem:[#allocation3 + $0x50] sm:$0xf] %vm2067, %v2344
        %2349 = vrot.lane.b32.xlu0 %v1918, 52
        %v2350 = vpop.permute.xlu0 %2349
        %2351 = vrot.lane.b32.xlu0 %v1917, 52
        %v2352 = vpop.permute.xlu0 %2351
        %2355 = vst.msk [vmem:[#allocation3 + $0x20] sm:$0xff] %vm736, %v2350
        %2356 = vst.msk [vmem:[#allocation3 + $0x28] sm:$0xff] %vm848, %v2350
        %2357 = vst.msk [vmem:[#allocation3 + $0x50] sm:$0xf] %vm744, %v2352
        %2358 = vst.msk [vmem:[#allocation3 + $0x58] sm:$0xf] %vm856, %v2352
        %v2359 = vld [vmem:[#allocation3] sm:$0xff]
        %v2360 = vld [vmem:[#allocation3 + $0x8] sm:$0xff]
        %v2361 = vld [vmem:[#allocation3 + $0x10] sm:$0xff]
        %v2362 = vld [vmem:[#allocation3 + $0x18] sm:$0xff]
        %v2363 = vld [vmem:[#allocation3 + $0x20] sm:$0xff]
        %v2364 = vld [vmem:[#allocation3 + $0x28] sm:$0xff]
        %v2365 = vld [vmem:[#allocation3 + $0x30] sm:$0xf]
        %v2366 = vld [vmem:[#allocation3 + $0x38] sm:$0xf]
        %v2367 = vld [vmem:[#allocation3 + $0x40] sm:$0xf]
        %v2368 = vld [vmem:[#allocation3 + $0x48] sm:$0xf]
        %v2369 = vld [vmem:[#allocation3 + $0x50] sm:$0xf]
        %v2370 = vld [vmem:[#allocation3 + $0x58] sm:$0xf]
        %v2371 = vld [vmem:[%s5] sm:$0xff]
        %v2372 = vld [vmem:[%s5 + $0x8] sm:$0xff]
        %v2373 = vld [vmem:[%s5 + $0x10] sm:$0xff]
        %v2374 = vld [vmem:[%s5 + $0x18] sm:$0xff]
        %v2375 = vld [vmem:[%s5 + $0x20] sm:$0xff]
        %v2376 = vld [vmem:[%s5 + $0x28] sm:$0xff]
        %v2377 = vld [vmem:[%s5 + $0x30] sm:$0xff]
        %v2378 = vld [vmem:[%s5 + $0x38] sm:$0xff]
        %v2379 = vld [vmem:[%s5 + $0x40] sm:$0xff]
        %v2380 = vld [vmem:[%s5 + $0x48] sm:$0xff]
        %v2381 = vld [vmem:[%s5 + $0x50] sm:$0xff]
        %v2382 = vld [vmem:[%s5 + $0x58] sm:$0xff]
        %v2383 = vld [vmem:[%s5 + $0x60] sm:$0xff]
        %v2384 = vld [vmem:[%s5 + $0x68] sm:$0xff]
        %v2385 = vld [vmem:[%s5 + $0x70] sm:$0xff]
        %v2386 = vld [vmem:[%s5 + $0x78] sm:$0xff]
        %v2387 = vld [vmem:[%s5 + $0x80] sm:$0xff]
        %v2388 = vld [vmem:[%s5 + $0x88] sm:$0xff]
        %v2389 = vld [vmem:[%s5 + $0x90] sm:$0xff]
        %v2390 = vld [vmem:[%s5 + $0x98] sm:$0xff]
        %v2391 = vld [vmem:[%s5 + $0xa0] sm:$0xff]
        %v2392 = vld [vmem:[%s5 + $0xa8] sm:$0xff]
        %v2393 = vld [vmem:[%s5 + $0xb0] sm:$0xff]
        %v2394 = vld [vmem:[%s5 + $0xb8] sm:$0xff]
        %v2395 = vld [vmem:[%s5 + $0xc0] sm:$0xff]
        %v2396 = vld [vmem:[%s5 + $0xc8] sm:$0xff]
        %v2397 = vld [vmem:[%s5 + $0xd0] sm:$0xff]
        %v2398 = vld [vmem:[%s5 + $0xd8] sm:$0xff]
        %v2399 = vld [vmem:[%s5 + $0xe0] sm:$0xff]
        %v2400 = vld [vmem:[%s5 + $0xe8] sm:$0xff]
        %v2401 = vld [vmem:[%s5 + $0xf0] sm:$0xff]
        %v2402 = vld [vmem:[%s5 + $0xf8] sm:$0xff]
        %v2403 = vld [vmem:[%s5 + $0x100] sm:$0xff]
        %v2404 = vld [vmem:[%s5 + $0x108] sm:$0xff]
        %v2405 = vld [vmem:[%s5 + $0x110] sm:$0xff]
        %v2406 = vld [vmem:[%s5 + $0x118] sm:$0xff]
        %v2407 = vld [vmem:[%s5 + $0x120] sm:$0xff]
        %v2408 = vld [vmem:[%s5 + $0x128] sm:$0xff]
        %v2409 = vld [vmem:[%s5 + $0x130] sm:$0xff]
        %v2410 = vld [vmem:[%s5 + $0x138] sm:$0xff]
        %v2411 = vld [vmem:[%s5 + $0x140] sm:$0xff]
        %v2412 = vld [vmem:[%s5 + $0x148] sm:$0xff]
        %v2413 = vld [vmem:[%s5 + $0x150] sm:$0xff]
        %v2414 = vld [vmem:[%s5 + $0x158] sm:$0xff]
        %v2415 = vld [vmem:[%s5 + $0x160] sm:$0xff]
        %v2416 = vld [vmem:[%s5 + $0x168] sm:$0xff]
        %v2417 = vld [vmem:[%s5 + $0x170] sm:$0xff]
        %v2418 = vld [vmem:[%s5 + $0x178] sm:$0xff]
        %v2419 = vld [vmem:[%s5 + $0x180] sm:$0xff]
        %v2420 = vld [vmem:[%s5 + $0x188] sm:$0xff]
        %v2421 = vld [vmem:[%s5 + $0x190] sm:$0xff]
        %v2422 = vld [vmem:[%s5 + $0x198] sm:$0xff]
        %v2423 = vld [vmem:[%s5 + $0x1a0] sm:$0xff]
        %v2424 = vld [vmem:[%s5 + $0x1a8] sm:$0xff]
        %v2425 = vld [vmem:[%s5 + $0x1b0] sm:$0xff]
        %v2426 = vld [vmem:[%s5 + $0x1b8] sm:$0xff]
        %v2427 = vld [vmem:[%s5 + $0x1c0] sm:$0xff]
        %v2428 = vld [vmem:[%s5 + $0x1c8] sm:$0xff]
        %v2429 = vld [vmem:[%s5 + $0x1d0] sm:$0xff]
        %v2430 = vld [vmem:[%s5 + $0x1d8] sm:$0xff]
        %v2431 = vld [vmem:[%s5 + $0x1e0] sm:$0xff]
        %v2432 = vld [vmem:[%s5 + $0x1e8] sm:$0xff]
        %v2433 = vld [vmem:[%s5 + $0x1f0] sm:$0xff]
        %v2434 = vld [vmem:[%s5 + $0x1f8] sm:$0xff]
        %v2435 = vld [vmem:[%s5 + $0x200] sm:$0xff]
        %v2436 = vld [vmem:[%s5 + $0x208] sm:$0xff]
        %v2437 = vld [vmem:[%s5 + $0x210] sm:$0xff]
        %v2438 = vld [vmem:[%s5 + $0x218] sm:$0xff]
        %v2439 = vld [vmem:[%s5 + $0x220] sm:$0xff]
        %v2440 = vld [vmem:[%s5 + $0x228] sm:$0xff]
        %v2441 = vld [vmem:[%s5 + $0x230] sm:$0xff]
        %v2442 = vld [vmem:[%s5 + $0x238] sm:$0xff]
        %v2443 = vld [vmem:[%s5 + $0x240] sm:$0xff]
        %v2444 = vld [vmem:[%s5 + $0x248] sm:$0xff]
        %v2445 = vld [vmem:[%s5 + $0x250] sm:$0xff]
        %v2446 = vld [vmem:[%s5 + $0x258] sm:$0xff]
        %v2447 = vld [vmem:[%s5 + $0x260] sm:$0xff]
        %v2448 = vld [vmem:[%s5 + $0x268] sm:$0xff]
        %v2449 = vld [vmem:[%s5 + $0x270] sm:$0xff]
        %v2450 = vld [vmem:[%s5 + $0x278] sm:$0xff]
        %v2451 = vld [vmem:[%s5 + $0x280] sm:$0xff]
        %v2452 = vld [vmem:[%s5 + $0x288] sm:$0xff]
        %v2453 = vld [vmem:[%s5 + $0x290] sm:$0xff]
        %v2454 = vld [vmem:[%s5 + $0x298] sm:$0xff]
        %v2455 = vld [vmem:[%s5 + $0x2a0] sm:$0xff]
        %v2456 = vld [vmem:[%s5 + $0x2a8] sm:$0xff]
        %v2457 = vld [vmem:[%s5 + $0x2b0] sm:$0xff]
        %v2458 = vld [vmem:[%s5 + $0x2b8] sm:$0xff]
        %v2459 = vld [vmem:[%s5 + $0x2c0] sm:$0xff]
        %v2460 = vld [vmem:[%s5 + $0x2c8] sm:$0xff]
        %v2461 = vld [vmem:[%s5 + $0x2d0] sm:$0xff]
        %v2462 = vld [vmem:[%s5 + $0x2d8] sm:$0xff]
        %v2463 = vld [vmem:[%s5 + $0x2e0] sm:$0xff]
        %v2464 = vld [vmem:[%s5 + $0x2e8] sm:$0xff]
        %v2465 = vld [vmem:[%s5 + $0x2f0] sm:$0xff]
        %v2466 = vld [vmem:[%s5 + $0x2f8] sm:$0xff]
        %v2467 = vld [vmem:[%s5 + $0x300] sm:$0xff]
        %v2468 = vld [vmem:[%s5 + $0x308] sm:$0xff]
        %v2469 = vld [vmem:[%s5 + $0x310] sm:$0xff]
        %v2470 = vld [vmem:[%s5 + $0x318] sm:$0xff]
        %v2471 = vld [vmem:[%s5 + $0x320] sm:$0xff]
        %v2472 = vld [vmem:[%s5 + $0x328] sm:$0xff]
        %v2473 = vld [vmem:[%s5 + $0x330] sm:$0xff]
        %v2474 = vld [vmem:[%s5 + $0x338] sm:$0xff]
        %v2475 = vld [vmem:[%s5 + $0x340] sm:$0xff]
        %v2476 = vld [vmem:[%s5 + $0x348] sm:$0xff]
        %v2477 = vld [vmem:[%s5 + $0x350] sm:$0xff]
        %v2478 = vld [vmem:[%s5 + $0x358] sm:$0xff]
        %v2479 = vld [vmem:[%s5 + $0x360] sm:$0xff]
        %v2480 = vld [vmem:[%s5 + $0x368] sm:$0xff]
        %v2481 = vld [vmem:[%s5 + $0x370] sm:$0xff]
        %v2482 = vld [vmem:[%s5 + $0x378] sm:$0xff]
        %v2483 = vld [vmem:[%s5 + $0x380] sm:$0xff]
        %v2484 = vld [vmem:[%s5 + $0x388] sm:$0xff]
        %v2485 = vld [vmem:[%s5 + $0x390] sm:$0xff]
        %v2486 = vld [vmem:[%s5 + $0x398] sm:$0xff]
        %v2487 = vld [vmem:[%s5 + $0x3a0] sm:$0xff]
        %v2488 = vld [vmem:[%s5 + $0x3a8] sm:$0xff]
        %v2489 = vld [vmem:[%s5 + $0x3b0] sm:$0xff]
        %v2490 = vld [vmem:[%s5 + $0x3b8] sm:$0xff]
        %v2491 = vld [vmem:[%s5 + $0x3c0] sm:$0xff]
        %v2492 = vld [vmem:[%s5 + $0x3c8] sm:$0xff]
        %v2493 = vld [vmem:[%s5 + $0x3d0] sm:$0xff]
        %v2494 = vld [vmem:[%s5 + $0x3d8] sm:$0xff]
        %v2495 = vld [vmem:[%s5 + $0x3e0] sm:$0xff]
        %v2496 = vld [vmem:[%s5 + $0x3e8] sm:$0xff]
        %v2497 = vld [vmem:[%s5 + $0x3f0] sm:$0xff]
        %v2498 = vld [vmem:[%s5 + $0x3f8] sm:$0xff]
        %v2499 = vld [vmem:[%s5 + $0x400] sm:$0xff]
        %v2500 = vld [vmem:[%s5 + $0x408] sm:$0xff]
        %v2501 = vld [vmem:[%s5 + $0x410] sm:$0xff]
        %v2502 = vld [vmem:[%s5 + $0x418] sm:$0xff]
        %v2503 = vld [vmem:[%s5 + $0x420] sm:$0xff]
        %v2504 = vld [vmem:[%s5 + $0x428] sm:$0xff]
        %v2505 = vld [vmem:[%s5 + $0x430] sm:$0xff]
        %v2506 = vld [vmem:[%s5 + $0x438] sm:$0xff]
        %v2507 = vld [vmem:[%s5 + $0x440] sm:$0xff]
        %v2508 = vld [vmem:[%s5 + $0x448] sm:$0xff]
        %v2509 = vld [vmem:[%s5 + $0x450] sm:$0xff]
        %v2510 = vld [vmem:[%s5 + $0x458] sm:$0xff]
        %v2511 = vld [vmem:[%s5 + $0x460] sm:$0xff]
        %v2512 = vld [vmem:[%s5 + $0x468] sm:$0xff]
        %v2513 = vld [vmem:[%s5 + $0x470] sm:$0xff]
        %v2514 = vld [vmem:[%s5 + $0x478] sm:$0xff]
        %v2515 = vld [vmem:[%s5 + $0x480] sm:$0xff]
        %v2516 = vld [vmem:[%s5 + $0x488] sm:$0xff]
        %v2517 = vld [vmem:[%s5 + $0x490] sm:$0xff]
        %v2518 = vld [vmem:[%s5 + $0x498] sm:$0xff]
        %v2519 = vld [vmem:[%s5 + $0x4a0] sm:$0xff]
        %v2520 = vld [vmem:[%s5 + $0x4a8] sm:$0xff]
        %v2521 = vld [vmem:[%s5 + $0x4b0] sm:$0xff]
        %v2522 = vld [vmem:[%s5 + $0x4b8] sm:$0xff]
        %v2523 = vld [vmem:[%s5 + $0x4c0] sm:$0xff]
        %v2524 = vld [vmem:[%s5 + $0x4c8] sm:$0xff]
        %v2525 = vld [vmem:[%s5 + $0x4d0] sm:$0xff]
        %v2526 = vld [vmem:[%s5 + $0x4d8] sm:$0xff]
        %v2527 = vld [vmem:[%s5 + $0x4e0] sm:$0xff]
        %v2528 = vld [vmem:[%s5 + $0x4e8] sm:$0xff]
        %v2529 = vld [vmem:[%s5 + $0x4f0] sm:$0xff]
        %v2530 = vld [vmem:[%s5 + $0x4f8] sm:$0xff]
        %v2531 = vld [vmem:[%s5 + $0x500] sm:$0xff]
        %v2532 = vld [vmem:[%s5 + $0x508] sm:$0xff]
        %v2533 = vld [vmem:[%s6] sm:$0x3]
        %v2535 = vlaneseq
        %v2536 = vshrl.u32 %v2535, 7
        %v2537 = vsub.s32 0, %v2536
        %v2538 = vrot.slane %v2533, %v2537
        %v2539 = vlaneseq
        %v2540 = vshrl.u32 %v2539, 7
        %v2541 = vsub.s32 1, %v2540
        %v2542 = vrot.slane %v2533, %v2541
        %v2546 = vsel %vm848, %v2364, 0
        %v2549 = vsel %vm848, %v2370, 0
        %2551 = vmatprep.subr.mxu0 %v2402
        %2552 = vmatpush1.msra.mxu0 %v2401
        %2553 = vmatprep.subr.mxu0 %v2400
        %2554 = vmatpush1.msra.mxu0 %v2399
        %2555 = vmatprep.subr.mxu0 %v2398
        %2556 = vmatpush1.msra.mxu0 %v2397
        %2557 = vmatprep.subr.mxu0 %v2396
        %2558 = vmatpush1.msra.mxu0 %v2395
        %2559 = vmatprep.subr.mxu0 %v2394
        %2560 = vmatpush1.msra.mxu0 %v2393
        %2561 = vmatprep.subr.mxu0 %v2392
        %2562 = vmatpush1.msra.mxu0 %v2391
        %2563 = vmatprep.subr.mxu0 %v2390
        %2564 = vmatpush1.msra.mxu0 %v2389
        %2565 = vmatprep.subr.mxu0 %v2388
        %2566 = vmatpush1.msra.mxu0 %v2387
        %2567 = vmatprep.subr.mxu0 %v2386
        %2568 = vmatpush1.msra.mxu0 %v2385
        %2569 = vmatprep.subr.mxu0 %v2384
        %2570 = vmatpush1.msra.mxu0 %v2383
        %2571 = vmatprep.subr.mxu0 %v2382
        %2572 = vmatpush1.msra.mxu0 %v2381
        %2573 = vmatprep.subr.mxu0 %v2380
        %2574 = vmatpush1.msra.mxu0 %v2379
        %2575 = vmatprep.subr.mxu0 %v2378
        %2576 = vmatpush1.msra.mxu0 %v2377
        %2577 = vmatprep.subr.mxu0 %v2376
        %2578 = vmatpush1.msra.mxu0 %v2375
        %2579 = vmatprep.subr.mxu0 %v2374
        %2580 = vmatpush1.msra.mxu0 %v2373
        %2581 = vmatprep.subr.mxu0 %v2372
        %2582 = vmatpush1.msra.mxu0 %v2371
        %2583 = vmatprep.subr.mxu0 %v2434
        %2584 = vmatpush2.msra.mxu0 %v2433
        %2585 = vmatprep.subr.mxu0 %v2432
        %2586 = vmatpush2.msra.mxu0 %v2431
        %2587 = vmatprep.subr.mxu0 %v2430
        %2588 = vmatpush2.msra.mxu0 %v2429
        %2589 = vmatprep.subr.mxu0 %v2428
        %2590 = vmatpush2.msra.mxu0 %v2427
        %2591 = vmatprep.subr.mxu0 %v2426
        %2592 = vmatpush2.msra.mxu0 %v2425
        %2593 = vmatprep.subr.mxu0 %v2424
        %2594 = vmatpush2.msra.mxu0 %v2423
        %2595 = vmatprep.subr.mxu0 %v2422
        %2596 = vmatpush2.msra.mxu0 %v2421
        %2597 = vmatprep.subr.mxu0 %v2420
        %2598 = vmatpush2.msra.mxu0 %v2419
        %2599 = vmatprep.subr.mxu0 %v2418
        %2600 = vmatpush2.msra.mxu0 %v2417
        %2601 = vmatprep.subr.mxu0 %v2416
        %2602 = vmatpush2.msra.mxu0 %v2415
        %2603 = vmatprep.subr.mxu0 %v2414
        %2604 = vmatpush2.msra.mxu0 %v2413
        %2605 = vmatprep.subr.mxu0 %v2412
        %2606 = vmatpush2.msra.mxu0 %v2411
        %2607 = vmatprep.subr.mxu0 %v2410
        %2608 = vmatpush2.msra.mxu0 %v2409
        %2609 = vmatprep.subr.mxu0 %v2408
        %2610 = vmatpush2.msra.mxu0 %v2407
        %2611 = vmatprep.subr.mxu0 %v2406
        %2612 = vmatpush2.msra.mxu0 %v2405
        %2613 = vmatprep.subr.mxu0 %v2404
        %2614 = vmatpush2.msra.mxu0 %v2403
        %2615 = vmatprep.mubr.f32.mxu0 %v2360
        %2616 = vmatmul.mubr.f32.gmra.mxu0 %v2359
        %v2617 = vpop.f32.mrf.mxu0
        %v2618 = vadd.f32 %v2538, %v2617
        %v2619 = vpop.f32.mrf.mxu0
        %v2620 = vadd.f32 %v2542, %v2619
        %2621 = vmatprep.mubr.f32.mxu0 %v2366
        %2622 = vmatmul.mubr.f32.gmra.mxu0 %v2365
        %v2623 = vpop.f32.mrf.mxu0
        %v2624 = vadd.f32 %v2538, %v2623
        %v2625 = vpop.f32.mrf.mxu0
        %v2626 = vadd.f32 %v2542, %v2625
        %2627 = vdwg.mxu0
        %2628 = vmatprep.subr.mxu0 %v2466
        %2629 = vmatpush1.msra.mxu0 %v2465
        %2630 = vmatprep.subr.mxu0 %v2464
        %2631 = vmatpush1.msra.mxu0 %v2463
        %2632 = vmatprep.subr.mxu0 %v2462
        %2633 = vmatpush1.msra.mxu0 %v2461
        %2634 = vmatprep.subr.mxu0 %v2460
        %2635 = vmatpush1.msra.mxu0 %v2459
        %2636 = vmatprep.subr.mxu0 %v2458
        %2637 = vmatpush1.msra.mxu0 %v2457
        %2638 = vmatprep.subr.mxu0 %v2456
        %2639 = vmatpush1.msra.mxu0 %v2455
        %2640 = vmatprep.subr.mxu0 %v2454
        %2641 = vmatpush1.msra.mxu0 %v2453
        %2642 = vmatprep.subr.mxu0 %v2452
        %2643 = vmatpush1.msra.mxu0 %v2451
        %2644 = vmatprep.subr.mxu0 %v2450
        %2645 = vmatpush1.msra.mxu0 %v2449
        %2646 = vmatprep.subr.mxu0 %v2448
        %2647 = vmatpush1.msra.mxu0 %v2447
        %2648 = vmatprep.subr.mxu0 %v2446
        %2649 = vmatpush1.msra.mxu0 %v2445
        %2650 = vmatprep.subr.mxu0 %v2444
        %2651 = vmatpush1.msra.mxu0 %v2443
        %2652 = vmatprep.subr.mxu0 %v2442
        %2653 = vmatpush1.msra.mxu0 %v2441
        %2654 = vmatprep.subr.mxu0 %v2440
        %2655 = vmatpush1.msra.mxu0 %v2439
        %2656 = vmatprep.subr.mxu0 %v2438
        %2657 = vmatpush1.msra.mxu0 %v2437
        %2658 = vmatprep.subr.mxu0 %v2436
        %2659 = vmatpush1.msra.mxu0 %v2435
        %2660 = vmatprep.subr.mxu0 %v2498
        %2661 = vmatpush2.msra.mxu0 %v2497
        %2662 = vmatprep.subr.mxu0 %v2496
        %2663 = vmatpush2.msra.mxu0 %v2495
        %2664 = vmatprep.subr.mxu0 %v2494
        %2665 = vmatpush2.msra.mxu0 %v2493
        %2666 = vmatprep.subr.mxu0 %v2492
        %2667 = vmatpush2.msra.mxu0 %v2491
        %2668 = vmatprep.subr.mxu0 %v2490
        %2669 = vmatpush2.msra.mxu0 %v2489
        %2670 = vmatprep.subr.mxu0 %v2488
        %2671 = vmatpush2.msra.mxu0 %v2487
        %2672 = vmatprep.subr.mxu0 %v2486
        %2673 = vmatpush2.msra.mxu0 %v2485
        %2674 = vmatprep.subr.mxu0 %v2484
        %2675 = vmatpush2.msra.mxu0 %v2483
        %2676 = vmatprep.subr.mxu0 %v2482
        %2677 = vmatpush2.msra.mxu0 %v2481
        %2678 = vmatprep.subr.mxu0 %v2480
        %2679 = vmatpush2.msra.mxu0 %v2479
        %2680 = vmatprep.subr.mxu0 %v2478
        %2681 = vmatpush2.msra.mxu0 %v2477
        %2682 = vmatprep.subr.mxu0 %v2476
        %2683 = vmatpush2.msra.mxu0 %v2475
        %2684 = vmatprep.subr.mxu0 %v2474
        %2685 = vmatpush2.msra.mxu0 %v2473
        %2686 = vmatprep.subr.mxu0 %v2472
        %2687 = vmatpush2.msra.mxu0 %v2471
        %2688 = vmatprep.subr.mxu0 %v2470
        %2689 = vmatpush2.msra.mxu0 %v2469
        %2690 = vmatprep.subr.mxu0 %v2468
        %2691 = vmatpush2.msra.mxu0 %v2467
        %2692 = vmatprep.mubr.f32.mxu0 %v2362
        %2693 = vmatmul.mubr.f32.gmra.mxu0 %v2361
        %v2694 = vpop.f32.mrf.mxu0
        %v2695 = vadd.f32 %v2618, %v2694
        %v2696 = vpop.f32.mrf.mxu0
        %v2697 = vadd.f32 %v2620, %v2696
        %2698 = vmatprep.mubr.f32.mxu0 %v2368
        %2699 = vmatmul.mubr.f32.gmra.mxu0 %v2367
        %v2700 = vpop.f32.mrf.mxu0
        %v2701 = vadd.f32 %v2624, %v2700
        %v2702 = vpop.f32.mrf.mxu0
        %v2703 = vadd.f32 %v2626, %v2702
        %2704 = vdwg.mxu0
        %2705 = vmatprep.subr.mxu0 %v2530
        %2706 = vmatpush1.msra.mxu0 %v2529
        %2707 = vmatprep.subr.mxu0 %v2528
        %2708 = vmatpush1.msra.mxu0 %v2527
        %2709 = vmatprep.subr.mxu0 %v2526
        %2710 = vmatpush1.msra.mxu0 %v2525
        %2711 = vmatprep.subr.mxu0 %v2524
        %2712 = vmatpush1.msra.mxu0 %v2523
        %2713 = vmatprep.subr.mxu0 %v2522
        %2714 = vmatpush1.msra.mxu0 %v2521
        %2715 = vmatprep.subr.mxu0 %v2520
        %2716 = vmatpush1.msra.mxu0 %v2519
        %2717 = vmatprep.subr.mxu0 %v2518
        %2718 = vmatpush1.msra.mxu0 %v2517
        %2719 = vmatprep.subr.mxu0 %v2516
        %2720 = vmatpush1.msra.mxu0 %v2515
        %2721 = vmatprep.subr.mxu0 %v2514
        %2722 = vmatpush1.msra.mxu0 %v2513
        %2723 = vmatprep.subr.mxu0 %v2512
        %2724 = vmatpush1.msra.mxu0 %v2511
        %2725 = vmatprep.subr.mxu0 %v2510
        %2726 = vmatpush1.msra.mxu0 %v2509
        %2727 = vmatprep.subr.mxu0 %v2508
        %2728 = vmatpush1.msra.mxu0 %v2507
        %2729 = vmatprep.subr.mxu0 %v2506
        %2730 = vmatpush1.msra.mxu0 %v2505
        %2731 = vmatprep.subr.mxu0 %v2504
        %2732 = vmatpush1.msra.mxu0 %v2503
        %2733 = vmatprep.subr.mxu0 %v2502
        %2734 = vmatpush1.msra.mxu0 %v2501
        %2735 = vmatprep.subr.mxu0 %v2500
        %2736 = vmatpush1.msra.mxu0 %v2499
        %2737 = vmatprep.subr.mxu0 0.0
        %2738 = vmatpush2.msra.mxu0 0.0
        %2739 = vmatprep.subr.mxu0 0.0
        %2740 = vmatpush2.msra.mxu0 0.0
        %2741 = vmatprep.subr.mxu0 0.0
        %2742 = vmatpush2.msra.mxu0 0.0
        %2743 = vmatprep.subr.mxu0 0.0
        %2744 = vmatpush2.msra.mxu0 0.0
        %2745 = vmatprep.subr.mxu0 0.0
        %2746 = vmatpush2.msra.mxu0 0.0
        %2747 = vmatprep.subr.mxu0 0.0
        %2748 = vmatpush2.msra.mxu0 0.0
        %2749 = vmatprep.subr.mxu0 0.0
        %2750 = vmatpush2.msra.mxu0 0.0
        %2751 = vmatprep.subr.mxu0 0.0
        %2752 = vmatpush2.msra.mxu0 0.0
        %2753 = vmatprep.subr.mxu0 0.0
        %2754 = vmatpush2.msra.mxu0 0.0
        %2755 = vmatprep.subr.mxu0 0.0
        %2756 = vmatpush2.msra.mxu0 0.0
        %2757 = vmatprep.subr.mxu0 0.0
        %2758 = vmatpush2.msra.mxu0 0.0
        %2759 = vmatprep.subr.mxu0 0.0
        %2760 = vmatpush2.msra.mxu0 0.0
        %2761 = vmatprep.subr.mxu0 0.0
        %2762 = vmatpush2.msra.mxu0 0.0
        %2763 = vmatprep.subr.mxu0 0.0
        %2764 = vmatpush2.msra.mxu0 0.0
        %2765 = vmatprep.subr.mxu0 0.0
        %2766 = vmatpush2.msra.mxu0 0.0
        %2767 = vmatprep.subr.mxu0 %v2532
        %2768 = vmatpush2.msra.mxu0 %v2531
        %2769 = vmatprep.mubr.f32.mxu0 %v2546
        %2770 = vmatmul.mubr.f32.gmra.mxu0 %v2363
        %v2771 = vpop.f32.mrf.mxu0
        %v2772 = vadd.f32 %v2695, %v2771
        %v2773 = vpop.f32.mrf.mxu0
        %v2774 = vadd.f32 %v2697, %v2773
        %2775 = vmatprep.mubr.f32.mxu0 %v2549
        %2776 = vmatmul.mubr.f32.gmra.mxu0 %v2369
        %v2777 = vpop.f32.mrf.mxu0
        %v2778 = vadd.f32 %v2701, %v2777
        %v2779 = vpop.f32.mrf.mxu0
        %v2780 = vadd.f32 %v2703, %v2779
        %2781 = vdwg.mxu0
        %v2782 = vmax.f32 %v2772, 0.0
        %v2783 = vmax.f32 %v2774, 0.0
        %v2784 = vmax.f32 %v2778, 0.0
        %v2785 = vmax.f32 %v2780, 0.0
        %v2786 = vld [vmem:[%s7] sm:$0x3f]
        %v2788 = vsel %vm602, %v2786, 0
        %v2791 = vsel %vm1381, %v2784, 0
        %v2794 = vsel %vm1381, %v2785, 0
        %2796 = vmatprep.subr.mxu0 0.0
        %2797 = vmatpush1.msra.mxu0 0.0
        %2798 = vmatprep.subr.mxu0 0.0
        %2799 = vmatpush1.msra.mxu0 0.0
        %2800 = vmatprep.subr.mxu0 0.0
        %2801 = vmatpush1.msra.mxu0 0.0
        %2802 = vmatprep.subr.mxu0 0.0
        %2803 = vmatpush1.msra.mxu0 0.0
        %2804 = vmatprep.subr.mxu0 0.0
        %2805 = vmatpush1.msra.mxu0 0.0
        %2806 = vmatprep.subr.mxu0 0.0
        %2807 = vmatpush1.msra.mxu0 0.0
        %2808 = vmatprep.subr.mxu0 0.0
        %2809 = vmatpush1.msra.mxu0 0.0
        %2810 = vmatprep.subr.mxu0 0.0
        %2811 = vmatpush1.msra.mxu0 0.0
        %2812 = vmatprep.subr.mxu0 0.0
        %2813 = vmatpush1.msra.mxu0 0.0
        %2814 = vmatprep.subr.mxu0 0.0
        %2815 = vmatpush1.msra.mxu0 0.0
        %2816 = vmatprep.subr.mxu0 0.0
        %2817 = vmatpush1.msra.mxu0 0.0
        %2818 = vmatprep.subr.mxu0 0.0
        %2819 = vmatpush1.msra.mxu0 0.0
        %2820 = vmatprep.subr.mxu0 0.0
        %2821 = vmatpush1.msra.mxu0 0.0
        %2822 = vmatprep.subr.mxu0 0.0
        %2823 = vmatpush1.msra.mxu0 0.0
        %2824 = vmatprep.subr.mxu0 %v2794
        %2825 = vmatpush1.msra.mxu0 %v2791
        %2826 = vmatprep.subr.mxu0 %v2783
        %2827 = vmatpush1.msra.mxu0 %v2782
        %2828 = vmatprep.subr.mxu0 0.0
        %2829 = vmatpush2.msra.mxu0 0.0
        %2830 = vmatprep.subr.mxu0 0.0
        %2831 = vmatpush2.msra.mxu0 0.0
        %2832 = vmatprep.subr.mxu0 0.0
        %2833 = vmatpush2.msra.mxu0 0.0
        %2834 = vmatprep.subr.mxu0 0.0
        %2835 = vmatpush2.msra.mxu0 0.0
        %2836 = vmatprep.subr.mxu0 0.0
        %2837 = vmatpush2.msra.mxu0 0.0
        %2838 = vmatprep.subr.mxu0 0.0
        %2839 = vmatpush2.msra.mxu0 0.0
        %2840 = vmatprep.subr.mxu0 0.0
        %2841 = vmatpush2.msra.mxu0 0.0
        %2842 = vmatprep.subr.mxu0 0.0
        %2843 = vmatpush2.msra.mxu0 0.0
        %2844 = vmatprep.subr.mxu0 0.0
        %2845 = vmatpush2.msra.mxu0 0.0
        %2846 = vmatprep.subr.mxu0 0.0
        %2847 = vmatpush2.msra.mxu0 0.0
        %2848 = vmatprep.subr.mxu0 0.0
        %2849 = vmatpush2.msra.mxu0 0.0
        %2850 = vmatprep.subr.mxu0 0.0
        %2851 = vmatpush2.msra.mxu0 0.0
        %2852 = vmatprep.subr.mxu0 0.0
        %2853 = vmatpush2.msra.mxu0 0.0
        %2854 = vmatprep.subr.mxu0 0.0
        %2855 = vmatpush2.msra.mxu0 0.0
        %2856 = vmatprep.subr.mxu0 0.0
        %2857 = vmatpush2.msra.mxu0 0.0
        %2858 = vmatprep.subr.mxu0 0.0
        %2859 = vmatpush2.msra.mxu0 0.0
        %2860 = vmatprep.mubr.f32.mxu0 0.0
        %2861 = vmatmul.mubr.f32.gmra.mxu0 %v2788
        %v2862 = vpop.f32.mrf.mxu0
        %v2863 = vadd.f32 0.0, %v2862
        %v2864 = vpop.f32.mrf.mxu0
        %v2865 = vadd.f32 0.0, %v2864
        %2866 = vdwg.mxu0
        %v2867 = vld [vmem:[%s8] sm:$0xff]
        %v2868 = vld [vmem:[%s8 + $0x8] sm:$0xff]
        %v2869 = vld [vmem:[%s8 + $0x10] sm:$0xff]
        %v2870 = vld [vmem:[%s8 + $0x18] sm:$0xff]
        %v2871 = vld [vmem:[%s8 + $0x20] sm:$0xff]
        %v2872 = vld [vmem:[%s8 + $0x28] sm:$0xff]
        %v2873 = vld [vmem:[%s8 + $0x30] sm:$0xff]
        %v2874 = vld [vmem:[%s8 + $0x38] sm:$0xff]
        %v2875 = vld [vmem:[%s8 + $0x40] sm:$0xff]
        %v2876 = vld [vmem:[%s8 + $0x48] sm:$0xff]
        %v2877 = vld [vmem:[%s8 + $0x50] sm:$0xff]
        %v2878 = vld [vmem:[%s8 + $0x58] sm:$0xff]
        %v2879 = vld [vmem:[%s8 + $0x60] sm:$0xff]
        %v2880 = vld [vmem:[%s8 + $0x68] sm:$0xff]
        %v2881 = vld [vmem:[%s8 + $0x70] sm:$0xff]
        %v2882 = vld [vmem:[%s8 + $0x78] sm:$0xff]
        %v2883 = vld [vmem:[%s8 + $0x80] sm:$0xff]
        %v2884 = vld [vmem:[%s8 + $0x88] sm:$0xff]
        %v2885 = vld [vmem:[%s8 + $0x90] sm:$0xff]
        %v2886 = vld [vmem:[%s8 + $0x98] sm:$0xff]
        %v2887 = vld [vmem:[%s8 + $0xa0] sm:$0xff]
        %v2888 = vld [vmem:[%s8 + $0xa8] sm:$0xff]
        %v2889 = vld [vmem:[%s8 + $0xb0] sm:$0xff]
        %v2890 = vld [vmem:[%s8 + $0xb8] sm:$0xff]
        %vm2891 = vcmask 523264
        %v2893 = vsel %vm2891, %v2865, 0
        %2895 = vmatprep.subr.mxu0 0.0
        %2896 = vmatpush1.msra.mxu0 %v2882
        %2897 = vmatprep.subr.mxu0 0.0
        %2898 = vmatpush1.msra.mxu0 %v2881
        %2899 = vmatprep.subr.mxu0 0.0
        %2900 = vmatpush1.msra.mxu0 %v2880
        %2901 = vmatprep.subr.mxu0 0.0
        %2902 = vmatpush1.msra.mxu0 %v2879
        %2903 = vmatprep.subr.mxu0 0.0
        %2904 = vmatpush1.msra.mxu0 %v2878
        %2905 = vmatprep.subr.mxu0 0.0
        %2906 = vmatpush1.msra.mxu0 %v2877
        %2907 = vmatprep.subr.mxu0 0.0
        %2908 = vmatpush1.msra.mxu0 %v2876
        %2909 = vmatprep.subr.mxu0 0.0
        %2910 = vmatpush1.msra.mxu0 %v2875
        %2911 = vmatprep.subr.mxu0 0.0
        %2912 = vmatpush1.msra.mxu0 %v2874
        %2913 = vmatprep.subr.mxu0 0.0
        %2914 = vmatpush1.msra.mxu0 %v2873
        %2915 = vmatprep.subr.mxu0 0.0
        %2916 = vmatpush1.msra.mxu0 %v2872
        %2917 = vmatprep.subr.mxu0 0.0
        %2918 = vmatpush1.msra.mxu0 %v2871
        %2919 = vmatprep.subr.mxu0 0.0
        %2920 = vmatpush1.msra.mxu0 %v2870
        %2921 = vmatprep.subr.mxu0 0.0
        %2922 = vmatpush1.msra.mxu0 %v2869
        %2923 = vmatprep.subr.mxu0 0.0
        %2924 = vmatpush1.msra.mxu0 %v2868
        %2925 = vmatprep.subr.mxu0 0.0
        %2926 = vmatpush1.msra.mxu0 %v2867
        %2927 = vmatprep.subr.mxu0 0.0
        %2928 = vmatpush2.msra.mxu0 0.0
        %2929 = vmatprep.subr.mxu0 0.0
        %2930 = vmatpush2.msra.mxu0 0.0
        %2931 = vmatprep.subr.mxu0 0.0
        %2932 = vmatpush2.msra.mxu0 0.0
        %2933 = vmatprep.subr.mxu0 0.0
        %2934 = vmatpush2.msra.mxu0 0.0
        %2935 = vmatprep.subr.mxu0 0.0
        %2936 = vmatpush2.msra.mxu0 0.0
        %2937 = vmatprep.subr.mxu0 0.0
        %2938 = vmatpush2.msra.mxu0 0.0
        %2939 = vmatprep.subr.mxu0 0.0
        %2940 = vmatpush2.msra.mxu0 0.0
        %2941 = vmatprep.subr.mxu0 0.0
        %2942 = vmatpush2.msra.mxu0 0.0
        %2943 = vmatprep.subr.mxu0 0.0
        %2944 = vmatpush2.msra.mxu0 %v2890
        %2945 = vmatprep.subr.mxu0 0.0
        %2946 = vmatpush2.msra.mxu0 %v2889
        %2947 = vmatprep.subr.mxu0 0.0
        %2948 = vmatpush2.msra.mxu0 %v2888
        %2949 = vmatprep.subr.mxu0 0.0
        %2950 = vmatpush2.msra.mxu0 %v2887
        %2951 = vmatprep.subr.mxu0 0.0
        %2952 = vmatpush2.msra.mxu0 %v2886
        %2953 = vmatprep.subr.mxu0 0.0
        %2954 = vmatpush2.msra.mxu0 %v2885
        %2955 = vmatprep.subr.mxu0 0.0
        %2956 = vmatpush2.msra.mxu0 %v2884
        %2957 = vmatprep.subr.mxu0 0.0
        %2958 = vmatpush2.msra.mxu0 %v2883
        %2959 = vmatprep.mubr.f32.mxu0 %v2893
        %2960 = vmatmul.mubr.f32.gmra.mxu0 %v2863
        %v2961 = vpop.f32.mrf.mxu0
        %v2962 = vadd.f32 0.0, %v2961
        %v2963 = vpop.f32.mrf.mxu0
        %2964 = vdwg.mxu0
        %v2965 = vld [vmem:[%s10] sm:$0x1]
        %v2966 = vld [vmem:[%s9] sm:$0xff]
        %v2967 = vld [vmem:[%s9 + $0x8] sm:$0xff]
        %v2968 = vld [vmem:[%s9 + $0x10] sm:$0xff]
        %v2969 = vld [vmem:[%s9 + $0x18] sm:$0xff]
        %v2970 = vld [vmem:[%s9 + $0x20] sm:$0xff]
        %v2971 = vld [vmem:[%s9 + $0x28] sm:$0xff]
        %v2972 = vld [vmem:[%s9 + $0x30] sm:$0xff]
        %v2973 = vld [vmem:[%s9 + $0x38] sm:$0xff]
        %v2974 = vld [vmem:[%s9 + $0x40] sm:$0xff]
        %v2975 = vld [vmem:[%s9 + $0x48] sm:$0xff]
        %v2976 = vld [vmem:[%s9 + $0x50] sm:$0xff]
        %v2977 = vld [vmem:[%s9 + $0x58] sm:$0xff]
        %vm2978 = vcmask 785408
        %v2980 = vsel %vm2978, %v2962, 0
        %2982 = vmatprep.subr.mxu0 0.0
        %2983 = vmatpush1.msra.mxu0 0.0
        %2984 = vmatprep.subr.mxu0 0.0
        %2985 = vmatpush1.msra.mxu0 0.0
        %2986 = vmatprep.subr.mxu0 0.0
        %2987 = vmatpush1.msra.mxu0 0.0
        %2988 = vmatprep.subr.mxu0 0.0
        %2989 = vmatpush1.msra.mxu0 0.0
        %2990 = vmatprep.subr.mxu0 0.0
        %2991 = vmatpush1.msra.mxu0 %v2977
        %2992 = vmatprep.subr.mxu0 0.0
        %2993 = vmatpush1.msra.mxu0 %v2976
        %2994 = vmatprep.subr.mxu0 0.0
        %2995 = vmatpush1.msra.mxu0 %v2975
        %2996 = vmatprep.subr.mxu0 0.0
        %2997 = vmatpush1.msra.mxu0 %v2974
        %2998 = vmatprep.subr.mxu0 0.0
        %2999 = vmatpush1.msra.mxu0 %v2973
        %3000 = vmatprep.subr.mxu0 0.0
        %3001 = vmatpush1.msra.mxu0 %v2972
        %3002 = vmatprep.subr.mxu0 0.0
        %3003 = vmatpush1.msra.mxu0 %v2971
        %3004 = vmatprep.subr.mxu0 0.0
        %3005 = vmatpush1.msra.mxu0 %v2970
        %3006 = vmatprep.subr.mxu0 0.0
        %3007 = vmatpush1.msra.mxu0 %v2969
        %3008 = vmatprep.subr.mxu0 0.0
        %3009 = vmatpush1.msra.mxu0 %v2968
        %3010 = vmatprep.subr.mxu0 0.0
        %3011 = vmatpush1.msra.mxu0 %v2967
        %3012 = vmatprep.subr.mxu0 0.0
        %3013 = vmatpush1.msra.mxu0 %v2966
        %3014 = vmatprep.subr.mxu0 0.0
        %3015 = vmatpush2.msra.mxu0 0.0
        %3016 = vmatprep.subr.mxu0 0.0
        %3017 = vmatpush2.msra.mxu0 0.0
        %3018 = vmatprep.subr.mxu0 0.0
        %3019 = vmatpush2.msra.mxu0 0.0
        %3020 = vmatprep.subr.mxu0 0.0
        %3021 = vmatpush2.msra.mxu0 0.0
        %3022 = vmatprep.subr.mxu0 0.0
        %3023 = vmatpush2.msra.mxu0 0.0
        %3024 = vmatprep.subr.mxu0 0.0
        %3025 = vmatpush2.msra.mxu0 0.0
        %3026 = vmatprep.subr.mxu0 0.0
        %3027 = vmatpush2.msra.mxu0 0.0
        %3028 = vmatprep.subr.mxu0 0.0
        %3029 = vmatpush2.msra.mxu0 0.0
        %3030 = vmatprep.subr.mxu0 0.0
        %3031 = vmatpush2.msra.mxu0 0.0
        %3032 = vmatprep.subr.mxu0 0.0
        %3033 = vmatpush2.msra.mxu0 0.0
        %3034 = vmatprep.subr.mxu0 0.0
        %3035 = vmatpush2.msra.mxu0 0.0
        %3036 = vmatprep.subr.mxu0 0.0
        %3037 = vmatpush2.msra.mxu0 0.0
        %3038 = vmatprep.subr.mxu0 0.0
        %3039 = vmatpush2.msra.mxu0 0.0
        %3040 = vmatprep.subr.mxu0 0.0
        %3041 = vmatpush2.msra.mxu0 0.0
        %3042 = vmatprep.subr.mxu0 0.0
        %3043 = vmatpush2.msra.mxu0 0.0
        %3044 = vmatprep.subr.mxu0 0.0
        %3045 = vmatpush2.msra.mxu0 0.0
        %3046 = vmatprep.mubr.f32.mxu0 0.0
        %3047 = vmatmul.mubr.f32.gmra.mxu0 %v2980
        %v3048 = vpop.f32.mrf.mxu0
        %v3049 = vadd.f32 0.0, %v3048
        %v3050 = vpop.f32.mrf.mxu0
        %3051 = vdwg.mxu0
        %v3052 = vadd.f32 %v2965, %v3049
        %s3053 = scalar_lea.vmem %s9, 96
        %v3054 = vld [vmem:[%s3053] sm:$0xff]
        %v3055 = vld [vmem:[%s3053 + $0x8] sm:$0xff]
        %v3056 = vld [vmem:[%s3053 + $0x10] sm:$0xff]
        %v3057 = vld [vmem:[%s3053 + $0x18] sm:$0xff]
        %v3058 = vld [vmem:[%s3053 + $0x20] sm:$0xff]
        %v3059 = vld [vmem:[%s3053 + $0x28] sm:$0xff]
        %v3060 = vld [vmem:[%s3053 + $0x30] sm:$0xff]
        %v3061 = vld [vmem:[%s3053 + $0x38] sm:$0xff]
        %v3062 = vld [vmem:[%s3053 + $0x40] sm:$0xff]
        %v3063 = vld [vmem:[%s3053 + $0x48] sm:$0xff]
        %v3064 = vld [vmem:[%s3053 + $0x50] sm:$0xff]
        %v3065 = vld [vmem:[%s3053 + $0x58] sm:$0xff]
        %v3066 = vrot.slane %v2962, 1
        %v3067 = vsel %vm2978, %v3066, 0
        %3069 = vmatprep.subr.mxu0 0.0
        %3070 = vmatpush1.msra.mxu0 0.0
        %3071 = vmatprep.subr.mxu0 0.0
        %3072 = vmatpush1.msra.mxu0 0.0
        %3073 = vmatprep.subr.mxu0 0.0
        %3074 = vmatpush1.msra.mxu0 0.0
        %3075 = vmatprep.subr.mxu0 0.0
        %3076 = vmatpush1.msra.mxu0 0.0
        %3077 = vmatprep.subr.mxu0 0.0
        %3078 = vmatpush1.msra.mxu0 %v3065
        %3079 = vmatprep.subr.mxu0 0.0
        %3080 = vmatpush1.msra.mxu0 %v3064
        %3081 = vmatprep.subr.mxu0 0.0
        %3082 = vmatpush1.msra.mxu0 %v3063
        %3083 = vmatprep.subr.mxu0 0.0
        %3084 = vmatpush1.msra.mxu0 %v3062
        %3085 = vmatprep.subr.mxu0 0.0
        %3086 = vmatpush1.msra.mxu0 %v3061
        %3087 = vmatprep.subr.mxu0 0.0
        %3088 = vmatpush1.msra.mxu0 %v3060
        %3089 = vmatprep.subr.mxu0 0.0
        %3090 = vmatpush1.msra.mxu0 %v3059
        %3091 = vmatprep.subr.mxu0 0.0
        %3092 = vmatpush1.msra.mxu0 %v3058
        %3093 = vmatprep.subr.mxu0 0.0
        %3094 = vmatpush1.msra.mxu0 %v3057
        %3095 = vmatprep.subr.mxu0 0.0
        %3096 = vmatpush1.msra.mxu0 %v3056
        %3097 = vmatprep.subr.mxu0 0.0
        %3098 = vmatpush1.msra.mxu0 %v3055
        %3099 = vmatprep.subr.mxu0 0.0
        %3100 = vmatpush1.msra.mxu0 %v3054
        %3101 = vmatprep.subr.mxu0 0.0
        %3102 = vmatpush2.msra.mxu0 0.0
        %3103 = vmatprep.subr.mxu0 0.0
        %3104 = vmatpush2.msra.mxu0 0.0
        %3105 = vmatprep.subr.mxu0 0.0
        %3106 = vmatpush2.msra.mxu0 0.0
        %3107 = vmatprep.subr.mxu0 0.0
        %3108 = vmatpush2.msra.mxu0 0.0
        %3109 = vmatprep.subr.mxu0 0.0
        %3110 = vmatpush2.msra.mxu0 0.0
        %3111 = vmatprep.subr.mxu0 0.0
        %3112 = vmatpush2.msra.mxu0 0.0
        %3113 = vmatprep.subr.mxu0 0.0
        %3114 = vmatpush2.msra.mxu0 0.0
        %3115 = vmatprep.subr.mxu0 0.0
        %3116 = vmatpush2.msra.mxu0 0.0
        %3117 = vmatprep.subr.mxu0 0.0
        %3118 = vmatpush2.msra.mxu0 0.0
        %3119 = vmatprep.subr.mxu0 0.0
        %3120 = vmatpush2.msra.mxu0 0.0
        %3121 = vmatprep.subr.mxu0 0.0
        %3122 = vmatpush2.msra.mxu0 0.0
        %3123 = vmatprep.subr.mxu0 0.0
        %3124 = vmatpush2.msra.mxu0 0.0
        %3125 = vmatprep.subr.mxu0 0.0
        %3126 = vmatpush2.msra.mxu0 0.0
        %3127 = vmatprep.subr.mxu0 0.0
        %3128 = vmatpush2.msra.mxu0 0.0
        %3129 = vmatprep.subr.mxu0 0.0
        %3130 = vmatpush2.msra.mxu0 0.0
        %3131 = vmatprep.subr.mxu0 0.0
        %3132 = vmatpush2.msra.mxu0 0.0
        %3133 = vmatprep.mubr.f32.mxu0 0.0
        %3134 = vmatmul.mubr.f32.gmra.mxu0 %v3067
        %v3135 = vpop.f32.mrf.mxu0
        %v3136 = vadd.f32 0.0, %v3135
        %v3137 = vpop.f32.mrf.mxu0
        %3138 = vdwg.mxu0
        %v3139 = vadd.f32 %v3052, %v3136
        %s3140 = scalar_lea.vmem %s9, 192
        %v3141 = vld [vmem:[%s3140] sm:$0xff]
        %v3142 = vld [vmem:[%s3140 + $0x8] sm:$0xff]
        %v3143 = vld [vmem:[%s3140 + $0x10] sm:$0xff]
        %v3144 = vld [vmem:[%s3140 + $0x18] sm:$0xff]
        %v3145 = vld [vmem:[%s3140 + $0x20] sm:$0xff]
        %v3146 = vld [vmem:[%s3140 + $0x28] sm:$0xff]
        %v3147 = vld [vmem:[%s3140 + $0x30] sm:$0xff]
        %v3148 = vld [vmem:[%s3140 + $0x38] sm:$0xff]
        %v3149 = vld [vmem:[%s3140 + $0x40] sm:$0xff]
        %v3150 = vld [vmem:[%s3140 + $0x48] sm:$0xff]
        %v3151 = vld [vmem:[%s3140 + $0x50] sm:$0xff]
        %v3152 = vld [vmem:[%s3140 + $0x58] sm:$0xff]
        %v3153 = vrot.slane %v2962, 2
        %v3154 = vsel %vm2978, %v3153, 0
        %3156 = vmatprep.subr.mxu0 0.0
        %3157 = vmatpush1.msra.mxu0 0.0
        %3158 = vmatprep.subr.mxu0 0.0
        %3159 = vmatpush1.msra.mxu0 0.0
        %3160 = vmatprep.subr.mxu0 0.0
        %3161 = vmatpush1.msra.mxu0 0.0
        %3162 = vmatprep.subr.mxu0 0.0
        %3163 = vmatpush1.msra.mxu0 0.0
        %3164 = vmatprep.subr.mxu0 0.0
        %3165 = vmatpush1.msra.mxu0 %v3152
        %3166 = vmatprep.subr.mxu0 0.0
        %3167 = vmatpush1.msra.mxu0 %v3151
        %3168 = vmatprep.subr.mxu0 0.0
        %3169 = vmatpush1.msra.mxu0 %v3150
        %3170 = vmatprep.subr.mxu0 0.0
        %3171 = vmatpush1.msra.mxu0 %v3149
        %3172 = vmatprep.subr.mxu0 0.0
        %3173 = vmatpush1.msra.mxu0 %v3148
        %3174 = vmatprep.subr.mxu0 0.0
        %3175 = vmatpush1.msra.mxu0 %v3147
        %3176 = vmatprep.subr.mxu0 0.0
        %3177 = vmatpush1.msra.mxu0 %v3146
        %3178 = vmatprep.subr.mxu0 0.0
        %3179 = vmatpush1.msra.mxu0 %v3145
        %3180 = vmatprep.subr.mxu0 0.0
        %3181 = vmatpush1.msra.mxu0 %v3144
        %3182 = vmatprep.subr.mxu0 0.0
        %3183 = vmatpush1.msra.mxu0 %v3143
        %3184 = vmatprep.subr.mxu0 0.0
        %3185 = vmatpush1.msra.mxu0 %v3142
        %3186 = vmatprep.subr.mxu0 0.0
        %3187 = vmatpush1.msra.mxu0 %v3141
        %3188 = vmatprep.subr.mxu0 0.0
        %3189 = vmatpush2.msra.mxu0 0.0
        %3190 = vmatprep.subr.mxu0 0.0
        %3191 = vmatpush2.msra.mxu0 0.0
        %3192 = vmatprep.subr.mxu0 0.0
        %3193 = vmatpush2.msra.mxu0 0.0
        %3194 = vmatprep.subr.mxu0 0.0
        %3195 = vmatpush2.msra.mxu0 0.0
        %3196 = vmatprep.subr.mxu0 0.0
        %3197 = vmatpush2.msra.mxu0 0.0
        %3198 = vmatprep.subr.mxu0 0.0
        %3199 = vmatpush2.msra.mxu0 0.0
        %3200 = vmatprep.subr.mxu0 0.0
        %3201 = vmatpush2.msra.mxu0 0.0
        %3202 = vmatprep.subr.mxu0 0.0
        %3203 = vmatpush2.msra.mxu0 0.0
        %3204 = vmatprep.subr.mxu0 0.0
        %3205 = vmatpush2.msra.mxu0 0.0
        %3206 = vmatprep.subr.mxu0 0.0
        %3207 = vmatpush2.msra.mxu0 0.0
        %3208 = vmatprep.subr.mxu0 0.0
        %3209 = vmatpush2.msra.mxu0 0.0
        %3210 = vmatprep.subr.mxu0 0.0
        %3211 = vmatpush2.msra.mxu0 0.0
        %3212 = vmatprep.subr.mxu0 0.0
        %3213 = vmatpush2.msra.mxu0 0.0
        %3214 = vmatprep.subr.mxu0 0.0
        %3215 = vmatpush2.msra.mxu0 0.0
        %3216 = vmatprep.subr.mxu0 0.0
        %3217 = vmatpush2.msra.mxu0 0.0
        %3218 = vmatprep.subr.mxu0 0.0
        %3219 = vmatpush2.msra.mxu0 0.0
        %3220 = vmatprep.mubr.f32.mxu0 0.0
        %3221 = vmatmul.mubr.f32.gmra.mxu0 %v3154
        %v3222 = vpop.f32.mrf.mxu0
        %v3223 = vadd.f32 0.0, %v3222
        %v3224 = vpop.f32.mrf.mxu0
        %3225 = vdwg.mxu0
        %v3226 = vadd.f32 %v3139, %v3223
        %s3227 = scalar_lea.vmem %s9, 288
        %v3228 = vld [vmem:[%s3227] sm:$0xff]
        %v3229 = vld [vmem:[%s3227 + $0x8] sm:$0xff]
        %v3230 = vld [vmem:[%s3227 + $0x10] sm:$0xff]
        %v3231 = vld [vmem:[%s3227 + $0x18] sm:$0xff]
        %v3232 = vld [vmem:[%s3227 + $0x20] sm:$0xff]
        %v3233 = vld [vmem:[%s3227 + $0x28] sm:$0xff]
        %v3234 = vld [vmem:[%s3227 + $0x30] sm:$0xff]
        %v3235 = vld [vmem:[%s3227 + $0x38] sm:$0xff]
        %v3236 = vld [vmem:[%s3227 + $0x40] sm:$0xff]
        %v3237 = vld [vmem:[%s3227 + $0x48] sm:$0xff]
        %v3238 = vld [vmem:[%s3227 + $0x50] sm:$0xff]
        %v3239 = vld [vmem:[%s3227 + $0x58] sm:$0xff]
        %v3240 = vrot.slane %v2962, 3
        %v3241 = vsel %vm2978, %v3240, 0
        %3243 = vmatprep.subr.mxu0 0.0
        %3244 = vmatpush1.msra.mxu0 0.0
        %3245 = vmatprep.subr.mxu0 0.0
        %3246 = vmatpush1.msra.mxu0 0.0
        %3247 = vmatprep.subr.mxu0 0.0
        %3248 = vmatpush1.msra.mxu0 0.0
        %3249 = vmatprep.subr.mxu0 0.0
        %3250 = vmatpush1.msra.mxu0 0.0
        %3251 = vmatprep.subr.mxu0 0.0
        %3252 = vmatpush1.msra.mxu0 %v3239
        %3253 = vmatprep.subr.mxu0 0.0
        %3254 = vmatpush1.msra.mxu0 %v3238
        %3255 = vmatprep.subr.mxu0 0.0
        %3256 = vmatpush1.msra.mxu0 %v3237
        %3257 = vmatprep.subr.mxu0 0.0
        %3258 = vmatpush1.msra.mxu0 %v3236
        %3259 = vmatprep.subr.mxu0 0.0
        %3260 = vmatpush1.msra.mxu0 %v3235
        %3261 = vmatprep.subr.mxu0 0.0
        %3262 = vmatpush1.msra.mxu0 %v3234
        %3263 = vmatprep.subr.mxu0 0.0
        %3264 = vmatpush1.msra.mxu0 %v3233
        %3265 = vmatprep.subr.mxu0 0.0
        %3266 = vmatpush1.msra.mxu0 %v3232
        %3267 = vmatprep.subr.mxu0 0.0
        %3268 = vmatpush1.msra.mxu0 %v3231
        %3269 = vmatprep.subr.mxu0 0.0
        %3270 = vmatpush1.msra.mxu0 %v3230
        %3271 = vmatprep.subr.mxu0 0.0
        %3272 = vmatpush1.msra.mxu0 %v3229
        %3273 = vmatprep.subr.mxu0 0.0
        %3274 = vmatpush1.msra.mxu0 %v3228
        %3275 = vmatprep.subr.mxu0 0.0
        %3276 = vmatpush2.msra.mxu0 0.0
        %3277 = vmatprep.subr.mxu0 0.0
        %3278 = vmatpush2.msra.mxu0 0.0
        %3279 = vmatprep.subr.mxu0 0.0
        %3280 = vmatpush2.msra.mxu0 0.0
        %3281 = vmatprep.subr.mxu0 0.0
        %3282 = vmatpush2.msra.mxu0 0.0
        %3283 = vmatprep.subr.mxu0 0.0
        %3284 = vmatpush2.msra.mxu0 0.0
        %3285 = vmatprep.subr.mxu0 0.0
        %3286 = vmatpush2.msra.mxu0 0.0
        %3287 = vmatprep.subr.mxu0 0.0
        %3288 = vmatpush2.msra.mxu0 0.0
        %3289 = vmatprep.subr.mxu0 0.0
        %3290 = vmatpush2.msra.mxu0 0.0
        %3291 = vmatprep.subr.mxu0 0.0
        %3292 = vmatpush2.msra.mxu0 0.0
        %3293 = vmatprep.subr.mxu0 0.0
        %3294 = vmatpush2.msra.mxu0 0.0
        %3295 = vmatprep.subr.mxu0 0.0
        %3296 = vmatpush2.msra.mxu0 0.0
        %3297 = vmatprep.subr.mxu0 0.0
        %3298 = vmatpush2.msra.mxu0 0.0
        %3299 = vmatprep.subr.mxu0 0.0
        %3300 = vmatpush2.msra.mxu0 0.0
        %3301 = vmatprep.subr.mxu0 0.0
        %3302 = vmatpush2.msra.mxu0 0.0
        %3303 = vmatprep.subr.mxu0 0.0
        %3304 = vmatpush2.msra.mxu0 0.0
        %3305 = vmatprep.subr.mxu0 0.0
        %3306 = vmatpush2.msra.mxu0 0.0
        %3307 = vmatprep.mubr.f32.mxu0 0.0
        %3308 = vmatmul.mubr.f32.gmra.mxu0 %v3241
        %v3309 = vpop.f32.mrf.mxu0
        %v3310 = vadd.f32 0.0, %v3309
        %v3311 = vpop.f32.mrf.mxu0
        %3312 = vdwg.mxu0
        %v3313 = vadd.f32 %v3226, %v3310
        %s3314 = scalar_lea.vmem %s9, 384
        %v3315 = vld [vmem:[%s3314] sm:$0xff]
        %v3316 = vld [vmem:[%s3314 + $0x8] sm:$0xff]
        %v3317 = vld [vmem:[%s3314 + $0x10] sm:$0xff]
        %v3318 = vld [vmem:[%s3314 + $0x18] sm:$0xff]
        %v3319 = vld [vmem:[%s3314 + $0x20] sm:$0xff]
        %v3320 = vld [vmem:[%s3314 + $0x28] sm:$0xff]
        %v3321 = vld [vmem:[%s3314 + $0x30] sm:$0xff]
        %v3322 = vld [vmem:[%s3314 + $0x38] sm:$0xff]
        %v3323 = vld [vmem:[%s3314 + $0x40] sm:$0xff]
        %v3324 = vld [vmem:[%s3314 + $0x48] sm:$0xff]
        %v3325 = vld [vmem:[%s3314 + $0x50] sm:$0xff]
        %v3326 = vld [vmem:[%s3314 + $0x58] sm:$0xff]
        %v3327 = vrot.slane %v2962, 4
        %v3328 = vsel %vm2978, %v3327, 0
        %3330 = vmatprep.subr.mxu0 0.0
        %3331 = vmatpush1.msra.mxu0 0.0
        %3332 = vmatprep.subr.mxu0 0.0
        %3333 = vmatpush1.msra.mxu0 0.0
        %3334 = vmatprep.subr.mxu0 0.0
        %3335 = vmatpush1.msra.mxu0 0.0
        %3336 = vmatprep.subr.mxu0 0.0
        %3337 = vmatpush1.msra.mxu0 0.0
        %3338 = vmatprep.subr.mxu0 0.0
        %3339 = vmatpush1.msra.mxu0 %v3326
        %3340 = vmatprep.subr.mxu0 0.0
        %3341 = vmatpush1.msra.mxu0 %v3325
        %3342 = vmatprep.subr.mxu0 0.0
        %3343 = vmatpush1.msra.mxu0 %v3324
        %3344 = vmatprep.subr.mxu0 0.0
        %3345 = vmatpush1.msra.mxu0 %v3323
        %3346 = vmatprep.subr.mxu0 0.0
        %3347 = vmatpush1.msra.mxu0 %v3322
        %3348 = vmatprep.subr.mxu0 0.0
        %3349 = vmatpush1.msra.mxu0 %v3321
        %3350 = vmatprep.subr.mxu0 0.0
        %3351 = vmatpush1.msra.mxu0 %v3320
        %3352 = vmatprep.subr.mxu0 0.0
        %3353 = vmatpush1.msra.mxu0 %v3319
        %3354 = vmatprep.subr.mxu0 0.0
        %3355 = vmatpush1.msra.mxu0 %v3318
        %3356 = vmatprep.subr.mxu0 0.0
        %3357 = vmatpush1.msra.mxu0 %v3317
        %3358 = vmatprep.subr.mxu0 0.0
        %3359 = vmatpush1.msra.mxu0 %v3316
        %3360 = vmatprep.subr.mxu0 0.0
        %3361 = vmatpush1.msra.mxu0 %v3315
        %3362 = vmatprep.subr.mxu0 0.0
        %3363 = vmatpush2.msra.mxu0 0.0
        %3364 = vmatprep.subr.mxu0 0.0
        %3365 = vmatpush2.msra.mxu0 0.0
        %3366 = vmatprep.subr.mxu0 0.0
        %3367 = vmatpush2.msra.mxu0 0.0
        %3368 = vmatprep.subr.mxu0 0.0
        %3369 = vmatpush2.msra.mxu0 0.0
        %3370 = vmatprep.subr.mxu0 0.0
        %3371 = vmatpush2.msra.mxu0 0.0
        %3372 = vmatprep.subr.mxu0 0.0
        %3373 = vmatpush2.msra.mxu0 0.0
        %3374 = vmatprep.subr.mxu0 0.0
        %3375 = vmatpush2.msra.mxu0 0.0
        %3376 = vmatprep.subr.mxu0 0.0
        %3377 = vmatpush2.msra.mxu0 0.0
        %3378 = vmatprep.subr.mxu0 0.0
        %3379 = vmatpush2.msra.mxu0 0.0
        %3380 = vmatprep.subr.mxu0 0.0
        %3381 = vmatpush2.msra.mxu0 0.0
        %3382 = vmatprep.subr.mxu0 0.0
        %3383 = vmatpush2.msra.mxu0 0.0
        %3384 = vmatprep.subr.mxu0 0.0
        %3385 = vmatpush2.msra.mxu0 0.0
        %3386 = vmatprep.subr.mxu0 0.0
        %3387 = vmatpush2.msra.mxu0 0.0
        %3388 = vmatprep.subr.mxu0 0.0
        %3389 = vmatpush2.msra.mxu0 0.0
        %3390 = vmatprep.subr.mxu0 0.0
        %3391 = vmatpush2.msra.mxu0 0.0
        %3392 = vmatprep.subr.mxu0 0.0
        %3393 = vmatpush2.msra.mxu0 0.0
        %3394 = vmatprep.mubr.f32.mxu0 0.0
        %3395 = vmatmul.mubr.f32.gmra.mxu0 %v3328
        %v3396 = vpop.f32.mrf.mxu0
        %v3397 = vadd.f32 0.0, %v3396
        %v3398 = vpop.f32.mrf.mxu0
        %3399 = vdwg.mxu0
        %v3400 = vadd.f32 %v3313, %v3397
        %s3401 = scalar_lea.vmem %s9, 480
        %v3402 = vld [vmem:[%s3401] sm:$0xff]
        %v3403 = vld [vmem:[%s3401 + $0x8] sm:$0xff]
        %v3404 = vld [vmem:[%s3401 + $0x10] sm:$0xff]
        %v3405 = vld [vmem:[%s3401 + $0x18] sm:$0xff]
        %v3406 = vld [vmem:[%s3401 + $0x20] sm:$0xff]
        %v3407 = vld [vmem:[%s3401 + $0x28] sm:$0xff]
        %v3408 = vld [vmem:[%s3401 + $0x30] sm:$0xff]
        %v3409 = vld [vmem:[%s3401 + $0x38] sm:$0xff]
        %v3410 = vld [vmem:[%s3401 + $0x40] sm:$0xff]
        %v3411 = vld [vmem:[%s3401 + $0x48] sm:$0xff]
        %v3412 = vld [vmem:[%s3401 + $0x50] sm:$0xff]
        %v3413 = vld [vmem:[%s3401 + $0x58] sm:$0xff]
        %v3414 = vrot.slane %v2962, 5
        %v3415 = vsel %vm2978, %v3414, 0
        %3417 = vmatprep.subr.mxu0 0.0
        %3418 = vmatpush1.msra.mxu0 0.0
        %3419 = vmatprep.subr.mxu0 0.0
        %3420 = vmatpush1.msra.mxu0 0.0
        %3421 = vmatprep.subr.mxu0 0.0
        %3422 = vmatpush1.msra.mxu0 0.0
        %3423 = vmatprep.subr.mxu0 0.0
        %3424 = vmatpush1.msra.mxu0 0.0
        %3425 = vmatprep.subr.mxu0 0.0
        %3426 = vmatpush1.msra.mxu0 %v3413
        %3427 = vmatprep.subr.mxu0 0.0
        %3428 = vmatpush1.msra.mxu0 %v3412
        %3429 = vmatprep.subr.mxu0 0.0
        %3430 = vmatpush1.msra.mxu0 %v3411
        %3431 = vmatprep.subr.mxu0 0.0
        %3432 = vmatpush1.msra.mxu0 %v3410
        %3433 = vmatprep.subr.mxu0 0.0
        %3434 = vmatpush1.msra.mxu0 %v3409
        %3435 = vmatprep.subr.mxu0 0.0
        %3436 = vmatpush1.msra.mxu0 %v3408
        %3437 = vmatprep.subr.mxu0 0.0
        %3438 = vmatpush1.msra.mxu0 %v3407
        %3439 = vmatprep.subr.mxu0 0.0
        %3440 = vmatpush1.msra.mxu0 %v3406
        %3441 = vmatprep.subr.mxu0 0.0
        %3442 = vmatpush1.msra.mxu0 %v3405
        %3443 = vmatprep.subr.mxu0 0.0
        %3444 = vmatpush1.msra.mxu0 %v3404
        %3445 = vmatprep.subr.mxu0 0.0
        %3446 = vmatpush1.msra.mxu0 %v3403
        %3447 = vmatprep.subr.mxu0 0.0
        %3448 = vmatpush1.msra.mxu0 %v3402
        %3449 = vmatprep.subr.mxu0 0.0
        %3450 = vmatpush2.msra.mxu0 0.0
        %3451 = vmatprep.subr.mxu0 0.0
        %3452 = vmatpush2.msra.mxu0 0.0
        %3453 = vmatprep.subr.mxu0 0.0
        %3454 = vmatpush2.msra.mxu0 0.0
        %3455 = vmatprep.subr.mxu0 0.0
        %3456 = vmatpush2.msra.mxu0 0.0
        %3457 = vmatprep.subr.mxu0 0.0
        %3458 = vmatpush2.msra.mxu0 0.0
        %3459 = vmatprep.subr.mxu0 0.0
        %3460 = vmatpush2.msra.mxu0 0.0
        %3461 = vmatprep.subr.mxu0 0.0
        %3462 = vmatpush2.msra.mxu0 0.0
        %3463 = vmatprep.subr.mxu0 0.0
        %3464 = vmatpush2.msra.mxu0 0.0
        %3465 = vmatprep.subr.mxu0 0.0
        %3466 = vmatpush2.msra.mxu0 0.0
        %3467 = vmatprep.subr.mxu0 0.0
        %3468 = vmatpush2.msra.mxu0 0.0
        %3469 = vmatprep.subr.mxu0 0.0
        %3470 = vmatpush2.msra.mxu0 0.0
        %3471 = vmatprep.subr.mxu0 0.0
        %3472 = vmatpush2.msra.mxu0 0.0
        %3473 = vmatprep.subr.mxu0 0.0
        %3474 = vmatpush2.msra.mxu0 0.0
        %3475 = vmatprep.subr.mxu0 0.0
        %3476 = vmatpush2.msra.mxu0 0.0
        %3477 = vmatprep.subr.mxu0 0.0
        %3478 = vmatpush2.msra.mxu0 0.0
        %3479 = vmatprep.subr.mxu0 0.0
        %3480 = vmatpush2.msra.mxu0 0.0
        %3481 = vmatprep.mubr.f32.mxu0 0.0
        %3482 = vmatmul.mubr.f32.gmra.mxu0 %v3415
        %v3483 = vpop.f32.mrf.mxu0
        %v3484 = vadd.f32 0.0, %v3483
        %v3485 = vpop.f32.mrf.mxu0
        %3486 = vdwg.mxu0
        %v3487 = vadd.f32 %v3400, %v3484
        %v3488 = vmax.f32 %v3487, 0.0
        %v3489 = vld [vmem:[%s11] sm:$0xff]
        %v3490 = vld [vmem:[%s11 + $0x8] sm:$0xff]
        %v3491 = vld [vmem:[%s11 + $0x10] sm:$0xff]
        %v3492 = vld [vmem:[%s11 + $0x18] sm:$0xff]
        %v3493 = vld [vmem:[%s11 + $0x20] sm:$0xff]
        %v3494 = vld [vmem:[%s11 + $0x28] sm:$0xff]
        %v3495 = vld [vmem:[%s11 + $0x30] sm:$0xff]
        %v3496 = vld [vmem:[%s11 + $0x38] sm:$0xff]
        %v3497 = vld [vmem:[%s12] sm:$0x1]
        %v3499 = vsel %vm2891, %v3488, 0
        %3501 = vmatprep.subr.mxu0 0.0
        %3502 = vmatpush1.msra.mxu0 0.0
        %3503 = vmatprep.subr.mxu0 0.0
        %3504 = vmatpush1.msra.mxu0 0.0
        %3505 = vmatprep.subr.mxu0 0.0
        %3506 = vmatpush1.msra.mxu0 0.0
        %3507 = vmatprep.subr.mxu0 0.0
        %3508 = vmatpush1.msra.mxu0 0.0
        %3509 = vmatprep.subr.mxu0 0.0
        %3510 = vmatpush1.msra.mxu0 0.0
        %3511 = vmatprep.subr.mxu0 0.0
        %3512 = vmatpush1.msra.mxu0 0.0
        %3513 = vmatprep.subr.mxu0 0.0
        %3514 = vmatpush1.msra.mxu0 0.0
        %3515 = vmatprep.subr.mxu0 0.0
        %3516 = vmatpush1.msra.mxu0 0.0
        %3517 = vmatprep.subr.mxu0 0.0
        %3518 = vmatpush1.msra.mxu0 %v3496
        %3519 = vmatprep.subr.mxu0 0.0
        %3520 = vmatpush1.msra.mxu0 %v3495
        %3521 = vmatprep.subr.mxu0 0.0
        %3522 = vmatpush1.msra.mxu0 %v3494
        %3523 = vmatprep.subr.mxu0 0.0
        %3524 = vmatpush1.msra.mxu0 %v3493
        %3525 = vmatprep.subr.mxu0 0.0
        %3526 = vmatpush1.msra.mxu0 %v3492
        %3527 = vmatprep.subr.mxu0 0.0
        %3528 = vmatpush1.msra.mxu0 %v3491
        %3529 = vmatprep.subr.mxu0 0.0
        %3530 = vmatpush1.msra.mxu0 %v3490
        %3531 = vmatprep.subr.mxu0 0.0
        %3532 = vmatpush1.msra.mxu0 %v3489
        %3533 = vmatprep.subr.mxu0 0.0
        %3534 = vmatpush2.msra.mxu0 0.0
        %3535 = vmatprep.subr.mxu0 0.0
        %3536 = vmatpush2.msra.mxu0 0.0
        %3537 = vmatprep.subr.mxu0 0.0
        %3538 = vmatpush2.msra.mxu0 0.0
        %3539 = vmatprep.subr.mxu0 0.0
        %3540 = vmatpush2.msra.mxu0 0.0
        %3541 = vmatprep.subr.mxu0 0.0
        %3542 = vmatpush2.msra.mxu0 0.0
        %3543 = vmatprep.subr.mxu0 0.0
        %3544 = vmatpush2.msra.mxu0 0.0
        %3545 = vmatprep.subr.mxu0 0.0
        %3546 = vmatpush2.msra.mxu0 0.0
        %3547 = vmatprep.subr.mxu0 0.0
        %3548 = vmatpush2.msra.mxu0 0.0
        %3549 = vmatprep.subr.mxu0 0.0
        %3550 = vmatpush2.msra.mxu0 0.0
        %3551 = vmatprep.subr.mxu0 0.0
        %3552 = vmatpush2.msra.mxu0 0.0
        %3553 = vmatprep.subr.mxu0 0.0
        %3554 = vmatpush2.msra.mxu0 0.0
        %3555 = vmatprep.subr.mxu0 0.0
        %3556 = vmatpush2.msra.mxu0 0.0
        %3557 = vmatprep.subr.mxu0 0.0
        %3558 = vmatpush2.msra.mxu0 0.0
        %3559 = vmatprep.subr.mxu0 0.0
        %3560 = vmatpush2.msra.mxu0 0.0
        %3561 = vmatprep.subr.mxu0 0.0
        %3562 = vmatpush2.msra.mxu0 0.0
        %3563 = vmatprep.subr.mxu0 0.0
        %3564 = vmatpush2.msra.mxu0 0.0
        %3565 = vmatprep.mubr.f32.mxu0 0.0
        %3566 = vmatmul.mubr.f32.gmra.mxu0 %v3499
        %v3567 = vpop.f32.mrf.mxu0
        %v3568 = vadd.f32 %v3497, %v3567
        %v3569 = vpop.f32.mrf.mxu0
        %3570 = vdwg.mxu0
        %v3571 = vmax.f32 %v3568, 0.0
        %v3572 = vld [vmem:[%s13] sm:$0xff]
        %v3573 = vld [vmem:[%s13 + $0x8] sm:$0xff]
        %v3574 = vld [vmem:[%s13 + $0x10] sm:$0xff]
        %v3575 = vld [vmem:[%s13 + $0x18] sm:$0xff]
        %v3576 = vld [vmem:[%s14] sm:$0x1]
        %vm3577 = vcmask 261120
        %v3579 = vsel %vm3577, %v3571, 0
        %3581 = vmatprep.subr.mxu0 0.0
        %3582 = vmatpush1.msra.mxu0 0.0
        %3583 = vmatprep.subr.mxu0 0.0
        %3584 = vmatpush1.msra.mxu0 0.0
        %3585 = vmatprep.subr.mxu0 0.0
        %3586 = vmatpush1.msra.mxu0 0.0
        %3587 = vmatprep.subr.mxu0 0.0
        %3588 = vmatpush1.msra.mxu0 0.0
        %3589 = vmatprep.subr.mxu0 0.0
        %3590 = vmatpush1.msra.mxu0 0.0
        %3591 = vmatprep.subr.mxu0 0.0
        %3592 = vmatpush1.msra.mxu0 0.0
        %3593 = vmatprep.subr.mxu0 0.0
        %3594 = vmatpush1.msra.mxu0 0.0
        %3595 = vmatprep.subr.mxu0 0.0
        %3596 = vmatpush1.msra.mxu0 0.0
        %3597 = vmatprep.subr.mxu0 0.0
        %3598 = vmatpush1.msra.mxu0 0.0
        %3599 = vmatprep.subr.mxu0 0.0
        %3600 = vmatpush1.msra.mxu0 0.0
        %3601 = vmatprep.subr.mxu0 0.0
        %3602 = vmatpush1.msra.mxu0 0.0
        %3603 = vmatprep.subr.mxu0 0.0
        %3604 = vmatpush1.msra.mxu0 0.0
        %3605 = vmatprep.subr.mxu0 0.0
        %3606 = vmatpush1.msra.mxu0 %v3575
        %3607 = vmatprep.subr.mxu0 0.0
        %3608 = vmatpush1.msra.mxu0 %v3574
        %3609 = vmatprep.subr.mxu0 0.0
        %3610 = vmatpush1.msra.mxu0 %v3573
        %3611 = vmatprep.subr.mxu0 0.0
        %3612 = vmatpush1.msra.mxu0 %v3572
        %3613 = vmatprep.subr.mxu0 0.0
        %3614 = vmatpush2.msra.mxu0 0.0
        %3615 = vmatprep.subr.mxu0 0.0
        %3616 = vmatpush2.msra.mxu0 0.0
        %3617 = vmatprep.subr.mxu0 0.0
        %3618 = vmatpush2.msra.mxu0 0.0
        %3619 = vmatprep.subr.mxu0 0.0
        %3620 = vmatpush2.msra.mxu0 0.0
        %3621 = vmatprep.subr.mxu0 0.0
        %3622 = vmatpush2.msra.mxu0 0.0
        %3623 = vmatprep.subr.mxu0 0.0
        %3624 = vmatpush2.msra.mxu0 0.0
        %3625 = vmatprep.subr.mxu0 0.0
        %3626 = vmatpush2.msra.mxu0 0.0
        %3627 = vmatprep.subr.mxu0 0.0
        %3628 = vmatpush2.msra.mxu0 0.0
        %3629 = vmatprep.subr.mxu0 0.0
        %3630 = vmatpush2.msra.mxu0 0.0
        %3631 = vmatprep.subr.mxu0 0.0
        %3632 = vmatpush2.msra.mxu0 0.0
        %3633 = vmatprep.subr.mxu0 0.0
        %3634 = vmatpush2.msra.mxu0 0.0
        %3635 = vmatprep.subr.mxu0 0.0
        %3636 = vmatpush2.msra.mxu0 0.0
        %3637 = vmatprep.subr.mxu0 0.0
        %3638 = vmatpush2.msra.mxu0 0.0
        %3639 = vmatprep.subr.mxu0 0.0
        %3640 = vmatpush2.msra.mxu0 0.0
        %3641 = vmatprep.subr.mxu0 0.0
        %3642 = vmatpush2.msra.mxu0 0.0
        %3643 = vmatprep.subr.mxu0 0.0
        %3644 = vmatpush2.msra.mxu0 0.0
        %3645 = vmatprep.mubr.f32.mxu0 0.0
        %3646 = vmatmul.mubr.f32.gmra.mxu0 %v3579
        %v3647 = vpop.f32.mrf.mxu0
        %v3648 = vadd.f32 %v3576, %v3647
        %v3649 = vpop.f32.mrf.mxu0
        %3650 = vdwg.mxu0
        %v3651 = vsub.f32 0.0, %v3648
        %v3652 = vmul.f32 %v3651, 1.442695
        %v3653 = vpow.pop %v3652
        %v3654 = vadd.f32 %v3653, 1.0
        %v3655 = vrcp.pop %v3654
        %v3656 = vmul.f32 1.0, %v3655
        %vm3657 = vcmask 73728
        %3658 = vst.msk [vmem:[%s486] sm:$0x1] %vm3657, %v3656
        %s3659 = sand.u32 %s357, 1
        %s3660 = scalar_lea.sflag [#allocation5], %s3659
        %s3661 = sand.u32 %s357, 1
        %s3662 = scalar_lea.vmem [#allocation4], %s3661
        // Predicated region
        $region81: #{net_forward.1} parent=79 // pred_check
          %p3663 = pneg %p367
        $region82: #{net_forward.1} parent=79 // pred_check_branch
          %3665 = sbr.rel (%p3663) target = $region84
        $region83: #{net_forward.1} parent=79 // pred_region
          %s3667 = ssub.s32 16, 16
          %3668 = vsyncadd %s3660, %s3667
          %s3669 = smul.addr %s29, 16
          %s3670 = scalar_lea.hbm %s15, %s3669
          %s3672 = sshll.u32 %s3662, 4
          %s3673 = int_to_ptr.vmem [resolvable:$true] %s3672
          %3675 = dma.vmem_to_hbm [thread:$0]  %s3673, 16, %s3670, %s3660
        $region84: #{net_forward.1} parent=79 // pred_fallthru
          _
      $region80: #{net_forward.1} parent=5 // pred_fallthru
        _
      %p3676 = scmp.le.s32.totalorder 2, %s24
      // Predicated region
      $region85: #{net_forward.1} parent=5 // pred_check
        %p3677 = pneg %p3676
      $region86: #{net_forward.1} parent=5 // pred_check_branch
        %3679 = sbr.rel (%p3677) target = $region88
      $region87: #{net_forward.1} parent=5 // pred_region
        %s3680 = ssub.s32 %s24, 2
        // Predicated region
        $region89: #{net_forward.1} parent=87 // pred_check
          %p3681 = pneg %p373
        $region90: #{net_forward.1} parent=87 // pred_check_branch
          %3683 = sbr.rel (%p3681) target = $region92
        $region91: #{net_forward.1} parent=87 // pred_region
          %s3684 = sand.u32 %s358, 1
          %s3685 = scalar_lea.sflag [#allocation5], %s3684
          %s3686 = sand.u32 %s358, 1
          %s3687 = scalar_lea.vmem [#allocation4], %s3686
          %3688 = dma.done %s3685, 16
        $region92: #{net_forward.1} parent=87 // pred_fallthru
          _
      $region88: #{net_forward.1} parent=5 // pred_fallthru
        _
    $region6: #{net_forward.1} parent=1 // loop_footer
      %s28 = sadd.s32 1, %s24
    $region7: #{net_forward.1} parent=1 // loop_footer_branch
      %23 = sbr.rel target = $region3
    $region8: #{net_forward.1} parent=1 // loop_exit
      _
    %3689 = vsyncpa [#allocation5], 1
    %s3690 = scalar_lea.sflag [#allocation5], 1
    %3691 = vsyncpa %s3690, 1

</llo_original>
